<compile_context>
chip_gen: v7x
topology: tpu7x:2x2x1
jax: 0.10.0
libtpu: 0.0.40
codegen_flags: <defaults>
</compile_context>

<pallas_src>
import jax
import jax.numpy as jnp
from jax.experimental import pallas as pl
from jax.experimental.pallas import tpu as pltpu

# Logical (PyTorch) dims and 128-padded dims used by the kernel.
D_IN = 784            # kept as-is (full-dim block; compiler pads K internally)
D1, D1P = 392, 512
D2, D2P = 196, 256
D3, D3P = 98, 128
D4, D4P = 10, 128

TB_MAX = 512          # max batch tile (rows per grid step)


def mlp_kernel(x_ref, w1_ref, b1_ref, w2_ref, b2_ref,
               w3_ref, b3_ref, w4_ref, b4_ref, o_ref):
    # x tile streams in f32; cast to bf16 in-kernel (cheap VPU op hidden under
    # the MXU) so the wrapper doesn't pay a separate HBM pass for the cast.
    x = x_ref[...].astype(jnp.bfloat16)

    h1 = jnp.dot(x, w1_ref[...], preferred_element_type=jnp.float32)
    h1 = (h1 + b1_ref[...]).astype(jnp.bfloat16)                    # (TB, 512)

    h2 = jnp.dot(h1, w2_ref[...], preferred_element_type=jnp.float32)
    h2 = (h2 + b2_ref[...]).astype(jnp.bfloat16)                    # (TB, 256)

    h3 = jnp.dot(h2, w3_ref[...], preferred_element_type=jnp.float32)
    h3 = jnp.maximum(h3 + b3_ref[...], 0.0).astype(jnp.bfloat16)    # ReLU, (TB, 128)

    # Lane-dense (TB, 128) f32 store; cols 10..127 are exactly zero (padded
    # weight cols / bias entries are zero) and get sliced off in the wrapper.
    o_ref[...] = jnp.dot(h3, w4_ref[...],
                         preferred_element_type=jnp.float32) + b4_ref[...]


def _pick_tb(batch):
    """Large tiles amortize per-step overhead; keep >=2 grid steps when the
    batch allows it (v7x megacore shards the 'parallel' axis across 2 TCs).
    Tile must be a multiple of 8 (sublane alignment)."""
    tb = TB_MAX
    if batch <= tb:
        half = -(-batch // 2)                     # ceil(batch / 2)
        tb = max(8, ((half + 7) // 8) * 8)        # round up to multiple of 8
    return tb


@jax.jit
def mlp_forward(x, kernel_params):
    """x: (B, 784) float32. kernel_params: padded bf16 weights + f32 biases."""
    (w1, b1), (w2, b2), (w3, b3), (w4, b4) = kernel_params
    B = x.shape[0]
    tb = _pick_tb(B)
    n_steps = pl.cdiv(B, tb)

    flops = 2 * n_steps * tb * (D_IN * D1P + D1P * D2P + D2P * D3P + D3P * D4P)
    bytes_accessed = (
        x.size * 4
        + (w1.size + w2.size + w3.size + w4.size) * 2
        + (b1.size + b2.size + b3.size + b4.size) * 4
        + B * D4P * 4
    )

    resident = lambda i: (0, 0)   # weights/biases: same block every step

    out = pl.pallas_call(
        mlp_kernel,
        out_shape=jax.ShapeDtypeStruct((B, D4P), jnp.float32),
        grid=(n_steps,),
        in_specs=[
            pl.BlockSpec((tb, D_IN), lambda i: (i, 0)),   # x tile streams (ragged last tile OK)
            pl.BlockSpec((D_IN, D1P), resident),
            pl.BlockSpec((1, D1P), resident),
            pl.BlockSpec((D1P, D2P), resident),
            pl.BlockSpec((1, D2P), resident),
            pl.BlockSpec((D2P, D3P), resident),
            pl.BlockSpec((1, D3P), resident),
            pl.BlockSpec((D3P, D4P), resident),
            pl.BlockSpec((1, D4P), resident),
        ],
        out_specs=pl.BlockSpec((tb, D4P), lambda i: (i, 0)),
        compiler_params=pltpu.CompilerParams(
            dimension_semantics=("parallel",),
        ),
        cost_estimate=pl.CostEstimate(
            flops=flops, transcendentals=0, bytes_accessed=bytes_accessed),
    )(x, w1, b1, w2, b2, w3, b3, w4, b4)

    # Rows beyond B never exist (out_shape is exactly B rows; OOB writes of
    # the ragged last tile are dropped). Slice off padded logit lanes.
    return out[:, :D4]


def init_linear(key, fan_in, fan_out, fan_in_pad, fan_out_pad):
    """PyTorch nn.Linear default init U(-1/sqrt(fan_in), 1/sqrt(fan_in)).

    Returns (raw f32 params for the reference,
             zero-padded bf16 weight + f32 bias for the kernel).
    NOTE: correctness of the padding scheme relies on the pad regions being
    exactly zero — if loading from a checkpoint, zero them explicitly."""
    kw, kb = jax.random.split(key)
    bound = 1.0 / (fan_in ** 0.5)
    w = jax.random.uniform(kw, (fan_in, fan_out), jnp.float32, -bound, bound)
    b = jax.random.uniform(kb, (fan_out,), jnp.float32, -bound, bound)

    w_pad = jnp.zeros((fan_in_pad, fan_out_pad), jnp.float32)
    w_pad = w_pad.at[:fan_in, :fan_out].set(w).astype(jnp.bfloat16)
    b_pad = jnp.zeros((1, fan_out_pad), jnp.float32).at[0, :fan_out].set(b)
    return (w, b), (w_pad, b_pad)


def reference_forward(x, raw_params):
    """Reference mirroring the kernel's numerics (bf16 MXU operands, f32 acc)."""
    (w1, b1), (w2, b2), (w3, b3), (w4, b4) = raw_params

    def lin(h, w, b):
        return jnp.dot(h.astype(jnp.bfloat16), w.astype(jnp.bfloat16),
                       preferred_element_type=jnp.float32) + b

    h = lin(x, w1, b1)
    h = lin(h, w2, b2)
    h = jnp.maximum(lin(h, w3, b3), 0.0)
    return lin(h, w4, b4)


def reference_forward_f32(x, raw_params):
    (w1, b1), (w2, b2), (w3, b3), (w4, b4) = raw_params
    h = x @ w1 + b1
    h = h @ w2 + b2
    h = jnp.maximum(h @ w3 + b3, 0.0)
    return h @ w4 + b4


if __name__ == "__main__":
    key = jax.random.PRNGKey(0)
    kx, k1, k2, k3, k4 = jax.random.split(key, 5)

    # Non-multiple-of-tile batch -> exercises the ragged last tile and keeps
    # 2 grid steps (tb = 152 here).
    B = 300
    x = jax.random.normal(kx, (B, D_IN), jnp.float32)

    (r1, p1) = init_linear(k1, D_IN, D1, D_IN, D1P)
    (r2, p2) = init_linear(k2, D1, D2, D1P, D2P)
    (r3, p3) = init_linear(k3, D2, D3, D2P, D3P)
    (r4, p4) = init_linear(k4, D3, D4, D3P, D4P)
    raw_params = (r1, r2, r3, r4)
    kernel_params = (p1, p2, p3, p4)

    out = jax.block_until_ready(mlp_forward(x, kernel_params))
    assert out.shape == (B, D4)

    ref_bf16 = reference_forward(x, raw_params)
    ref_f32 = reference_forward_f32(x, raw_params)
    assert jnp.allclose(out, ref_bf16, atol=1e-2, rtol=1e-2), \
        "mismatch vs bf16-emulating reference"
    assert jnp.allclose(out, ref_f32, atol=5e-2, rtol=5e-2), \
        "mismatch vs f32 reference"

    print("KERNEL_OK")
</pallas_src>

<mosaic_0001>
module attributes {stable_mosaic.version = 11 : i64} {
  func.func @mlp_kernel(%arg0: i32, %arg1: memref<152x784xf32, #tpu.memory_space<vmem>>, %arg2: memref<784x512xbf16, #tpu.memory_space<vmem>>, %arg3: memref<1x512xf32, #tpu.memory_space<vmem>>, %arg4: memref<512x256xbf16, #tpu.memory_space<vmem>>, %arg5: memref<1x256xf32, #tpu.memory_space<vmem>>, %arg6: memref<256x128xbf16, #tpu.memory_space<vmem>>, %arg7: memref<1x128xf32, #tpu.memory_space<vmem>>, %arg8: memref<128x128xbf16, #tpu.memory_space<vmem>>, %arg9: memref<1x128xf32, #tpu.memory_space<vmem>>, %arg10: memref<152x128xf32, #tpu.memory_space<vmem>>) attributes {dimension_semantics = [#tpu.dimension_semantics<parallel>], iteration_bounds = array<i64: 2>, scalar_prefetch = 0 : i64, scratch_operands = 0 : i64, tpu.core_type = #tpu.core_type<tc>, window_params = [{transform_indices = @transform_0, window_bounds = array<i64: 152, 784>}, {pipeline_mode = #tpu.pipeline_mode<synchronous>, transform_indices = @transform_1, window_bounds = array<i64: 784, 512>}, {pipeline_mode = #tpu.pipeline_mode<synchronous>, transform_indices = @transform_2, window_bounds = array<i64: 1, 512>}, {pipeline_mode = #tpu.pipeline_mode<synchronous>, transform_indices = @transform_3, window_bounds = array<i64: 512, 256>}, {pipeline_mode = #tpu.pipeline_mode<synchronous>, transform_indices = @transform_4, window_bounds = array<i64: 1, 256>}, {pipeline_mode = #tpu.pipeline_mode<synchronous>, transform_indices = @transform_5, window_bounds = array<i64: 256, 128>}, {pipeline_mode = #tpu.pipeline_mode<synchronous>, transform_indices = @transform_6, window_bounds = array<i64: 1, 128>}, {pipeline_mode = #tpu.pipeline_mode<synchronous>, transform_indices = @transform_7, window_bounds = array<i64: 128, 128>}, {pipeline_mode = #tpu.pipeline_mode<synchronous>, transform_indices = @transform_8, window_bounds = array<i64: 1, 128>}, {transform_indices = @transform_9, window_bounds = array<i64: 152, 128>}]} {
    %c0 = arith.constant 0 : index
    %c0_0 = arith.constant 0 : index
    %0 = vector.load %arg1[%c0, %c0_0] : memref<152x784xf32, #tpu.memory_space<vmem>>, vector<152x784xf32>
    %1 = arith.truncf %0 : vector<152x784xf32> to vector<152x784xbf16>
    %c0_1 = arith.constant 0 : index
    %c0_2 = arith.constant 0 : index
    %2 = vector.load %arg2[%c0_1, %c0_2] : memref<784x512xbf16, #tpu.memory_space<vmem>>, vector<784x512xbf16>
    %cst = arith.constant dense<0.000000e+00> : vector<152x512xf32>
    %3 = tpu.matmul %1, %2, %cst {dimension_numbers = #tpu.dot_dimension_numbers<[1], [0], [0], [1], [0, 0, 1, 1], [], []>} : vector<152x784xbf16>, vector<784x512xbf16>, vector<152x512xf32> -> vector<152x512xf32>
    %c0_3 = arith.constant 0 : index
    %c0_4 = arith.constant 0 : index
    %4 = vector.load %arg3[%c0_3, %c0_4] : memref<1x512xf32, #tpu.memory_space<vmem>>, vector<1x512xf32>
    %5 = vector.broadcast %4 : vector<1x512xf32> to vector<152x512xf32>
    %6 = arith.addf %3, %5 : vector<152x512xf32>
    %7 = arith.truncf %6 : vector<152x512xf32> to vector<152x512xbf16>
    %c0_5 = arith.constant 0 : index
    %c0_6 = arith.constant 0 : index
    %8 = vector.load %arg4[%c0_5, %c0_6] : memref<512x256xbf16, #tpu.memory_space<vmem>>, vector<512x256xbf16>
    %cst_7 = arith.constant dense<0.000000e+00> : vector<152x256xf32>
    %9 = tpu.matmul %7, %8, %cst_7 {dimension_numbers = #tpu.dot_dimension_numbers<[1], [0], [0], [1], [0, 0, 1, 1], [], []>} : vector<152x512xbf16>, vector<512x256xbf16>, vector<152x256xf32> -> vector<152x256xf32>
    %c0_8 = arith.constant 0 : index
    %c0_9 = arith.constant 0 : index
    %10 = vector.load %arg5[%c0_8, %c0_9] : memref<1x256xf32, #tpu.memory_space<vmem>>, vector<1x256xf32>
    %11 = vector.broadcast %10 : vector<1x256xf32> to vector<152x256xf32>
    %12 = arith.addf %9, %11 : vector<152x256xf32>
    %13 = arith.truncf %12 : vector<152x256xf32> to vector<152x256xbf16>
    %c0_10 = arith.constant 0 : index
    %c0_11 = arith.constant 0 : index
    %14 = vector.load %arg6[%c0_10, %c0_11] : memref<256x128xbf16, #tpu.memory_space<vmem>>, vector<256x128xbf16>
    %cst_12 = arith.constant dense<0.000000e+00> : vector<152x128xf32>
    %15 = tpu.matmul %13, %14, %cst_12 {dimension_numbers = #tpu.dot_dimension_numbers<[1], [0], [0], [1], [0, 0, 1, 1], [], []>} : vector<152x256xbf16>, vector<256x128xbf16>, vector<152x128xf32> -> vector<152x128xf32>
    %c0_13 = arith.constant 0 : index
    %c0_14 = arith.constant 0 : index
    %16 = vector.load %arg7[%c0_13, %c0_14] : memref<1x128xf32, #tpu.memory_space<vmem>>, vector<1x128xf32>
    %17 = vector.broadcast %16 : vector<1x128xf32> to vector<152x128xf32>
    %18 = arith.addf %15, %17 : vector<152x128xf32>
    %cst_15 = arith.constant 0.000000e+00 : f32
    %19 = vector.broadcast %cst_15 : f32 to vector<152x128xf32>
    %20 = arith.maximumf %18, %19 : vector<152x128xf32>
    %21 = arith.truncf %20 : vector<152x128xf32> to vector<152x128xbf16>
    %c0_16 = arith.constant 0 : index
    %c0_17 = arith.constant 0 : index
    %22 = vector.load %arg8[%c0_16, %c0_17] : memref<128x128xbf16, #tpu.memory_space<vmem>>, vector<128x128xbf16>
    %cst_18 = arith.constant dense<0.000000e+00> : vector<152x128xf32>
    %23 = tpu.matmul %21, %22, %cst_18 {dimension_numbers = #tpu.dot_dimension_numbers<[1], [0], [0], [1], [0, 0, 1, 1], [], []>} : vector<152x128xbf16>, vector<128x128xbf16>, vector<152x128xf32> -> vector<152x128xf32>
    %c0_19 = arith.constant 0 : index
    %c0_20 = arith.constant 0 : index
    %24 = vector.load %arg9[%c0_19, %c0_20] : memref<1x128xf32, #tpu.memory_space<vmem>>, vector<1x128xf32>
    %25 = vector.broadcast %24 : vector<1x128xf32> to vector<152x128xf32>
    %26 = arith.addf %23, %25 : vector<152x128xf32>
    %c0_21 = arith.constant 0 : index
    %c0_22 = arith.constant 0 : index
    %27 = vector.load %arg10[%c0_21, %c0_22] : memref<152x128xf32, #tpu.memory_space<vmem>>, vector<152x128xf32>
    tpu.vector_store %arg10[%c0_21, %c0_22], %26 {strides = array<i32>} : memref<152x128xf32, #tpu.memory_space<vmem>>, vector<152x128xf32>,
    return
  }
  func.func @transform_0(%arg0: i32) -> (i32, i32) {
    %c0_i32 = arith.constant 0 : i32
    %c0_i32_0 = arith.constant 0 : i32
    return %arg0, %c0_i32 : i32, i32
  }
  func.func @transform_1(%arg0: i32) -> (i32, i32) {
    %c0_i32 = arith.constant 0 : i32
    %c0_i32_0 = arith.constant 0 : i32
    %c0_i32_1 = arith.constant 0 : i32
    return %c0_i32, %c0_i32_0 : i32, i32
  }
  func.func @transform_2(%arg0: i32) -> (i32, i32) {
    %c0_i32 = arith.constant 0 : i32
    %c0_i32_0 = arith.constant 0 : i32
    %c0_i32_1 = arith.constant 0 : i32
    return %c0_i32, %c0_i32_0 : i32, i32
  }
  func.func @transform_3(%arg0: i32) -> (i32, i32) {
    %c0_i32 = arith.constant 0 : i32
    %c0_i32_0 = arith.constant 0 : i32
    %c0_i32_1 = arith.constant 0 : i32
    return %c0_i32, %c0_i32_0 : i32, i32
  }
  func.func @transform_4(%arg0: i32) -> (i32, i32) {
    %c0_i32 = arith.constant 0 : i32
    %c0_i32_0 = arith.constant 0 : i32
    %c0_i32_1 = arith.constant 0 : i32
    return %c0_i32, %c0_i32_0 : i32, i32
  }
  func.func @transform_5(%arg0: i32) -> (i32, i32) {
    %c0_i32 = arith.constant 0 : i32
    %c0_i32_0 = arith.constant 0 : i32
    %c0_i32_1 = arith.constant 0 : i32
    return %c0_i32, %c0_i32_0 : i32, i32
  }
  func.func @transform_6(%arg0: i32) -> (i32, i32) {
    %c0_i32 = arith.constant 0 : i32
    %c0_i32_0 = arith.constant 0 : i32
    %c0_i32_1 = arith.constant 0 : i32
    return %c0_i32, %c0_i32_0 : i32, i32
  }
  func.func @transform_7(%arg0: i32) -> (i32, i32) {
    %c0_i32 = arith.constant 0 : i32
    %c0_i32_0 = arith.constant 0 : i32
    %c0_i32_1 = arith.constant 0 : i32
    return %c0_i32, %c0_i32_0 : i32, i32
  }
  func.func @transform_8(%arg0: i32) -> (i32, i32) {
    %c0_i32 = arith.constant 0 : i32
    %c0_i32_0 = arith.constant 0 : i32
    %c0_i32_1 = arith.constant 0 : i32
    return %c0_i32, %c0_i32_0 : i32, i32
  }
  func.func @transform_9(%arg0: i32) -> (i32, i32) {
    %c0_i32 = arith.constant 0 : i32
    %c0_i32_0 = arith.constant 0 : i32
    return %arg0, %c0_i32 : i32, i32
  }
}

</mosaic_0001>

<llo_original>
// kernel: mlp_forward.1
$region0: #{mlp_forward.1}
  #allocation0 [shape = 'u32[]', space=smem, size = 0x4, offset = 0x4, fixed_abs, tag = 'smem constant byte address 0x4 - core index']
  #allocation1 [shape = 'u32[144,128]{1,0:T(1,128)}', space=vmem, size = 0x12000, scoped, tag = 'internal scratch']
  %s0 = inlined_call_operand.hbm [shape: f32[300,784], index: 0, kind: input, shape index: {}]
  %s1 = inlined_call_operand.hbm [shape: bf16[784,512], index: 1, kind: input, shape index: {}]
  %s2 = inlined_call_operand.hbm [shape: f32[1,512], index: 2, kind: input, shape index: {}]
  %s3 = inlined_call_operand.hbm [shape: bf16[512,256], index: 3, kind: input, shape index: {}]
  %s4 = inlined_call_operand.hbm [shape: f32[1,256], index: 4, kind: input, shape index: {}]
  %s5 = inlined_call_operand.hbm [shape: bf16[256,128], index: 5, kind: input, shape index: {}]
  %s6 = inlined_call_operand.hbm [shape: f32[1,128], index: 6, kind: input, shape index: {}]
  %s7 = inlined_call_operand.hbm [shape: bf16[128,128], index: 7, kind: input, shape index: {}]
  %s8 = inlined_call_operand.hbm [shape: f32[1,128], index: 8, kind: input, shape index: {}]
  %s9 = inlined_call_operand.vmem [shape: f32[300,128], index: 9, kind: output, shape index: {}]
  %s10 = sld [smem:[#allocation0]]
  $region105: #{mlp_forward.1} parent=0
    _
  %s12 = ssub.s32 1, %s10
  %s13 = scalar_select 0, %s12, %s10
  $region1: #{mlp_forward.1} parent=0
    #allocation2 [shape = 'u8[1089536]{0}', space=vmem, size = 0x10a000, scoped, tag = 'input window, operand 0']
    #allocation3 [shape = 's32[2]{0}', space=sflag, size = 0x8, scoped, tag = 'scoped memory for mlp_forward.1']
    #allocation4 [shape = 'u8[802816]{0}', space=vmem, size = 0xc4000, scoped, tag = 'input window, operand 1, single buffered']
    #allocation5 [shape = 's32[1]{0}', space=sflag, size = 0x4, scoped, tag = 'scoped memory for mlp_forward.1']
    #allocation6 [shape = 'u8[2048]{0}', space=vmem, size = 0x800, scoped, tag = 'input window, operand 2, single buffered']
    #allocation7 [shape = 'u8[262144]{0}', space=vmem, size = 0x40000, scoped, tag = 'input window, operand 3, single buffered']
    #allocation8 [shape = 's32[1]{0}', space=sflag, size = 0x4, scoped, tag = 'scoped memory for mlp_forward.1']
    #allocation9 [shape = 'u8[1024]{0}', space=vmem, size = 0x400, scoped, tag = 'input window, operand 4, single buffered']
    #allocation10 [shape = 'u8[65536]{0}', space=vmem, size = 0x10000, scoped, tag = 'input window, operand 5, single buffered']
    #allocation11 [shape = 's32[1]{0}', space=sflag, size = 0x4, scoped, tag = 'scoped memory for mlp_forward.1']
    #allocation12 [shape = 'u8[512]{0}', space=vmem, size = 0x400, scoped, tag = 'input window, operand 6, single buffered']
    #allocation13 [shape = 'u8[32768]{0}', space=vmem, size = 0x8000, scoped, tag = 'input window, operand 7, single buffered']
    #allocation14 [shape = 's32[1]{0}', space=sflag, size = 0x4, scoped, tag = 'scoped memory for mlp_forward.1']
    #allocation15 [shape = 'u8[512]{0}', space=vmem, size = 0x400, scoped, tag = 'input window, operand 8, single buffered']
    %14 = vsyncpa [#allocation3], 0
    %s15 = scalar_lea.sflag [#allocation3], 1
    %16 = vsyncpa %s15, 0
    %17 = vsyncpa [#allocation5], 0
    %18 = vsyncpa [#allocation8], 0
    %19 = vsyncpa [#allocation11], 0
    %20 = vsyncpa [#allocation14], 0
    loop: start=0, step=1, limit=4
    $region2: #{mlp_forward.1} parent=1 // loop_pre_header
      _
    $region3: #{mlp_forward.1} parent=1 // loop_header
      %s22 = sphi 0, %s26
      %p23 = scmp.ge.s32.totalorder %s22, 4
      %s32 = sphi 0, %s34
      %s35 = sphi 0, %s32
      %s36 = sphi 0, %s35
      %s52 = sphi 0, %s36
      %s56 = sphi 0, %s56
      %s58 = sphi 0, %s56
      %s59 = sphi 0, %s58
      %s73 = sphi 0, %s59
      %s77 = sphi 0, %s77
      %s79 = sphi 0, %s77
      %s80 = sphi 0, %s79
      %s94 = sphi 0, %s80
      %s98 = sphi 0, %s98
      %s100 = sphi 0, %s98
      %s101 = sphi 0, %s100
      %s115 = sphi 0, %s101
      %s119 = sphi 0, %s119
      %s121 = sphi 0, %s119
      %s122 = sphi 0, %s121
      %s136 = sphi 0, %s122
      %s140 = sphi 0, %s140
      %s142 = sphi 0, %s140
      %s143 = sphi 0, %s142
      %s157 = sphi 0, %s143
      %s161 = sphi 0, %s161
      %s163 = sphi 0, %s161
      %s164 = sphi 0, %s163
      %s178 = sphi 0, %s164
      %s182 = sphi 0, %s182
      %s184 = sphi 0, %s182
      %s185 = sphi 0, %s184
      %s199 = sphi 0, %s185
      %s203 = sphi 0, %s203
      %s205 = sphi 0, %s203
      %s206 = sphi 0, %s205
      %s220 = sphi 0, %s206
      %s226 = sphi 0, %s228
      %s229 = sphi 0, %s226
      %s230 = sphi 0, %s229
      %s246 = sphi 0, %s230
    $region4: #{mlp_forward.1} parent=1 // loop_header_branch
      %25 = sbr.rel (%p23) target = $region8
    $region5: #{mlp_forward.1} parent=1 // loop_body
      %s27 = ssub.s32 %s22, 1
      %s28 = ssub.s32 %s22, 2
      %s29 = sadd.s32 %s22, 1
      %s30 = ssub.s32 %s22, %s29
      %p31 = scmp.eq.s32.totalorder %s30, 0
      %s33 = sadd.s32 %s32, 1
      %s34 = scalar_select %p31, %s32, %s33
      %p37 = pneg %p31
      %p38 = scmp.eq.s32.totalorder %s22, 1
      %p39 = por %p37, %p38
      %p40 = scmp.ne.s32.totalorder %s32, %s35
      %p41 = scmp.eq.s32.totalorder %s22, 0
      %p42 = por %p40, %p41
      %p43 = scmp.ne.s32.totalorder %s32, %s35
      %p44 = scmp.eq.s32.totalorder %s27, 1
      %p45 = por %p43, %p44
      %p46 = scmp.ne.s32.totalorder %s35, %s36
      %p47 = scmp.eq.s32.totalorder %s27, 0
      %p48 = por %p46, %p47
      %p49 = scmp.ne.s32.totalorder %s35, %s36
      %p50 = scmp.eq.s32.totalorder %s28, 1
      %p51 = por %p49, %p50
      %p53 = scmp.ne.s32.totalorder %s36, %s52
      %p54 = scmp.eq.s32.totalorder %s28, 0
      %p55 = por %p53, %p54
      %s57 = sadd.s32 %s56, 1
      %p60 = scmp.eq.s32.totalorder %s22, 1
      %p61 = scmp.ne.s32.totalorder %s56, %s58
      %p62 = scmp.eq.s32.totalorder %s22, 0
      %p63 = por %p61, %p62
      %p64 = scmp.ne.s32.totalorder %s56, %s58
      %p65 = scmp.eq.s32.totalorder %s27, 1
      %p66 = por %p64, %p65
      %p67 = scmp.ne.s32.totalorder %s58, %s59
      %p68 = scmp.eq.s32.totalorder %s27, 0
      %p69 = por %p67, %p68
      %p70 = scmp.ne.s32.totalorder %s58, %s59
      %p71 = scmp.eq.s32.totalorder %s28, 1
      %p72 = por %p70, %p71
      %p74 = scmp.ne.s32.totalorder %s59, %s73
      %p75 = scmp.eq.s32.totalorder %s28, 0
      %p76 = por %p74, %p75
      %s78 = sadd.s32 %s77, 1
      %p81 = scmp.eq.s32.totalorder %s22, 1
      %p82 = scmp.ne.s32.totalorder %s77, %s79
      %p83 = scmp.eq.s32.totalorder %s22, 0
      %p84 = por %p82, %p83
      %p85 = scmp.ne.s32.totalorder %s77, %s79
      %p86 = scmp.eq.s32.totalorder %s27, 1
      %p87 = por %p85, %p86
      %p88 = scmp.ne.s32.totalorder %s79, %s80
      %p89 = scmp.eq.s32.totalorder %s27, 0
      %p90 = por %p88, %p89
      %p91 = scmp.ne.s32.totalorder %s79, %s80
      %p92 = scmp.eq.s32.totalorder %s28, 1
      %p93 = por %p91, %p92
      %p95 = scmp.ne.s32.totalorder %s80, %s94
      %p96 = scmp.eq.s32.totalorder %s28, 0
      %p97 = por %p95, %p96
      %s99 = sadd.s32 %s98, 1
      %p102 = scmp.eq.s32.totalorder %s22, 1
      %p103 = scmp.ne.s32.totalorder %s98, %s100
      %p104 = scmp.eq.s32.totalorder %s22, 0
      %p105 = por %p103, %p104
      %p106 = scmp.ne.s32.totalorder %s98, %s100
      %p107 = scmp.eq.s32.totalorder %s27, 1
      %p108 = por %p106, %p107
      %p109 = scmp.ne.s32.totalorder %s100, %s101
      %p110 = scmp.eq.s32.totalorder %s27, 0
      %p111 = por %p109, %p110
      %p112 = scmp.ne.s32.totalorder %s100, %s101
      %p113 = scmp.eq.s32.totalorder %s28, 1
      %p114 = por %p112, %p113
      %p116 = scmp.ne.s32.totalorder %s101, %s115
      %p117 = scmp.eq.s32.totalorder %s28, 0
      %p118 = por %p116, %p117
      %s120 = sadd.s32 %s119, 1
      %p123 = scmp.eq.s32.totalorder %s22, 1
      %p124 = scmp.ne.s32.totalorder %s119, %s121
      %p125 = scmp.eq.s32.totalorder %s22, 0
      %p126 = por %p124, %p125
      %p127 = scmp.ne.s32.totalorder %s119, %s121
      %p128 = scmp.eq.s32.totalorder %s27, 1
      %p129 = por %p127, %p128
      %p130 = scmp.ne.s32.totalorder %s121, %s122
      %p131 = scmp.eq.s32.totalorder %s27, 0
      %p132 = por %p130, %p131
      %p133 = scmp.ne.s32.totalorder %s121, %s122
      %p134 = scmp.eq.s32.totalorder %s28, 1
      %p135 = por %p133, %p134
      %p137 = scmp.ne.s32.totalorder %s122, %s136
      %p138 = scmp.eq.s32.totalorder %s28, 0
      %p139 = por %p137, %p138
      %s141 = sadd.s32 %s140, 1
      %p144 = scmp.eq.s32.totalorder %s22, 1
      %p145 = scmp.ne.s32.totalorder %s140, %s142
      %p146 = scmp.eq.s32.totalorder %s22, 0
      %p147 = por %p145, %p146
      %p148 = scmp.ne.s32.totalorder %s140, %s142
      %p149 = scmp.eq.s32.totalorder %s27, 1
      %p150 = por %p148, %p149
      %p151 = scmp.ne.s32.totalorder %s142, %s143
      %p152 = scmp.eq.s32.totalorder %s27, 0
      %p153 = por %p151, %p152
      %p154 = scmp.ne.s32.totalorder %s142, %s143
      %p155 = scmp.eq.s32.totalorder %s28, 1
      %p156 = por %p154, %p155
      %p158 = scmp.ne.s32.totalorder %s143, %s157
      %p159 = scmp.eq.s32.totalorder %s28, 0
      %p160 = por %p158, %p159
      %s162 = sadd.s32 %s161, 1
      %p165 = scmp.eq.s32.totalorder %s22, 1
      %p166 = scmp.ne.s32.totalorder %s161, %s163
      %p167 = scmp.eq.s32.totalorder %s22, 0
      %p168 = por %p166, %p167
      %p169 = scmp.ne.s32.totalorder %s161, %s163
      %p170 = scmp.eq.s32.totalorder %s27, 1
      %p171 = por %p169, %p170
      %p172 = scmp.ne.s32.totalorder %s163, %s164
      %p173 = scmp.eq.s32.totalorder %s27, 0
      %p174 = por %p172, %p173
      %p175 = scmp.ne.s32.totalorder %s163, %s164
      %p176 = scmp.eq.s32.totalorder %s28, 1
      %p177 = por %p175, %p176
      %p179 = scmp.ne.s32.totalorder %s164, %s178
      %p180 = scmp.eq.s32.totalorder %s28, 0
      %p181 = por %p179, %p180
      %s183 = sadd.s32 %s182, 1
      %p186 = scmp.eq.s32.totalorder %s22, 1
      %p187 = scmp.ne.s32.totalorder %s182, %s184
      %p188 = scmp.eq.s32.totalorder %s22, 0
      %p189 = por %p187, %p188
      %p190 = scmp.ne.s32.totalorder %s182, %s184
      %p191 = scmp.eq.s32.totalorder %s27, 1
      %p192 = por %p190, %p191
      %p193 = scmp.ne.s32.totalorder %s184, %s185
      %p194 = scmp.eq.s32.totalorder %s27, 0
      %p195 = por %p193, %p194
      %p196 = scmp.ne.s32.totalorder %s184, %s185
      %p197 = scmp.eq.s32.totalorder %s28, 1
      %p198 = por %p196, %p197
      %p200 = scmp.ne.s32.totalorder %s185, %s199
      %p201 = scmp.eq.s32.totalorder %s28, 0
      %p202 = por %p200, %p201
      %s204 = sadd.s32 %s203, 1
      %p207 = scmp.eq.s32.totalorder %s22, 1
      %p208 = scmp.ne.s32.totalorder %s203, %s205
      %p209 = scmp.eq.s32.totalorder %s22, 0
      %p210 = por %p208, %p209
      %p211 = scmp.ne.s32.totalorder %s203, %s205
      %p212 = scmp.eq.s32.totalorder %s27, 1
      %p213 = por %p211, %p212
      %p214 = scmp.ne.s32.totalorder %s205, %s206
      %p215 = scmp.eq.s32.totalorder %s27, 0
      %p216 = por %p214, %p215
      %p217 = scmp.ne.s32.totalorder %s205, %s206
      %p218 = scmp.eq.s32.totalorder %s28, 1
      %p219 = por %p217, %p218
      %p221 = scmp.ne.s32.totalorder %s206, %s220
      %p222 = scmp.eq.s32.totalorder %s28, 0
      %p223 = por %p221, %p222
      %s224 = ssub.s32 %s22, %s29
      %p225 = scmp.eq.s32.totalorder %s224, 0
      %s227 = sadd.s32 %s226, 1
      %s228 = scalar_select %p225, %s226, %s227
      %p231 = pneg %p225
      %p232 = scmp.eq.s32.totalorder %s22, 1
      %p233 = por %p231, %p232
      %p234 = scmp.ne.s32.totalorder %s226, %s229
      %p235 = scmp.eq.s32.totalorder %s22, 0
      %p236 = por %p234, %p235
      %p237 = scmp.ne.s32.totalorder %s226, %s229
      %p238 = scmp.eq.s32.totalorder %s27, 1
      %p239 = por %p237, %p238
      %p240 = scmp.ne.s32.totalorder %s229, %s230
      %p241 = scmp.eq.s32.totalorder %s27, 0
      %p242 = por %p240, %p241
      %p243 = scmp.ne.s32.totalorder %s229, %s230
      %p244 = scmp.eq.s32.totalorder %s28, 1
      %p245 = por %p243, %p244
      %p247 = scmp.ne.s32.totalorder %s230, %s246
      %p248 = scmp.eq.s32.totalorder %s28, 0
      %p249 = por %p247, %p248
      %p250 = scmp.le.s32.totalorder 1, %s22
      %p251 = scmp.lt.s32.totalorder %s22, 3
      %p252 = pnand %p250, %p251
      %p253 = pneg %p252
      // Predicated region
      $region9: #{mlp_forward.1} parent=5 // pred_check
        _
      $region10: #{mlp_forward.1} parent=5 // pred_check_branch
        %255 = sbr.rel (%p252) target = $region12
      $region11: #{mlp_forward.1} parent=5 // pred_region
        %s256 = ssub.s32 %s22, 1
        // Predicated region
        $region13: #{mlp_forward.1} parent=11 // pred_check
          %p257 = pneg %p69
        $region14: #{mlp_forward.1} parent=11 // pred_check_branch
          %259 = sbr.rel (%p257) target = $region16
        $region15: #{mlp_forward.1} parent=11 // pred_region
          %s261 = ssub.s32 25088, 25088
          %262 = vsyncadd [#allocation5], %s261
          %s263 = sshll.u32 [#allocation4], 4
          %s264 = int_to_ptr.vmem [resolvable:$true] %s263
          %269 = dma.hbm_to_vmem [thread:$0]  %s1, 25088, %s264, [#allocation5], 256, 256, 16
        $region16: #{mlp_forward.1} parent=11 // pred_fallthru
          _
        // Predicated region
        $region17: #{mlp_forward.1} parent=11 // pred_check
          %p270 = pneg %p90
        $region18: #{mlp_forward.1} parent=11 // pred_check_branch
          %272 = sbr.rel (%p270) target = $region20
        $region19: #{mlp_forward.1} parent=11 // pred_region
          %s274 = ssub.s32 64, 64
          %275 = vsyncadd [#allocation5], %s274
          %s277 = sshll.u32 [#allocation6], 4
          %s278 = int_to_ptr.vmem [resolvable:$true] %s277
          %280 = dma.hbm_to_vmem [thread:$0]  %s2, 64, %s278, [#allocation5]
        $region20: #{mlp_forward.1} parent=11 // pred_fallthru
          _
        // Predicated region
        $region21: #{mlp_forward.1} parent=11 // pred_check
          %p281 = pneg %p111
        $region22: #{mlp_forward.1} parent=11 // pred_check_branch
          %283 = sbr.rel (%p281) target = $region24
        $region23: #{mlp_forward.1} parent=11 // pred_region
          %s285 = ssub.s32 8192, 8192
          %286 = vsyncadd [#allocation8], %s285
          %s287 = sshll.u32 [#allocation7], 4
          %s288 = int_to_ptr.vmem [resolvable:$true] %s287
          %293 = dma.hbm_to_vmem [thread:$0]  %s3, 8192, %s288, [#allocation8], 128, 128, 8
        $region24: #{mlp_forward.1} parent=11 // pred_fallthru
          _
        // Predicated region
        $region25: #{mlp_forward.1} parent=11 // pred_check
          %p294 = pneg %p132
        $region26: #{mlp_forward.1} parent=11 // pred_check_branch
          %296 = sbr.rel (%p294) target = $region28
        $region27: #{mlp_forward.1} parent=11 // pred_region
          %s298 = ssub.s32 32, 32
          %299 = vsyncadd [#allocation8], %s298
          %s301 = sshll.u32 [#allocation9], 4
          %s302 = int_to_ptr.vmem [resolvable:$true] %s301
          %304 = dma.hbm_to_vmem [thread:$0]  %s4, 32, %s302, [#allocation8]
        $region28: #{mlp_forward.1} parent=11 // pred_fallthru
          _
        // Predicated region
        $region29: #{mlp_forward.1} parent=11 // pred_check
          %p305 = pneg %p153
        $region30: #{mlp_forward.1} parent=11 // pred_check_branch
          %307 = sbr.rel (%p305) target = $region32
        $region31: #{mlp_forward.1} parent=11 // pred_region
          %s309 = ssub.s32 2048, 2048
          %310 = vsyncadd [#allocation11], %s309
          %s311 = sshll.u32 [#allocation10], 4
          %s312 = int_to_ptr.vmem [resolvable:$true] %s311
          %317 = dma.hbm_to_vmem [thread:$0]  %s5, 2048, %s312, [#allocation11], 64, 64, 4
        $region32: #{mlp_forward.1} parent=11 // pred_fallthru
          _
        // Predicated region
        $region33: #{mlp_forward.1} parent=11 // pred_check
          %p318 = pneg %p174
        $region34: #{mlp_forward.1} parent=11 // pred_check_branch
          %320 = sbr.rel (%p318) target = $region36
        $region35: #{mlp_forward.1} parent=11 // pred_region
          %s322 = ssub.s32 16, 16
          %323 = vsyncadd [#allocation11], %s322
          %s325 = sshll.u32 [#allocation12], 4
          %s326 = int_to_ptr.vmem [resolvable:$true] %s325
          %328 = dma.hbm_to_vmem [thread:$0]  %s6, 16, %s326, [#allocation11]
        $region36: #{mlp_forward.1} parent=11 // pred_fallthru
          _
        // Predicated region
        $region37: #{mlp_forward.1} parent=11 // pred_check
          %p329 = pneg %p195
        $region38: #{mlp_forward.1} parent=11 // pred_check_branch
          %331 = sbr.rel (%p329) target = $region40
        $region39: #{mlp_forward.1} parent=11 // pred_region
          %s333 = ssub.s32 1024, 1024
          %334 = vsyncadd [#allocation14], %s333
          %s335 = sshll.u32 [#allocation13], 4
          %s336 = int_to_ptr.vmem [resolvable:$true] %s335
          %341 = dma.hbm_to_vmem [thread:$0]  %s7, 1024, %s336, [#allocation14], 64, 64, 4
        $region40: #{mlp_forward.1} parent=11 // pred_fallthru
          _
        // Predicated region
        $region41: #{mlp_forward.1} parent=11 // pred_check
          %p342 = pneg %p216
        $region42: #{mlp_forward.1} parent=11 // pred_check_branch
          %344 = sbr.rel (%p342) target = $region44
        $region43: #{mlp_forward.1} parent=11 // pred_region
          %s346 = ssub.s32 16, 16
          %347 = vsyncadd [#allocation14], %s346
          %s349 = sshll.u32 [#allocation15], 4
          %s350 = int_to_ptr.vmem [resolvable:$true] %s349
          %352 = dma.hbm_to_vmem [thread:$0]  %s8, 16, %s350, [#allocation14]
        $region44: #{mlp_forward.1} parent=11 // pred_fallthru
          _
      $region12: #{mlp_forward.1} parent=5 // pred_fallthru
        _
      %p353 = scmp.lt.s32.totalorder %s22, 2
      // Predicated region
      $region45: #{mlp_forward.1} parent=5 // pred_check
        %p354 = pneg %p353
      $region46: #{mlp_forward.1} parent=5 // pred_check_branch
        %356 = sbr.rel (%p354) target = $region48
      $region47: #{mlp_forward.1} parent=5 // pred_region
        // Predicated region
        $region49: #{mlp_forward.1} parent=47 // pred_check
          %p357 = pneg %p42
        $region50: #{mlp_forward.1} parent=47 // pred_check_branch
          %359 = sbr.rel (%p357) target = $region52
        $region51: #{mlp_forward.1} parent=47 // pred_region
          %s360 = sand.u32 %s32, 1
          %s361 = scalar_lea.sflag [#allocation3], %s360
          %s362 = sand.u32 %s32, 1
          %s363 = smul.addr %s362, 1064
          %s364 = scalar_lea.vmem [#allocation2], %s363
          %s365 = smul.u32 19, %s22
          %s367 = ssub.s32 17024, 17024
          %368 = vsyncadd %s361, %s367
          %s369 = smul.addr %s365, 7
          %s370 = smul.addr %s369, 128
          %s371 = scalar_lea.hbm %s0, %s370
          %s372 = sshll.u32 %s364, 4
          %s373 = int_to_ptr.vmem [resolvable:$true] %s372
          %378 = dma.hbm_to_vmem [thread:$0]  %s371, 17024, %s373, %s361, 896, 896, 56
        $region52: #{mlp_forward.1} parent=47 // pred_fallthru
          _
      $region48: #{mlp_forward.1} parent=5 // pred_fallthru
        _
      %p379 = scmp.le.s32.totalorder 1, %s22
      %p380 = scmp.lt.s32.totalorder %s22, 3
      %p381 = pnand %p379, %p380
      %p382 = pneg %p381
      // Predicated region
      $region53: #{mlp_forward.1} parent=5 // pred_check
        _
      $region54: #{mlp_forward.1} parent=5 // pred_check_branch
        %384 = sbr.rel (%p381) target = $region56
      $region55: #{mlp_forward.1} parent=5 // pred_region
        %s385 = ssub.s32 %s22, 1
        %s386 = sand.u32 %s35, 1
        %s387 = scalar_lea.sflag [#allocation3], %s386
        %s388 = sand.u32 %s35, 1
        %s389 = smul.addr %s388, 1064
        %s390 = scalar_lea.vmem [#allocation2], %s389
        // Predicated region
        $region57: #{mlp_forward.1} parent=55 // pred_check
          %p391 = pneg %p48
        $region58: #{mlp_forward.1} parent=55 // pred_check_branch
          %393 = sbr.rel (%p391) target = $region60
        $region59: #{mlp_forward.1} parent=55 // pred_region
          %394 = dma.done %s387, 17024
        $region60: #{mlp_forward.1} parent=55 // pred_fallthru
          _
        // Predicated region
        $region61: #{mlp_forward.1} parent=55 // pred_check
          %p395 = pneg %p69
        $region62: #{mlp_forward.1} parent=55 // pred_check_branch
          %397 = sbr.rel (%p395) target = $region64
        $region63: #{mlp_forward.1} parent=55 // pred_region
          %398 = dma.done [#allocation5], 25088
        $region64: #{mlp_forward.1} parent=55 // pred_fallthru
          _
        // Predicated region
        $region65: #{mlp_forward.1} parent=55 // pred_check
          %p399 = pneg %p90
        $region66: #{mlp_forward.1} parent=55 // pred_check_branch
          %401 = sbr.rel (%p399) target = $region68
        $region67: #{mlp_forward.1} parent=55 // pred_region
          %402 = dma.done [#allocation5], 64
        $region68: #{mlp_forward.1} parent=55 // pred_fallthru
          _
        // Predicated region
        $region69: #{mlp_forward.1} parent=55 // pred_check
          %p403 = pneg %p111
        $region70: #{mlp_forward.1} parent=55 // pred_check_branch
          %405 = sbr.rel (%p403) target = $region72
        $region71: #{mlp_forward.1} parent=55 // pred_region
          %406 = dma.done [#allocation8], 8192
        $region72: #{mlp_forward.1} parent=55 // pred_fallthru
          _
        // Predicated region
        $region73: #{mlp_forward.1} parent=55 // pred_check
          %p407 = pneg %p132
        $region74: #{mlp_forward.1} parent=55 // pred_check_branch
          %409 = sbr.rel (%p407) target = $region76
        $region75: #{mlp_forward.1} parent=55 // pred_region
          %410 = dma.done [#allocation8], 32
        $region76: #{mlp_forward.1} parent=55 // pred_fallthru
          _
        // Predicated region
        $region77: #{mlp_forward.1} parent=55 // pred_check
          %p411 = pneg %p153
        $region78: #{mlp_forward.1} parent=55 // pred_check_branch
          %413 = sbr.rel (%p411) target = $region80
        $region79: #{mlp_forward.1} parent=55 // pred_region
          %414 = dma.done [#allocation11], 2048
        $region80: #{mlp_forward.1} parent=55 // pred_fallthru
          _
        // Predicated region
        $region81: #{mlp_forward.1} parent=55 // pred_check
          %p415 = pneg %p174
        $region82: #{mlp_forward.1} parent=55 // pred_check_branch
          %417 = sbr.rel (%p415) target = $region84
        $region83: #{mlp_forward.1} parent=55 // pred_region
          %418 = dma.done [#allocation11], 16
        $region84: #{mlp_forward.1} parent=55 // pred_fallthru
          _
        // Predicated region
        $region85: #{mlp_forward.1} parent=55 // pred_check
          %p419 = pneg %p195
        $region86: #{mlp_forward.1} parent=55 // pred_check_branch
          %421 = sbr.rel (%p419) target = $region88
        $region87: #{mlp_forward.1} parent=55 // pred_region
          %422 = dma.done [#allocation14], 1024
        $region88: #{mlp_forward.1} parent=55 // pred_fallthru
          _
        // Predicated region
        $region89: #{mlp_forward.1} parent=55 // pred_check
          %p423 = pneg %p216
        $region90: #{mlp_forward.1} parent=55 // pred_check_branch
          %425 = sbr.rel (%p423) target = $region92
        $region91: #{mlp_forward.1} parent=55 // pred_region
          %426 = dma.done [#allocation14], 16
        $region92: #{mlp_forward.1} parent=55 // pred_fallthru
          _
        %s427 = sand.u32 %s35, 1
        %s428 = scalar_lea.sflag [#allocation3], %s427
        %s429 = sand.u32 %s35, 1
        %s430 = smul.addr %s429, 1064
        %s431 = scalar_lea.vmem [#allocation2], %s430
        %p432 = pneg %p48
        %p433 = pneg %p45
        %p434 = pneg %p69
        %p435 = pneg %p66
        %p436 = pneg %p90
        %p437 = pneg %p87
        %p438 = pneg %p111
        %p439 = pneg %p108
        %p440 = pneg %p132
        %p441 = pneg %p129
        %p442 = pneg %p153
        %p443 = pneg %p150
        %p444 = pneg %p174
        %p445 = pneg %p171
        %p446 = pneg %p195
        %p447 = pneg %p192
        %p448 = pneg %p216
        %p449 = pneg %p213
        %p450 = pneg %p242
        %p451 = pneg %p239
        %s452 = smul.u32 19, %s27
        %p453 = scmp.lt.s32.totalorder %s452, 37
        %s454 = scalar_select %p453, %s452, 37
        %s455 = smul.addr %s454, 8
        %s456 = scalar_lea.vmem %s9, %s455
        %s457 = smul.u32 19, %s27
        %s458 = smul.u32 19, %s27
        %p459 = scmp.lt.s32.totalorder %s458, 37
        %s460 = scalar_select %p459, %s458, 37
        %s461 = smul.addr %s460, 8
        %s462 = scalar_lea.vmem %s9, %s461
        %s463 = smul.u32 19, %s27
        %v465 = vld [vmem:[%s390] sm:$0xff]
        %v466 = vld [vmem:[%s390 + $0x8] sm:$0xff]
        %v467 = vld [vmem:[%s390 + $0x10] sm:$0xff]
        %v468 = vld [vmem:[%s390 + $0x18] sm:$0xff]
        %v469 = vld [vmem:[%s390 + $0x20] sm:$0xff]
        %v470 = vld [vmem:[%s390 + $0x28] sm:$0xff]
        %v471 = vld [vmem:[%s390 + $0x30] sm:$0xff]
        %v472 = vld [vmem:[%s390 + $0x38] sm:$0xff]
        %v473 = vld [vmem:[%s390 + $0x40] sm:$0xff]
        %v474 = vld [vmem:[%s390 + $0x48] sm:$0xff]
        %v475 = vld [vmem:[%s390 + $0x50] sm:$0xff]
        %v476 = vld [vmem:[%s390 + $0x58] sm:$0xff]
        %v477 = vld [vmem:[%s390 + $0x60] sm:$0xff]
        %v478 = vld [vmem:[%s390 + $0x68] sm:$0xff]
        %v479 = vld [vmem:[%s390 + $0x70] sm:$0xff]
        %v480 = vld [vmem:[%s390 + $0x78] sm:$0xff]
        %v481 = vld [vmem:[%s390 + $0x80] sm:$0xff]
        %v482 = vld [vmem:[%s390 + $0x88] sm:$0xff]
        %v483 = vld [vmem:[%s390 + $0x90] sm:$0xff]
        %v484 = vld [vmem:[%s390 + $0x98] sm:$0xff]
        %v485 = vld [vmem:[%s390 + $0xa0] sm:$0xff]
        %v486 = vld [vmem:[%s390 + $0xa8] sm:$0xff]
        %v487 = vld [vmem:[%s390 + $0xb0] sm:$0xff]
        %v488 = vld [vmem:[%s390 + $0xb8] sm:$0xff]
        %v489 = vld [vmem:[%s390 + $0xc0] sm:$0xff]
        %v490 = vld [vmem:[%s390 + $0xc8] sm:$0xff]
        %v491 = vld [vmem:[%s390 + $0xd0] sm:$0xff]
        %v492 = vld [vmem:[%s390 + $0xd8] sm:$0xff]
        %v493 = vld [vmem:[%s390 + $0xe0] sm:$0xff]
        %v494 = vld [vmem:[%s390 + $0xe8] sm:$0xff]
        %v495 = vld [vmem:[%s390 + $0xf0] sm:$0xff]
        %v496 = vld [vmem:[%s390 + $0xf8] sm:$0xff]
        %v497 = vld [vmem:[%s390 + $0x100] sm:$0xff]
        %v498 = vld [vmem:[%s390 + $0x108] sm:$0xff]
        %v499 = vld [vmem:[%s390 + $0x110] sm:$0xff]
        %v500 = vld [vmem:[%s390 + $0x118] sm:$0xff]
        %v501 = vld [vmem:[%s390 + $0x120] sm:$0xff]
        %v502 = vld [vmem:[%s390 + $0x128] sm:$0xff]
        %v503 = vld [vmem:[%s390 + $0x130] sm:$0xff]
        %v504 = vld [vmem:[%s390 + $0x138] sm:$0xff]
        %v505 = vld [vmem:[%s390 + $0x140] sm:$0xff]
        %v506 = vld [vmem:[%s390 + $0x148] sm:$0xff]
        %v507 = vld [vmem:[%s390 + $0x150] sm:$0xff]
        %v508 = vld [vmem:[%s390 + $0x158] sm:$0xff]
        %v509 = vld [vmem:[%s390 + $0x160] sm:$0xff]
        %v510 = vld [vmem:[%s390 + $0x168] sm:$0xff]
        %v511 = vld [vmem:[%s390 + $0x170] sm:$0xff]
        %v512 = vld [vmem:[%s390 + $0x178] sm:$0xff]
        %v513 = vld [vmem:[%s390 + $0x180] sm:$0xff]
        %v514 = vld [vmem:[%s390 + $0x188] sm:$0xff]
        %v515 = vld [vmem:[%s390 + $0x190] sm:$0xff]
        %v516 = vld [vmem:[%s390 + $0x198] sm:$0xff]
        %v517 = vld [vmem:[%s390 + $0x1a0] sm:$0xff]
        %v518 = vld [vmem:[%s390 + $0x1a8] sm:$0xff]
        %v519 = vld [vmem:[%s390 + $0x1b0] sm:$0xff]
        %v520 = vld [vmem:[%s390 + $0x1b8] sm:$0xff]
        %v521 = vld [vmem:[%s390 + $0x1c0] sm:$0xff]
        %v522 = vld [vmem:[%s390 + $0x1c8] sm:$0xff]
        %v523 = vld [vmem:[%s390 + $0x1d0] sm:$0xff]
        %v524 = vld [vmem:[%s390 + $0x1d8] sm:$0xff]
        %v525 = vld [vmem:[%s390 + $0x1e0] sm:$0xff]
        %v526 = vld [vmem:[%s390 + $0x1e8] sm:$0xff]
        %v527 = vld [vmem:[%s390 + $0x1f0] sm:$0xff]
        %v528 = vld [vmem:[%s390 + $0x1f8] sm:$0xff]
        %v529 = vld [vmem:[%s390 + $0x200] sm:$0xff]
        %v530 = vld [vmem:[%s390 + $0x208] sm:$0xff]
        %v531 = vld [vmem:[%s390 + $0x210] sm:$0xff]
        %v532 = vld [vmem:[%s390 + $0x218] sm:$0xff]
        %v533 = vld [vmem:[%s390 + $0x220] sm:$0xff]
        %v534 = vld [vmem:[%s390 + $0x228] sm:$0xff]
        %v535 = vld [vmem:[%s390 + $0x230] sm:$0xff]
        %v536 = vld [vmem:[%s390 + $0x238] sm:$0xff]
        %v537 = vld [vmem:[%s390 + $0x240] sm:$0xff]
        %v538 = vld [vmem:[%s390 + $0x248] sm:$0xff]
        %v539 = vld [vmem:[%s390 + $0x250] sm:$0xff]
        %v540 = vld [vmem:[%s390 + $0x258] sm:$0xff]
        %v541 = vld [vmem:[%s390 + $0x260] sm:$0xff]
        %v542 = vld [vmem:[%s390 + $0x268] sm:$0xff]
        %v543 = vld [vmem:[%s390 + $0x270] sm:$0xff]
        %v544 = vld [vmem:[%s390 + $0x278] sm:$0xff]
        %v545 = vld [vmem:[%s390 + $0x280] sm:$0xff]
        %v546 = vld [vmem:[%s390 + $0x288] sm:$0xff]
        %v547 = vld [vmem:[%s390 + $0x290] sm:$0xff]
        %v548 = vld [vmem:[%s390 + $0x298] sm:$0xff]
        %v549 = vld [vmem:[%s390 + $0x2a0] sm:$0xff]
        %v550 = vld [vmem:[%s390 + $0x2a8] sm:$0xff]
        %v551 = vld [vmem:[%s390 + $0x2b0] sm:$0xff]
        %v552 = vld [vmem:[%s390 + $0x2b8] sm:$0xff]
        %v553 = vld [vmem:[%s390 + $0x2c0] sm:$0xff]
        %v554 = vld [vmem:[%s390 + $0x2c8] sm:$0xff]
        %v555 = vld [vmem:[%s390 + $0x2d0] sm:$0xff]
        %v556 = vld [vmem:[%s390 + $0x2d8] sm:$0xff]
        %v557 = vld [vmem:[%s390 + $0x2e0] sm:$0xff]
        %v558 = vld [vmem:[%s390 + $0x2e8] sm:$0xff]
        %v559 = vld [vmem:[%s390 + $0x2f0] sm:$0xff]
        %v560 = vld [vmem:[%s390 + $0x2f8] sm:$0xff]
        %v561 = vld [vmem:[%s390 + $0x300] sm:$0xff]
        %v562 = vld [vmem:[%s390 + $0x308] sm:$0xff]
        %v563 = vld [vmem:[%s390 + $0x310] sm:$0xff]
        %v564 = vld [vmem:[%s390 + $0x318] sm:$0xff]
        %v565 = vld [vmem:[%s390 + $0x320] sm:$0xff]
        %v566 = vld [vmem:[%s390 + $0x328] sm:$0xff]
        %v567 = vld [vmem:[%s390 + $0x330] sm:$0xff]
        %v568 = vld [vmem:[%s390 + $0x338] sm:$0xff]
        %v569 = vld [vmem:[%s390 + $0x340] sm:$0xff]
        %v570 = vld [vmem:[%s390 + $0x348] sm:$0xff]
        %v571 = vld [vmem:[%s390 + $0x350] sm:$0xff]
        %v572 = vld [vmem:[%s390 + $0x358] sm:$0xff]
        %v573 = vld [vmem:[%s390 + $0x360] sm:$0xff]
        %v574 = vld [vmem:[%s390 + $0x368] sm:$0xff]
        %v575 = vld [vmem:[%s390 + $0x370] sm:$0xff]
        %v576 = vld [vmem:[%s390 + $0x378] sm:$0xff]
        %v577 = vld [vmem:[%s390 + $0x380] sm:$0xff]
        %v578 = vld [vmem:[%s390 + $0x388] sm:$0xff]
        %v579 = vld [vmem:[%s390 + $0x390] sm:$0xff]
        %v580 = vld [vmem:[%s390 + $0x398] sm:$0xff]
        %v581 = vld [vmem:[%s390 + $0x3a0] sm:$0xff]
        %v582 = vld [vmem:[%s390 + $0x3a8] sm:$0xff]
        %v583 = vld [vmem:[%s390 + $0x3b0] sm:$0xff]
        %v584 = vld [vmem:[%s390 + $0x3b8] sm:$0xff]
        %v585 = vld [vmem:[%s390 + $0x3c0] sm:$0xff]
        %v586 = vld [vmem:[%s390 + $0x3c8] sm:$0xff]
        %v587 = vld [vmem:[%s390 + $0x3d0] sm:$0xff]
        %v588 = vld [vmem:[%s390 + $0x3d8] sm:$0xff]
        %v589 = vld [vmem:[%s390 + $0x3e0] sm:$0xff]
        %v590 = vld [vmem:[%s390 + $0x3e8] sm:$0xff]
        %v591 = vld [vmem:[%s390 + $0x3f0] sm:$0xff]
        %v592 = vld [vmem:[%s390 + $0x3f8] sm:$0xff]
        %v593 = vld [vmem:[%s390 + $0x400] sm:$0xff]
        %v594 = vld [vmem:[%s390 + $0x408] sm:$0xff]
        %v595 = vld [vmem:[%s390 + $0x410] sm:$0xff]
        %v596 = vld [vmem:[%s390 + $0x418] sm:$0xff]
        %v597 = vld [vmem:[%s390 + $0x420] sm:$0xff]
        %v598 = vpack.c.bf16 %v472, %v465
        %v599 = vpack.c.bf16 %v473, %v466
        %v600 = vpack.c.bf16 %v474, %v467
        %v601 = vpack.c.bf16 %v475, %v468
        %v602 = vpack.c.bf16 %v476, %v469
        %v603 = vpack.c.bf16 %v477, %v470
        %v604 = vpack.c.bf16 %v478, %v471
        %v605 = vpack.c.bf16 %v486, %v479
        %v606 = vpack.c.bf16 %v487, %v480
        %v607 = vpack.c.bf16 %v488, %v481
        %v608 = vpack.c.bf16 %v489, %v482
        %v609 = vpack.c.bf16 %v490, %v483
        %v610 = vpack.c.bf16 %v491, %v484
        %v611 = vpack.c.bf16 %v492, %v485
        %v612 = vpack.c.bf16 %v500, %v493
        %v613 = vpack.c.bf16 %v501, %v494
        %v614 = vpack.c.bf16 %v502, %v495
        %v615 = vpack.c.bf16 %v503, %v496
        %v616 = vpack.c.bf16 %v504, %v497
        %v617 = vpack.c.bf16 %v505, %v498
        %v618 = vpack.c.bf16 %v506, %v499
        %v619 = vpack.c.bf16 %v514, %v507
        %v620 = vpack.c.bf16 %v515, %v508
        %v621 = vpack.c.bf16 %v516, %v509
        %v622 = vpack.c.bf16 %v517, %v510
        %v623 = vpack.c.bf16 %v518, %v511
        %v624 = vpack.c.bf16 %v519, %v512
        %v625 = vpack.c.bf16 %v520, %v513
        %v626 = vpack.c.bf16 %v528, %v521
        %v627 = vpack.c.bf16 %v529, %v522
        %v628 = vpack.c.bf16 %v530, %v523
        %v629 = vpack.c.bf16 %v531, %v524
        %v630 = vpack.c.bf16 %v532, %v525
        %v631 = vpack.c.bf16 %v533, %v526
        %v632 = vpack.c.bf16 %v534, %v527
        %v633 = vpack.c.bf16 %v542, %v535
        %v634 = vpack.c.bf16 %v543, %v536
        %v635 = vpack.c.bf16 %v544, %v537
        %v636 = vpack.c.bf16 %v545, %v538
        %v637 = vpack.c.bf16 %v546, %v539
        %v638 = vpack.c.bf16 %v547, %v540
        %v639 = vpack.c.bf16 %v548, %v541
        %v640 = vpack.c.bf16 %v556, %v549
        %v641 = vpack.c.bf16 %v557, %v550
        %v642 = vpack.c.bf16 %v558, %v551
        %v643 = vpack.c.bf16 %v559, %v552
        %v644 = vpack.c.bf16 %v560, %v553
        %v645 = vpack.c.bf16 %v561, %v554
        %v646 = vpack.c.bf16 %v562, %v555
        %v647 = vpack.c.bf16 %v570, %v563
        %v648 = vpack.c.bf16 %v571, %v564
        %v649 = vpack.c.bf16 %v572, %v565
        %v650 = vpack.c.bf16 %v573, %v566
        %v651 = vpack.c.bf16 %v574, %v567
        %v652 = vpack.c.bf16 %v575, %v568
        %v653 = vpack.c.bf16 %v576, %v569
        %v654 = vpack.c.bf16 %v584, %v577
        %v655 = vpack.c.bf16 %v585, %v578
        %v656 = vpack.c.bf16 %v586, %v579
        %v657 = vpack.c.bf16 %v587, %v580
        %v658 = vpack.c.bf16 %v588, %v581
        %v659 = vpack.c.bf16 %v589, %v582
        %v660 = vpack.c.bf16 %v590, %v583
        %v661 = vpack.c.bf16 %v591, %v591
        %v662 = vpack.c.bf16 %v592, %v592
        %v663 = vpack.c.bf16 %v593, %v593
        %v664 = vpack.c.bf16 %v594, %v594
        %v665 = vpack.c.bf16 %v595, %v595
        %v666 = vpack.c.bf16 %v596, %v596
        %v667 = vpack.c.bf16 %v597, %v597
        %v668 = vld [vmem:[#allocation4] sm:$0xff]
        %v669 = vld [vmem:[#allocation4 + $0x8] sm:$0xff]
        %v670 = vld [vmem:[#allocation4 + $0x10] sm:$0xff]
        %v671 = vld [vmem:[#allocation4 + $0x18] sm:$0xff]
        %v672 = vld [vmem:[#allocation4 + $0x20] sm:$0xff]
        %v673 = vld [vmem:[#allocation4 + $0x28] sm:$0xff]
        %v674 = vld [vmem:[#allocation4 + $0x30] sm:$0xff]
        %v675 = vld [vmem:[#allocation4 + $0x38] sm:$0xff]
        %v676 = vld [vmem:[#allocation4 + $0x40] sm:$0xff]
        %v677 = vld [vmem:[#allocation4 + $0x48] sm:$0xff]
        %v678 = vld [vmem:[#allocation4 + $0x50] sm:$0xff]
        %v679 = vld [vmem:[#allocation4 + $0x58] sm:$0xff]
        %v680 = vld [vmem:[#allocation4 + $0x60] sm:$0xff]
        %v681 = vld [vmem:[#allocation4 + $0x68] sm:$0xff]
        %v682 = vld [vmem:[#allocation4 + $0x70] sm:$0xff]
        %v683 = vld [vmem:[#allocation4 + $0x78] sm:$0xff]
        %v684 = vld [vmem:[#allocation4 + $0x80] sm:$0xff]
        %v685 = vld [vmem:[#allocation4 + $0x88] sm:$0xff]
        %v686 = vld [vmem:[#allocation4 + $0x90] sm:$0xff]
        %v687 = vld [vmem:[#allocation4 + $0x98] sm:$0xff]
        %v688 = vld [vmem:[#allocation4 + $0xa0] sm:$0xff]
        %v689 = vld [vmem:[#allocation4 + $0xa8] sm:$0xff]
        %v690 = vld [vmem:[#allocation4 + $0xb0] sm:$0xff]
        %v691 = vld [vmem:[#allocation4 + $0xb8] sm:$0xff]
        %v692 = vld [vmem:[#allocation4 + $0xc0] sm:$0xff]
        %v693 = vld [vmem:[#allocation4 + $0xc8] sm:$0xff]
        %v694 = vld [vmem:[#allocation4 + $0xd0] sm:$0xff]
        %v695 = vld [vmem:[#allocation4 + $0xd8] sm:$0xff]
        %v696 = vld [vmem:[#allocation4 + $0xe0] sm:$0xff]
        %v697 = vld [vmem:[#allocation4 + $0xe8] sm:$0xff]
        %v698 = vld [vmem:[#allocation4 + $0xf0] sm:$0xff]
        %v699 = vld [vmem:[#allocation4 + $0xf8] sm:$0xff]
        %v700 = vld [vmem:[#allocation4 + $0x100] sm:$0xff]
        %v701 = vld [vmem:[#allocation4 + $0x108] sm:$0xff]
        %v702 = vld [vmem:[#allocation4 + $0x110] sm:$0xff]
        %v703 = vld [vmem:[#allocation4 + $0x118] sm:$0xff]
        %v704 = vld [vmem:[#allocation4 + $0x120] sm:$0xff]
        %v705 = vld [vmem:[#allocation4 + $0x128] sm:$0xff]
        %v706 = vld [vmem:[#allocation4 + $0x130] sm:$0xff]
        %v707 = vld [vmem:[#allocation4 + $0x138] sm:$0xff]
        %v708 = vld [vmem:[#allocation4 + $0x140] sm:$0xff]
        %v709 = vld [vmem:[#allocation4 + $0x148] sm:$0xff]
        %v710 = vld [vmem:[#allocation4 + $0x150] sm:$0xff]
        %v711 = vld [vmem:[#allocation4 + $0x158] sm:$0xff]
        %v712 = vld [vmem:[#allocation4 + $0x160] sm:$0xff]
        %v713 = vld [vmem:[#allocation4 + $0x168] sm:$0xff]
        %v714 = vld [vmem:[#allocation4 + $0x170] sm:$0xff]
        %v715 = vld [vmem:[#allocation4 + $0x178] sm:$0xff]
        %v716 = vld [vmem:[#allocation4 + $0x180] sm:$0xff]
        %v717 = vld [vmem:[#allocation4 + $0x188] sm:$0xff]
        %v718 = vld [vmem:[#allocation4 + $0x190] sm:$0xff]
        %v719 = vld [vmem:[#allocation4 + $0x198] sm:$0xff]
        %v720 = vld [vmem:[#allocation4 + $0x1a0] sm:$0xff]
        %v721 = vld [vmem:[#allocation4 + $0x1a8] sm:$0xff]
        %v722 = vld [vmem:[#allocation4 + $0x1b0] sm:$0xff]
        %v723 = vld [vmem:[#allocation4 + $0x1b8] sm:$0xff]
        %v724 = vld [vmem:[#allocation4 + $0x1c0] sm:$0xff]
        %v725 = vld [vmem:[#allocation4 + $0x1c8] sm:$0xff]
        %v726 = vld [vmem:[#allocation4 + $0x1d0] sm:$0xff]
        %v727 = vld [vmem:[#allocation4 + $0x1d8] sm:$0xff]
        %v728 = vld [vmem:[#allocation4 + $0x1e0] sm:$0xff]
        %v729 = vld [vmem:[#allocation4 + $0x1e8] sm:$0xff]
        %v730 = vld [vmem:[#allocation4 + $0x1f0] sm:$0xff]
        %v731 = vld [vmem:[#allocation4 + $0x1f8] sm:$0xff]
        %v732 = vld [vmem:[#allocation4 + $0x200] sm:$0xff]
        %v733 = vld [vmem:[#allocation4 + $0x208] sm:$0xff]
        %v734 = vld [vmem:[#allocation4 + $0x210] sm:$0xff]
        %v735 = vld [vmem:[#allocation4 + $0x218] sm:$0xff]
        %v736 = vld [vmem:[#allocation4 + $0x220] sm:$0xff]
        %v737 = vld [vmem:[#allocation4 + $0x228] sm:$0xff]
        %v738 = vld [vmem:[#allocation4 + $0x230] sm:$0xff]
        %v739 = vld [vmem:[#allocation4 + $0x238] sm:$0xff]
        %v740 = vld [vmem:[#allocation4 + $0x240] sm:$0xff]
        %v741 = vld [vmem:[#allocation4 + $0x248] sm:$0xff]
        %v742 = vld [vmem:[#allocation4 + $0x250] sm:$0xff]
        %v743 = vld [vmem:[#allocation4 + $0x258] sm:$0xff]
        %v744 = vld [vmem:[#allocation4 + $0x260] sm:$0xff]
        %v745 = vld [vmem:[#allocation4 + $0x268] sm:$0xff]
        %v746 = vld [vmem:[#allocation4 + $0x270] sm:$0xff]
        %v747 = vld [vmem:[#allocation4 + $0x278] sm:$0xff]
        %v748 = vld [vmem:[#allocation4 + $0x280] sm:$0xff]
        %v749 = vld [vmem:[#allocation4 + $0x288] sm:$0xff]
        %v750 = vld [vmem:[#allocation4 + $0x290] sm:$0xff]
        %v751 = vld [vmem:[#allocation4 + $0x298] sm:$0xff]
        %v752 = vld [vmem:[#allocation4 + $0x2a0] sm:$0xff]
        %v753 = vld [vmem:[#allocation4 + $0x2a8] sm:$0xff]
        %v754 = vld [vmem:[#allocation4 + $0x2b0] sm:$0xff]
        %v755 = vld [vmem:[#allocation4 + $0x2b8] sm:$0xff]
        %v756 = vld [vmem:[#allocation4 + $0x2c0] sm:$0xff]
        %v757 = vld [vmem:[#allocation4 + $0x2c8] sm:$0xff]
        %v758 = vld [vmem:[#allocation4 + $0x2d0] sm:$0xff]
        %v759 = vld [vmem:[#allocation4 + $0x2d8] sm:$0xff]
        %v760 = vld [vmem:[#allocation4 + $0x2e0] sm:$0xff]
        %v761 = vld [vmem:[#allocation4 + $0x2e8] sm:$0xff]
        %v762 = vld [vmem:[#allocation4 + $0x2f0] sm:$0xff]
        %v763 = vld [vmem:[#allocation4 + $0x2f8] sm:$0xff]
        %v764 = vld [vmem:[#allocation4 + $0x300] sm:$0xff]
        %v765 = vld [vmem:[#allocation4 + $0x308] sm:$0xff]
        %v766 = vld [vmem:[#allocation4 + $0x310] sm:$0xff]
        %v767 = vld [vmem:[#allocation4 + $0x318] sm:$0xff]
        %v768 = vld [vmem:[#allocation4 + $0x320] sm:$0xff]
        %v769 = vld [vmem:[#allocation4 + $0x328] sm:$0xff]
        %v770 = vld [vmem:[#allocation4 + $0x330] sm:$0xff]
        %v771 = vld [vmem:[#allocation4 + $0x338] sm:$0xff]
        %v772 = vld [vmem:[#allocation4 + $0x340] sm:$0xff]
        %v773 = vld [vmem:[#allocation4 + $0x348] sm:$0xff]
        %v774 = vld [vmem:[#allocation4 + $0x350] sm:$0xff]
        %v775 = vld [vmem:[#allocation4 + $0x358] sm:$0xff]
        %v776 = vld [vmem:[#allocation4 + $0x360] sm:$0xff]
        %v777 = vld [vmem:[#allocation4 + $0x368] sm:$0xff]
        %v778 = vld [vmem:[#allocation4 + $0x370] sm:$0xff]
        %v779 = vld [vmem:[#allocation4 + $0x378] sm:$0xff]
        %v780 = vld [vmem:[#allocation4 + $0x380] sm:$0xff]
        %v781 = vld [vmem:[#allocation4 + $0x388] sm:$0xff]
        %v782 = vld [vmem:[#allocation4 + $0x390] sm:$0xff]
        %v783 = vld [vmem:[#allocation4 + $0x398] sm:$0xff]
        %v784 = vld [vmem:[#allocation4 + $0x3a0] sm:$0xff]
        %v785 = vld [vmem:[#allocation4 + $0x3a8] sm:$0xff]
        %v786 = vld [vmem:[#allocation4 + $0x3b0] sm:$0xff]
        %v787 = vld [vmem:[#allocation4 + $0x3b8] sm:$0xff]
        %v788 = vld [vmem:[#allocation4 + $0x3c0] sm:$0xff]
        %v789 = vld [vmem:[#allocation4 + $0x3c8] sm:$0xff]
        %v790 = vld [vmem:[#allocation4 + $0x3d0] sm:$0xff]
        %v791 = vld [vmem:[#allocation4 + $0x3d8] sm:$0xff]
        %v792 = vld [vmem:[#allocation4 + $0x3e0] sm:$0xff]
        %v793 = vld [vmem:[#allocation4 + $0x3e8] sm:$0xff]
        %v794 = vld [vmem:[#allocation4 + $0x3f0] sm:$0xff]
        %v795 = vld [vmem:[#allocation4 + $0x3f8] sm:$0xff]
        %v796 = vld [vmem:[#allocation4 + $0x400] sm:$0xff]
        %v797 = vld [vmem:[#allocation4 + $0x408] sm:$0xff]
        %v798 = vld [vmem:[#allocation4 + $0x410] sm:$0xff]
        %v799 = vld [vmem:[#allocation4 + $0x418] sm:$0xff]
        %v800 = vld [vmem:[#allocation4 + $0x420] sm:$0xff]
        %v801 = vld [vmem:[#allocation4 + $0x428] sm:$0xff]
        %v802 = vld [vmem:[#allocation4 + $0x430] sm:$0xff]
        %v803 = vld [vmem:[#allocation4 + $0x438] sm:$0xff]
        %v804 = vld [vmem:[#allocation4 + $0x440] sm:$0xff]
        %v805 = vld [vmem:[#allocation4 + $0x448] sm:$0xff]
        %v806 = vld [vmem:[#allocation4 + $0x450] sm:$0xff]
        %v807 = vld [vmem:[#allocation4 + $0x458] sm:$0xff]
        %v808 = vld [vmem:[#allocation4 + $0x460] sm:$0xff]
        %v809 = vld [vmem:[#allocation4 + $0x468] sm:$0xff]
        %v810 = vld [vmem:[#allocation4 + $0x470] sm:$0xff]
        %v811 = vld [vmem:[#allocation4 + $0x478] sm:$0xff]
        %v812 = vld [vmem:[#allocation4 + $0x480] sm:$0xff]
        %v813 = vld [vmem:[#allocation4 + $0x488] sm:$0xff]
        %v814 = vld [vmem:[#allocation4 + $0x490] sm:$0xff]
        %v815 = vld [vmem:[#allocation4 + $0x498] sm:$0xff]
        %v816 = vld [vmem:[#allocation4 + $0x4a0] sm:$0xff]
        %v817 = vld [vmem:[#allocation4 + $0x4a8] sm:$0xff]
        %v818 = vld [vmem:[#allocation4 + $0x4b0] sm:$0xff]
        %v819 = vld [vmem:[#allocation4 + $0x4b8] sm:$0xff]
        %v820 = vld [vmem:[#allocation4 + $0x4c0] sm:$0xff]
        %v821 = vld [vmem:[#allocation4 + $0x4c8] sm:$0xff]
        %v822 = vld [vmem:[#allocation4 + $0x4d0] sm:$0xff]
        %v823 = vld [vmem:[#allocation4 + $0x4d8] sm:$0xff]
        %v824 = vld [vmem:[#allocation4 + $0x4e0] sm:$0xff]
        %v825 = vld [vmem:[#allocation4 + $0x4e8] sm:$0xff]
        %v826 = vld [vmem:[#allocation4 + $0x4f0] sm:$0xff]
        %v827 = vld [vmem:[#allocation4 + $0x4f8] sm:$0xff]
        %v828 = vld [vmem:[#allocation4 + $0x500] sm:$0xff]
        %v829 = vld [vmem:[#allocation4 + $0x508] sm:$0xff]
        %v830 = vld [vmem:[#allocation4 + $0x510] sm:$0xff]
        %v831 = vld [vmem:[#allocation4 + $0x518] sm:$0xff]
        %v832 = vld [vmem:[#allocation4 + $0x520] sm:$0xff]
        %v833 = vld [vmem:[#allocation4 + $0x528] sm:$0xff]
        %v834 = vld [vmem:[#allocation4 + $0x530] sm:$0xff]
        %v835 = vld [vmem:[#allocation4 + $0x538] sm:$0xff]
        %v836 = vld [vmem:[#allocation4 + $0x540] sm:$0xff]
        %v837 = vld [vmem:[#allocation4 + $0x548] sm:$0xff]
        %v838 = vld [vmem:[#allocation4 + $0x550] sm:$0xff]
        %v839 = vld [vmem:[#allocation4 + $0x558] sm:$0xff]
        %v840 = vld [vmem:[#allocation4 + $0x560] sm:$0xff]
        %v841 = vld [vmem:[#allocation4 + $0x568] sm:$0xff]
        %v842 = vld [vmem:[#allocation4 + $0x570] sm:$0xff]
        %v843 = vld [vmem:[#allocation4 + $0x578] sm:$0xff]
        %v844 = vld [vmem:[#allocation4 + $0x580] sm:$0xff]
        %v845 = vld [vmem:[#allocation4 + $0x588] sm:$0xff]
        %v846 = vld [vmem:[#allocation4 + $0x590] sm:$0xff]
        %v847 = vld [vmem:[#allocation4 + $0x598] sm:$0xff]
        %v848 = vld [vmem:[#allocation4 + $0x5a0] sm:$0xff]
        %v849 = vld [vmem:[#allocation4 + $0x5a8] sm:$0xff]
        %v850 = vld [vmem:[#allocation4 + $0x5b0] sm:$0xff]
        %v851 = vld [vmem:[#allocation4 + $0x5b8] sm:$0xff]
        %v852 = vld [vmem:[#allocation4 + $0x5c0] sm:$0xff]
        %v853 = vld [vmem:[#allocation4 + $0x5c8] sm:$0xff]
        %v854 = vld [vmem:[#allocation4 + $0x5d0] sm:$0xff]
        %v855 = vld [vmem:[#allocation4 + $0x5d8] sm:$0xff]
        %v856 = vld [vmem:[#allocation4 + $0x5e0] sm:$0xff]
        %v857 = vld [vmem:[#allocation4 + $0x5e8] sm:$0xff]
        %v858 = vld [vmem:[#allocation4 + $0x5f0] sm:$0xff]
        %v859 = vld [vmem:[#allocation4 + $0x5f8] sm:$0xff]
        %v860 = vld [vmem:[#allocation4 + $0x600] sm:$0xff]
        %v861 = vld [vmem:[#allocation4 + $0x608] sm:$0xff]
        %v862 = vld [vmem:[#allocation4 + $0x610] sm:$0xff]
        %v863 = vld [vmem:[#allocation4 + $0x618] sm:$0xff]
        %v864 = vld [vmem:[#allocation6] sm:$0xf]
        %v866 = vlaneseq
        %v867 = vshrl.u32 %v866, 7
        %v868 = vsub.s32 0, %v867
        %v869 = vrot.slane %v864, %v868
        %v870 = vlaneseq
        %v871 = vshrl.u32 %v870, 7
        %v872 = vsub.s32 1, %v871
        %v873 = vrot.slane %v864, %v872
        %v874 = vlaneseq
        %v875 = vshrl.u32 %v874, 7
        %v876 = vsub.s32 2, %v875
        %v877 = vrot.slane %v864, %v876
        %v878 = vlaneseq
        %v879 = vshrl.u32 %v878, 7
        %v880 = vsub.s32 3, %v879
        %v881 = vrot.slane %v864, %v880
        %v1082 = vunpack.c.l.b16 %v668
        %v1083 = vunpack.c.h.b16 %v668
        %v1084 = vunpack.c.l.b16 %v669
        %v1085 = vunpack.c.h.b16 %v669
        %v1086 = vunpack.c.l.b16 %v670
        %v1087 = vunpack.c.h.b16 %v670
        %v1088 = vunpack.c.l.b16 %v671
        %v1089 = vunpack.c.h.b16 %v671
        %v1090 = vunpack.c.l.b16 %v672
        %v1091 = vunpack.c.h.b16 %v672
        %v1092 = vunpack.c.l.b16 %v673
        %v1093 = vunpack.c.h.b16 %v673
        %v1094 = vunpack.c.l.b16 %v674
        %v1095 = vunpack.c.h.b16 %v674
        %v1096 = vunpack.c.l.b16 %v675
        %v1097 = vunpack.c.h.b16 %v675
        %v1098 = vunpack.c.l.b16 %v676
        %v1099 = vunpack.c.h.b16 %v676
        %v1100 = vunpack.c.l.b16 %v677
        %v1101 = vunpack.c.h.b16 %v677
        %v1102 = vunpack.c.l.b16 %v678
        %v1103 = vunpack.c.h.b16 %v678
        %v1104 = vunpack.c.l.b16 %v679
        %v1105 = vunpack.c.h.b16 %v679
        %v1106 = vunpack.c.l.b16 %v680
        %v1107 = vunpack.c.h.b16 %v680
        %v1108 = vunpack.c.l.b16 %v681
        %v1109 = vunpack.c.h.b16 %v681
        %v1110 = vunpack.c.l.b16 %v682
        %v1111 = vunpack.c.h.b16 %v682
        %v1112 = vunpack.c.l.b16 %v683
        %v1113 = vunpack.c.h.b16 %v683
        %v1114 = vunpack.c.l.b16 %v684
        %v1115 = vunpack.c.h.b16 %v684
        %v1116 = vunpack.c.l.b16 %v685
        %v1117 = vunpack.c.h.b16 %v685
        %v1118 = vunpack.c.l.b16 %v686
        %v1119 = vunpack.c.h.b16 %v686
        %v1120 = vunpack.c.l.b16 %v687
        %v1121 = vunpack.c.h.b16 %v687
        %v1122 = vunpack.c.l.b16 %v688
        %v1123 = vunpack.c.h.b16 %v688
        %v1124 = vunpack.c.l.b16 %v689
        %v1125 = vunpack.c.h.b16 %v689
        %v1126 = vunpack.c.l.b16 %v690
        %v1127 = vunpack.c.h.b16 %v690
        %v1128 = vunpack.c.l.b16 %v691
        %v1129 = vunpack.c.h.b16 %v691
        %v1130 = vunpack.c.l.b16 %v692
        %v1131 = vunpack.c.h.b16 %v692
        %v1132 = vunpack.c.l.b16 %v693
        %v1133 = vunpack.c.h.b16 %v693
        %v1134 = vunpack.c.l.b16 %v694
        %v1135 = vunpack.c.h.b16 %v694
        %v1136 = vunpack.c.l.b16 %v695
        %v1137 = vunpack.c.h.b16 %v695
        %v1138 = vunpack.c.l.b16 %v696
        %v1139 = vunpack.c.h.b16 %v696
        %v1140 = vunpack.c.l.b16 %v697
        %v1141 = vunpack.c.h.b16 %v697
        %v1142 = vunpack.c.l.b16 %v698
        %v1143 = vunpack.c.h.b16 %v698
        %v1144 = vunpack.c.l.b16 %v699
        %v1145 = vunpack.c.h.b16 %v699
        %v1146 = vunpack.c.l.b16 %v700
        %v1147 = vunpack.c.h.b16 %v700
        %v1148 = vunpack.c.l.b16 %v701
        %v1149 = vunpack.c.h.b16 %v701
        %v1150 = vunpack.c.l.b16 %v702
        %v1151 = vunpack.c.h.b16 %v702
        %v1152 = vunpack.c.l.b16 %v703
        %v1153 = vunpack.c.h.b16 %v703
        %v1154 = vunpack.c.l.b16 %v704
        %v1155 = vunpack.c.h.b16 %v704
        %v1156 = vunpack.c.l.b16 %v705
        %v1157 = vunpack.c.h.b16 %v705
        %v1158 = vunpack.c.l.b16 %v706
        %v1159 = vunpack.c.h.b16 %v706
        %v1160 = vunpack.c.l.b16 %v707
        %v1161 = vunpack.c.h.b16 %v707
        %v1162 = vunpack.c.l.b16 %v708
        %v1163 = vunpack.c.h.b16 %v708
        %v1164 = vunpack.c.l.b16 %v709
        %v1165 = vunpack.c.h.b16 %v709
        %v1166 = vunpack.c.l.b16 %v710
        %v1167 = vunpack.c.h.b16 %v710
        %v1168 = vunpack.c.l.b16 %v711
        %v1169 = vunpack.c.h.b16 %v711
        %v1170 = vunpack.c.l.b16 %v712
        %v1171 = vunpack.c.h.b16 %v712
        %v1172 = vunpack.c.l.b16 %v713
        %v1173 = vunpack.c.h.b16 %v713
        %v1174 = vunpack.c.l.b16 %v714
        %v1175 = vunpack.c.h.b16 %v714
        %v1176 = vunpack.c.l.b16 %v715
        %v1177 = vunpack.c.h.b16 %v715
        %v1178 = vunpack.c.l.b16 %v716
        %v1179 = vunpack.c.h.b16 %v716
        %v1180 = vunpack.c.l.b16 %v717
        %v1181 = vunpack.c.h.b16 %v717
        %v1182 = vunpack.c.l.b16 %v718
        %v1183 = vunpack.c.h.b16 %v718
        %v1184 = vunpack.c.l.b16 %v719
        %v1185 = vunpack.c.h.b16 %v719
        %v1186 = vunpack.c.l.b16 %v720
        %v1187 = vunpack.c.h.b16 %v720
        %v1188 = vunpack.c.l.b16 %v721
        %v1189 = vunpack.c.h.b16 %v721
        %v1190 = vunpack.c.l.b16 %v722
        %v1191 = vunpack.c.h.b16 %v722
        %v1192 = vunpack.c.l.b16 %v723
        %v1193 = vunpack.c.h.b16 %v723
        %v1194 = vunpack.c.l.b16 %v724
        %v1195 = vunpack.c.h.b16 %v724
        %v1196 = vunpack.c.l.b16 %v725
        %v1197 = vunpack.c.h.b16 %v725
        %v1198 = vunpack.c.l.b16 %v726
        %v1199 = vunpack.c.h.b16 %v726
        %v1200 = vunpack.c.l.b16 %v727
        %v1201 = vunpack.c.h.b16 %v727
        %v1202 = vunpack.c.l.b16 %v728
        %v1203 = vunpack.c.h.b16 %v728
        %v1204 = vunpack.c.l.b16 %v729
        %v1205 = vunpack.c.h.b16 %v729
        %v1206 = vunpack.c.l.b16 %v730
        %v1207 = vunpack.c.h.b16 %v730
        %v1208 = vunpack.c.l.b16 %v731
        %v1209 = vunpack.c.h.b16 %v731
        %v1210 = vunpack.c.l.b16 %v732
        %v1211 = vunpack.c.h.b16 %v732
        %v1212 = vunpack.c.l.b16 %v733
        %v1213 = vunpack.c.h.b16 %v733
        %v1214 = vunpack.c.l.b16 %v734
        %v1215 = vunpack.c.h.b16 %v734
        %v1216 = vunpack.c.l.b16 %v735
        %v1217 = vunpack.c.h.b16 %v735
        %v1218 = vunpack.c.l.b16 %v736
        %v1219 = vunpack.c.h.b16 %v736
        %v1220 = vunpack.c.l.b16 %v737
        %v1221 = vunpack.c.h.b16 %v737
        %v1222 = vunpack.c.l.b16 %v738
        %v1223 = vunpack.c.h.b16 %v738
        %v1224 = vunpack.c.l.b16 %v739
        %v1225 = vunpack.c.h.b16 %v739
        %v1226 = vunpack.c.l.b16 %v740
        %v1227 = vunpack.c.h.b16 %v740
        %v1228 = vunpack.c.l.b16 %v741
        %v1229 = vunpack.c.h.b16 %v741
        %v1230 = vunpack.c.l.b16 %v742
        %v1231 = vunpack.c.h.b16 %v742
        %v1232 = vunpack.c.l.b16 %v743
        %v1233 = vunpack.c.h.b16 %v743
        %v1234 = vunpack.c.l.b16 %v744
        %v1235 = vunpack.c.h.b16 %v744
        %v1236 = vunpack.c.l.b16 %v745
        %v1237 = vunpack.c.h.b16 %v745
        %v1238 = vunpack.c.l.b16 %v746
        %v1239 = vunpack.c.h.b16 %v746
        %v1240 = vunpack.c.l.b16 %v747
        %v1241 = vunpack.c.h.b16 %v747
        %v1242 = vunpack.c.l.b16 %v748
        %v1243 = vunpack.c.h.b16 %v748
        %v1244 = vunpack.c.l.b16 %v749
        %v1245 = vunpack.c.h.b16 %v749
        %v1246 = vunpack.c.l.b16 %v750
        %v1247 = vunpack.c.h.b16 %v750
        %v1248 = vunpack.c.l.b16 %v751
        %v1249 = vunpack.c.h.b16 %v751
        %v1250 = vunpack.c.l.b16 %v752
        %v1251 = vunpack.c.h.b16 %v752
        %v1252 = vunpack.c.l.b16 %v753
        %v1253 = vunpack.c.h.b16 %v753
        %v1254 = vunpack.c.l.b16 %v754
        %v1255 = vunpack.c.h.b16 %v754
        %v1256 = vunpack.c.l.b16 %v755
        %v1257 = vunpack.c.h.b16 %v755
        %v1258 = vunpack.c.l.b16 %v756
        %v1259 = vunpack.c.h.b16 %v756
        %v1260 = vunpack.c.l.b16 %v757
        %v1261 = vunpack.c.h.b16 %v757
        %v1262 = vunpack.c.l.b16 %v758
        %v1263 = vunpack.c.h.b16 %v758
        %v1264 = vunpack.c.l.b16 %v759
        %v1265 = vunpack.c.h.b16 %v759
        %v1266 = vunpack.c.l.b16 %v760
        %v1267 = vunpack.c.h.b16 %v760
        %v1268 = vunpack.c.l.b16 %v761
        %v1269 = vunpack.c.h.b16 %v761
        %v1270 = vunpack.c.l.b16 %v762
        %v1271 = vunpack.c.h.b16 %v762
        %v1272 = vunpack.c.l.b16 %v763
        %v1273 = vunpack.c.h.b16 %v763
        %v1274 = vunpack.c.l.b16 %v764
        %v1275 = vunpack.c.h.b16 %v764
        %v1276 = vunpack.c.l.b16 %v765
        %v1277 = vunpack.c.h.b16 %v765
        %v1278 = vunpack.c.l.b16 %v766
        %v1279 = vunpack.c.h.b16 %v766
        %v1280 = vunpack.c.l.b16 %v767
        %v1281 = vunpack.c.h.b16 %v767
        %v1282 = vunpack.c.l.b16 %v768
        %v1283 = vunpack.c.h.b16 %v768
        %v1284 = vunpack.c.l.b16 %v769
        %v1285 = vunpack.c.h.b16 %v769
        %v1286 = vunpack.c.l.b16 %v770
        %v1287 = vunpack.c.h.b16 %v770
        %v1288 = vunpack.c.l.b16 %v771
        %v1289 = vunpack.c.h.b16 %v771
        %v1290 = vunpack.c.l.b16 %v772
        %v1291 = vunpack.c.h.b16 %v772
        %v1292 = vunpack.c.l.b16 %v773
        %v1293 = vunpack.c.h.b16 %v773
        %v1294 = vunpack.c.l.b16 %v774
        %v1295 = vunpack.c.h.b16 %v774
        %v1296 = vunpack.c.l.b16 %v775
        %v1297 = vunpack.c.h.b16 %v775
        %v1298 = vunpack.c.l.b16 %v776
        %v1299 = vunpack.c.h.b16 %v776
        %v1300 = vunpack.c.l.b16 %v777
        %v1301 = vunpack.c.h.b16 %v777
        %v1302 = vunpack.c.l.b16 %v778
        %v1303 = vunpack.c.h.b16 %v778
        %v1304 = vunpack.c.l.b16 %v779
        %v1305 = vunpack.c.h.b16 %v779
        %v1306 = vunpack.c.l.b16 %v780
        %v1307 = vunpack.c.h.b16 %v780
        %v1308 = vunpack.c.l.b16 %v781
        %v1309 = vunpack.c.h.b16 %v781
        %v1310 = vunpack.c.l.b16 %v782
        %v1311 = vunpack.c.h.b16 %v782
        %v1312 = vunpack.c.l.b16 %v783
        %v1313 = vunpack.c.h.b16 %v783
        %v1314 = vunpack.c.l.b16 %v784
        %v1315 = vunpack.c.h.b16 %v784
        %v1316 = vunpack.c.l.b16 %v785
        %v1317 = vunpack.c.h.b16 %v785
        %v1318 = vunpack.c.l.b16 %v786
        %v1319 = vunpack.c.h.b16 %v786
        %v1320 = vunpack.c.l.b16 %v787
        %v1321 = vunpack.c.h.b16 %v787
        %v1322 = vunpack.c.l.b16 %v788
        %v1323 = vunpack.c.h.b16 %v788
        %v1324 = vunpack.c.l.b16 %v789
        %v1325 = vunpack.c.h.b16 %v789
        %v1326 = vunpack.c.l.b16 %v790
        %v1327 = vunpack.c.h.b16 %v790
        %v1328 = vunpack.c.l.b16 %v791
        %v1329 = vunpack.c.h.b16 %v791
        %v1330 = vunpack.c.l.b16 %v792
        %v1331 = vunpack.c.h.b16 %v792
        %v1332 = vunpack.c.l.b16 %v793
        %v1333 = vunpack.c.h.b16 %v793
        %v1334 = vunpack.c.l.b16 %v794
        %v1335 = vunpack.c.h.b16 %v794
        %v1336 = vunpack.c.l.b16 %v795
        %v1337 = vunpack.c.h.b16 %v795
        %v1338 = vunpack.c.l.b16 %v796
        %v1339 = vunpack.c.h.b16 %v796
        %v1340 = vunpack.c.l.b16 %v797
        %v1341 = vunpack.c.h.b16 %v797
        %v1342 = vunpack.c.l.b16 %v798
        %v1343 = vunpack.c.h.b16 %v798
        %v1344 = vunpack.c.l.b16 %v799
        %v1345 = vunpack.c.h.b16 %v799
        %v1346 = vunpack.c.l.b16 %v800
        %v1347 = vunpack.c.h.b16 %v800
        %v1348 = vunpack.c.l.b16 %v801
        %v1349 = vunpack.c.h.b16 %v801
        %v1350 = vunpack.c.l.b16 %v802
        %v1351 = vunpack.c.h.b16 %v802
        %v1352 = vunpack.c.l.b16 %v803
        %v1353 = vunpack.c.h.b16 %v803
        %v1354 = vunpack.c.l.b16 %v804
        %v1355 = vunpack.c.h.b16 %v804
        %v1356 = vunpack.c.l.b16 %v805
        %v1357 = vunpack.c.h.b16 %v805
        %v1358 = vunpack.c.l.b16 %v806
        %v1359 = vunpack.c.h.b16 %v806
        %v1360 = vunpack.c.l.b16 %v807
        %v1361 = vunpack.c.h.b16 %v807
        %v1362 = vunpack.c.l.b16 %v808
        %v1363 = vunpack.c.h.b16 %v808
        %v1364 = vunpack.c.l.b16 %v809
        %v1365 = vunpack.c.h.b16 %v809
        %v1366 = vunpack.c.l.b16 %v810
        %v1367 = vunpack.c.h.b16 %v810
        %v1368 = vunpack.c.l.b16 %v811
        %v1369 = vunpack.c.h.b16 %v811
        %v1370 = vunpack.c.l.b16 %v812
        %v1371 = vunpack.c.h.b16 %v812
        %v1372 = vunpack.c.l.b16 %v813
        %v1373 = vunpack.c.h.b16 %v813
        %v1374 = vunpack.c.l.b16 %v814
        %v1375 = vunpack.c.h.b16 %v814
        %v1376 = vunpack.c.l.b16 %v815
        %v1377 = vunpack.c.h.b16 %v815
        %v1378 = vunpack.c.l.b16 %v816
        %v1379 = vunpack.c.h.b16 %v816
        %v1380 = vunpack.c.l.b16 %v817
        %v1381 = vunpack.c.h.b16 %v817
        %v1382 = vunpack.c.l.b16 %v818
        %v1383 = vunpack.c.h.b16 %v818
        %v1384 = vunpack.c.l.b16 %v819
        %v1385 = vunpack.c.h.b16 %v819
        %v1386 = vunpack.c.l.b16 %v820
        %v1387 = vunpack.c.h.b16 %v820
        %v1388 = vunpack.c.l.b16 %v821
        %v1389 = vunpack.c.h.b16 %v821
        %v1390 = vunpack.c.l.b16 %v822
        %v1391 = vunpack.c.h.b16 %v822
        %v1392 = vunpack.c.l.b16 %v823
        %v1393 = vunpack.c.h.b16 %v823
        %v1394 = vunpack.c.l.b16 %v824
        %v1395 = vunpack.c.h.b16 %v824
        %v1396 = vunpack.c.l.b16 %v825
        %v1397 = vunpack.c.h.b16 %v825
        %v1398 = vunpack.c.l.b16 %v826
        %v1399 = vunpack.c.h.b16 %v826
        %v1400 = vunpack.c.l.b16 %v827
        %v1401 = vunpack.c.h.b16 %v827
        %v1402 = vunpack.c.l.b16 %v828
        %v1403 = vunpack.c.h.b16 %v828
        %v1404 = vunpack.c.l.b16 %v829
        %v1405 = vunpack.c.h.b16 %v829
        %v1406 = vunpack.c.l.b16 %v830
        %v1407 = vunpack.c.h.b16 %v830
        %v1408 = vunpack.c.l.b16 %v831
        %v1409 = vunpack.c.h.b16 %v831
        %v1410 = vunpack.c.l.b16 %v832
        %v1411 = vunpack.c.h.b16 %v832
        %v1412 = vunpack.c.l.b16 %v833
        %v1413 = vunpack.c.h.b16 %v833
        %v1414 = vunpack.c.l.b16 %v834
        %v1415 = vunpack.c.h.b16 %v834
        %v1416 = vunpack.c.l.b16 %v835
        %v1417 = vunpack.c.h.b16 %v835
        %v1418 = vunpack.c.l.b16 %v836
        %v1419 = vunpack.c.h.b16 %v836
        %v1420 = vunpack.c.l.b16 %v837
        %v1421 = vunpack.c.h.b16 %v837
        %v1422 = vunpack.c.l.b16 %v838
        %v1423 = vunpack.c.h.b16 %v838
        %v1424 = vunpack.c.l.b16 %v839
        %v1425 = vunpack.c.h.b16 %v839
        %v1426 = vunpack.c.l.b16 %v840
        %v1427 = vunpack.c.h.b16 %v840
        %v1428 = vunpack.c.l.b16 %v841
        %v1429 = vunpack.c.h.b16 %v841
        %v1430 = vunpack.c.l.b16 %v842
        %v1431 = vunpack.c.h.b16 %v842
        %v1432 = vunpack.c.l.b16 %v843
        %v1433 = vunpack.c.h.b16 %v843
        %v1434 = vunpack.c.l.b16 %v844
        %v1435 = vunpack.c.h.b16 %v844
        %v1436 = vunpack.c.l.b16 %v845
        %v1437 = vunpack.c.h.b16 %v845
        %v1438 = vunpack.c.l.b16 %v846
        %v1439 = vunpack.c.h.b16 %v846
        %v1440 = vunpack.c.l.b16 %v847
        %v1441 = vunpack.c.h.b16 %v847
        %v1442 = vunpack.c.l.b16 %v848
        %v1443 = vunpack.c.h.b16 %v848
        %v1444 = vunpack.c.l.b16 %v849
        %v1445 = vunpack.c.h.b16 %v849
        %v1446 = vunpack.c.l.b16 %v850
        %v1447 = vunpack.c.h.b16 %v850
        %v1448 = vunpack.c.l.b16 %v851
        %v1449 = vunpack.c.h.b16 %v851
        %v1450 = vunpack.c.l.b16 %v852
        %v1451 = vunpack.c.h.b16 %v852
        %v1452 = vunpack.c.l.b16 %v853
        %v1453 = vunpack.c.h.b16 %v853
        %v1454 = vunpack.c.l.b16 %v854
        %v1455 = vunpack.c.h.b16 %v854
        %v1456 = vunpack.c.l.b16 %v855
        %v1457 = vunpack.c.h.b16 %v855
        %v1458 = vunpack.c.l.b16 %v856
        %v1459 = vunpack.c.h.b16 %v856
        %v1460 = vunpack.c.l.b16 %v857
        %v1461 = vunpack.c.h.b16 %v857
        %v1462 = vunpack.c.l.b16 %v858
        %v1463 = vunpack.c.h.b16 %v858
        %v1464 = vunpack.c.l.b16 %v859
        %v1465 = vunpack.c.h.b16 %v859
        %v1466 = vunpack.c.l.b16 %v860
        %v1467 = vunpack.c.h.b16 %v860
        %v1468 = vunpack.c.l.b16 %v861
        %v1469 = vunpack.c.h.b16 %v861
        %v1470 = vunpack.c.l.b16 %v862
        %v1471 = vunpack.c.h.b16 %v862
        %v1472 = vunpack.c.l.b16 %v863
        %v1473 = vunpack.c.h.b16 %v863
        %v1474 = vpack.c.b16 %v1086, %v1082
        %v1475 = vpack.c.b16 %v1087, %v1083
        %v1476 = vpack.c.b16 %v1088, %v1084
        %v1477 = vpack.c.b16 %v1089, %v1085
        %v1478 = vpack.c.b16 %v1094, %v1090
        %v1479 = vpack.c.b16 %v1095, %v1091
        %v1480 = vpack.c.b16 %v1096, %v1092
        %v1481 = vpack.c.b16 %v1097, %v1093
        %v1482 = vpack.c.b16 %v1102, %v1098
        %v1483 = vpack.c.b16 %v1103, %v1099
        %v1484 = vpack.c.b16 %v1104, %v1100
        %v1485 = vpack.c.b16 %v1105, %v1101
        %v1486 = vpack.c.b16 %v1110, %v1106
        %v1487 = vpack.c.b16 %v1111, %v1107
        %v1488 = vpack.c.b16 %v1112, %v1108
        %v1489 = vpack.c.b16 %v1113, %v1109
        %v1490 = vpack.c.b16 %v1118, %v1114
        %v1491 = vpack.c.b16 %v1119, %v1115
        %v1492 = vpack.c.b16 %v1120, %v1116
        %v1493 = vpack.c.b16 %v1121, %v1117
        %v1494 = vpack.c.b16 %v1126, %v1122
        %v1495 = vpack.c.b16 %v1127, %v1123
        %v1496 = vpack.c.b16 %v1128, %v1124
        %v1497 = vpack.c.b16 %v1129, %v1125
        %v1498 = vpack.c.b16 %v1134, %v1130
        %v1499 = vpack.c.b16 %v1135, %v1131
        %v1500 = vpack.c.b16 %v1136, %v1132
        %v1501 = vpack.c.b16 %v1137, %v1133
        %v1502 = vpack.c.b16 %v1142, %v1138
        %v1503 = vpack.c.b16 %v1143, %v1139
        %v1504 = vpack.c.b16 %v1144, %v1140
        %v1505 = vpack.c.b16 %v1145, %v1141
        %v1506 = vpack.c.b16 %v1150, %v1146
        %v1507 = vpack.c.b16 %v1151, %v1147
        %v1508 = vpack.c.b16 %v1152, %v1148
        %v1509 = vpack.c.b16 %v1153, %v1149
        %v1510 = vpack.c.b16 %v1158, %v1154
        %v1511 = vpack.c.b16 %v1159, %v1155
        %v1512 = vpack.c.b16 %v1160, %v1156
        %v1513 = vpack.c.b16 %v1161, %v1157
        %v1514 = vpack.c.b16 %v1166, %v1162
        %v1515 = vpack.c.b16 %v1167, %v1163
        %v1516 = vpack.c.b16 %v1168, %v1164
        %v1517 = vpack.c.b16 %v1169, %v1165
        %v1518 = vpack.c.b16 %v1174, %v1170
        %v1519 = vpack.c.b16 %v1175, %v1171
        %v1520 = vpack.c.b16 %v1176, %v1172
        %v1521 = vpack.c.b16 %v1177, %v1173
        %v1522 = vpack.c.b16 %v1182, %v1178
        %v1523 = vpack.c.b16 %v1183, %v1179
        %v1524 = vpack.c.b16 %v1184, %v1180
        %v1525 = vpack.c.b16 %v1185, %v1181
        %v1526 = vpack.c.b16 %v1190, %v1186
        %v1527 = vpack.c.b16 %v1191, %v1187
        %v1528 = vpack.c.b16 %v1192, %v1188
        %v1529 = vpack.c.b16 %v1193, %v1189
        %v1530 = vpack.c.b16 %v1198, %v1194
        %v1531 = vpack.c.b16 %v1199, %v1195
        %v1532 = vpack.c.b16 %v1200, %v1196
        %v1533 = vpack.c.b16 %v1201, %v1197
        %v1534 = vpack.c.b16 %v1206, %v1202
        %v1535 = vpack.c.b16 %v1207, %v1203
        %v1536 = vpack.c.b16 %v1208, %v1204
        %v1537 = vpack.c.b16 %v1209, %v1205
        %v1538 = vpack.c.b16 %v1214, %v1210
        %v1539 = vpack.c.b16 %v1215, %v1211
        %v1540 = vpack.c.b16 %v1216, %v1212
        %v1541 = vpack.c.b16 %v1217, %v1213
        %v1542 = vpack.c.b16 %v1222, %v1218
        %v1543 = vpack.c.b16 %v1223, %v1219
        %v1544 = vpack.c.b16 %v1224, %v1220
        %v1545 = vpack.c.b16 %v1225, %v1221
        %v1546 = vpack.c.b16 %v1230, %v1226
        %v1547 = vpack.c.b16 %v1231, %v1227
        %v1548 = vpack.c.b16 %v1232, %v1228
        %v1549 = vpack.c.b16 %v1233, %v1229
        %v1550 = vpack.c.b16 %v1238, %v1234
        %v1551 = vpack.c.b16 %v1239, %v1235
        %v1552 = vpack.c.b16 %v1240, %v1236
        %v1553 = vpack.c.b16 %v1241, %v1237
        %v1554 = vpack.c.b16 %v1246, %v1242
        %v1555 = vpack.c.b16 %v1247, %v1243
        %v1556 = vpack.c.b16 %v1248, %v1244
        %v1557 = vpack.c.b16 %v1249, %v1245
        %v1558 = vpack.c.b16 %v1254, %v1250
        %v1559 = vpack.c.b16 %v1255, %v1251
        %v1560 = vpack.c.b16 %v1256, %v1252
        %v1561 = vpack.c.b16 %v1257, %v1253
        %v1562 = vpack.c.b16 %v1262, %v1258
        %v1563 = vpack.c.b16 %v1263, %v1259
        %v1564 = vpack.c.b16 %v1264, %v1260
        %v1565 = vpack.c.b16 %v1265, %v1261
        %v1566 = vpack.c.b16 %v1270, %v1266
        %v1567 = vpack.c.b16 %v1271, %v1267
        %v1568 = vpack.c.b16 %v1272, %v1268
        %v1569 = vpack.c.b16 %v1273, %v1269
        %v1570 = vpack.c.b16 %v1278, %v1274
        %v1571 = vpack.c.b16 %v1279, %v1275
        %v1572 = vpack.c.b16 %v1280, %v1276
        %v1573 = vpack.c.b16 %v1281, %v1277
        %v1574 = vpack.c.b16 %v1286, %v1282
        %v1575 = vpack.c.b16 %v1287, %v1283
        %v1576 = vpack.c.b16 %v1288, %v1284
        %v1577 = vpack.c.b16 %v1289, %v1285
        %v1578 = vpack.c.b16 %v1294, %v1290
        %v1579 = vpack.c.b16 %v1295, %v1291
        %v1580 = vpack.c.b16 %v1296, %v1292
        %v1581 = vpack.c.b16 %v1297, %v1293
        %v1582 = vpack.c.b16 %v1302, %v1298
        %v1583 = vpack.c.b16 %v1303, %v1299
        %v1584 = vpack.c.b16 %v1304, %v1300
        %v1585 = vpack.c.b16 %v1305, %v1301
        %v1586 = vpack.c.b16 %v1310, %v1306
        %v1587 = vpack.c.b16 %v1311, %v1307
        %v1588 = vpack.c.b16 %v1312, %v1308
        %v1589 = vpack.c.b16 %v1313, %v1309
        %v1590 = vpack.c.b16 %v1318, %v1314
        %v1591 = vpack.c.b16 %v1319, %v1315
        %v1592 = vpack.c.b16 %v1320, %v1316
        %v1593 = vpack.c.b16 %v1321, %v1317
        %v1594 = vpack.c.b16 %v1326, %v1322
        %v1595 = vpack.c.b16 %v1327, %v1323
        %v1596 = vpack.c.b16 %v1328, %v1324
        %v1597 = vpack.c.b16 %v1329, %v1325
        %v1598 = vpack.c.b16 %v1334, %v1330
        %v1599 = vpack.c.b16 %v1335, %v1331
        %v1600 = vpack.c.b16 %v1336, %v1332
        %v1601 = vpack.c.b16 %v1337, %v1333
        %v1602 = vpack.c.b16 %v1342, %v1338
        %v1603 = vpack.c.b16 %v1343, %v1339
        %v1604 = vpack.c.b16 %v1344, %v1340
        %v1605 = vpack.c.b16 %v1345, %v1341
        %v1606 = vpack.c.b16 %v1350, %v1346
        %v1607 = vpack.c.b16 %v1351, %v1347
        %v1608 = vpack.c.b16 %v1352, %v1348
        %v1609 = vpack.c.b16 %v1353, %v1349
        %v1610 = vpack.c.b16 %v1358, %v1354
        %v1611 = vpack.c.b16 %v1359, %v1355
        %v1612 = vpack.c.b16 %v1360, %v1356
        %v1613 = vpack.c.b16 %v1361, %v1357
        %v1614 = vpack.c.b16 %v1366, %v1362
        %v1615 = vpack.c.b16 %v1367, %v1363
        %v1616 = vpack.c.b16 %v1368, %v1364
        %v1617 = vpack.c.b16 %v1369, %v1365
        %v1618 = vpack.c.b16 %v1374, %v1370
        %v1619 = vpack.c.b16 %v1375, %v1371
        %v1620 = vpack.c.b16 %v1376, %v1372
        %v1621 = vpack.c.b16 %v1377, %v1373
        %v1622 = vpack.c.b16 %v1382, %v1378
        %v1623 = vpack.c.b16 %v1383, %v1379
        %v1624 = vpack.c.b16 %v1384, %v1380
        %v1625 = vpack.c.b16 %v1385, %v1381
        %v1626 = vpack.c.b16 %v1390, %v1386
        %v1627 = vpack.c.b16 %v1391, %v1387
        %v1628 = vpack.c.b16 %v1392, %v1388
        %v1629 = vpack.c.b16 %v1393, %v1389
        %v1630 = vpack.c.b16 %v1398, %v1394
        %v1631 = vpack.c.b16 %v1399, %v1395
        %v1632 = vpack.c.b16 %v1400, %v1396
        %v1633 = vpack.c.b16 %v1401, %v1397
        %v1634 = vpack.c.b16 %v1406, %v1402
        %v1635 = vpack.c.b16 %v1407, %v1403
        %v1636 = vpack.c.b16 %v1408, %v1404
        %v1637 = vpack.c.b16 %v1409, %v1405
        %v1638 = vpack.c.b16 %v1414, %v1410
        %v1639 = vpack.c.b16 %v1415, %v1411
        %v1640 = vpack.c.b16 %v1416, %v1412
        %v1641 = vpack.c.b16 %v1417, %v1413
        %v1642 = vpack.c.b16 %v1422, %v1418
        %v1643 = vpack.c.b16 %v1423, %v1419
        %v1644 = vpack.c.b16 %v1424, %v1420
        %v1645 = vpack.c.b16 %v1425, %v1421
        %v1646 = vpack.c.b16 %v1430, %v1426
        %v1647 = vpack.c.b16 %v1431, %v1427
        %v1648 = vpack.c.b16 %v1432, %v1428
        %v1649 = vpack.c.b16 %v1433, %v1429
        %v1650 = vpack.c.b16 %v1438, %v1434
        %v1651 = vpack.c.b16 %v1439, %v1435
        %v1652 = vpack.c.b16 %v1440, %v1436
        %v1653 = vpack.c.b16 %v1441, %v1437
        %v1654 = vpack.c.b16 %v1446, %v1442
        %v1655 = vpack.c.b16 %v1447, %v1443
        %v1656 = vpack.c.b16 %v1448, %v1444
        %v1657 = vpack.c.b16 %v1449, %v1445
        %v1658 = vpack.c.b16 %v1454, %v1450
        %v1659 = vpack.c.b16 %v1455, %v1451
        %v1660 = vpack.c.b16 %v1456, %v1452
        %v1661 = vpack.c.b16 %v1457, %v1453
        %v1662 = vpack.c.b16 %v1462, %v1458
        %v1663 = vpack.c.b16 %v1463, %v1459
        %v1664 = vpack.c.b16 %v1464, %v1460
        %v1665 = vpack.c.b16 %v1465, %v1461
        %v1666 = vpack.c.b16 %v1470, %v1466
        %v1667 = vpack.c.b16 %v1471, %v1467
        %v1668 = vpack.c.b16 %v1472, %v1468
        %v1669 = vpack.c.b16 %v1473, %v1469
        %vm1866 = vcmask 130048
        %v1868 = vsel %vm1866, %v604, 0
        %v1871 = vsel %vm1866, %v611, 0
        %v1874 = vsel %vm1866, %v618, 0
        %v1877 = vsel %vm1866, %v625, 0
        %v1880 = vsel %vm1866, %v632, 0
        %v1883 = vsel %vm1866, %v639, 0
        %v1886 = vsel %vm1866, %v646, 0
        %v1889 = vsel %vm1866, %v653, 0
        %v1892 = vsel %vm1866, %v660, 0
        %v1895 = vsel %vm1866, %v667, 0
        %1897 = vmatprep.subr.bf16.mxu0 %v1475
        %1898 = vmatpush1.bf16.msra.mxu0 %v1474
        %1899 = vmatprep.subr.bf16.mxu0 %v1479
        %1900 = vmatpush1.bf16.msra.mxu0 %v1478
        %1901 = vmatprep.subr.bf16.mxu0 %v1483
        %1902 = vmatpush1.bf16.msra.mxu0 %v1482
        %1903 = vmatprep.subr.bf16.mxu0 %v1487
        %1904 = vmatpush1.bf16.msra.mxu0 %v1486
        %1905 = vmatprep.subr.bf16.mxu0 %v1491
        %1906 = vmatpush1.bf16.msra.mxu0 %v1490
        %1907 = vmatprep.subr.bf16.mxu0 %v1495
        %1908 = vmatpush1.bf16.msra.mxu0 %v1494
        %1909 = vmatprep.subr.bf16.mxu0 %v1499
        %1910 = vmatpush1.bf16.msra.mxu0 %v1498
        %1911 = vmatprep.subr.bf16.mxu0 %v1503
        %1912 = vmatpush1.bf16.msra.mxu0 %v1502
        %1913 = vmatprep.subr.bf16.mxu0 %v1507
        %1914 = vmatpush1.bf16.msra.mxu0 %v1506
        %1915 = vmatprep.subr.bf16.mxu0 %v1511
        %1916 = vmatpush1.bf16.msra.mxu0 %v1510
        %1917 = vmatprep.subr.bf16.mxu0 %v1515
        %1918 = vmatpush1.bf16.msra.mxu0 %v1514
        %1919 = vmatprep.subr.bf16.mxu0 %v1519
        %1920 = vmatpush1.bf16.msra.mxu0 %v1518
        %1921 = vmatprep.subr.bf16.mxu0 %v1523
        %1922 = vmatpush1.bf16.msra.mxu0 %v1522
        %1923 = vmatprep.subr.bf16.mxu0 %v1527
        %1924 = vmatpush1.bf16.msra.mxu0 %v1526
        %1925 = vmatprep.subr.bf16.mxu0 %v1531
        %1926 = vmatpush1.bf16.msra.mxu0 %v1530
        %1927 = vmatprep.subr.bf16.mxu0 %v1535
        %1928 = vmatpush1.bf16.msra.mxu0 %v1534
        %1929 = vmatprep.mubr.bf16.mxu0 %v599
        %1930 = vmatmul.mubr.bf16.gmra.mrb[0].mxu0 %v598
        %v1931 = vpop.f32.mrb[0].mxu0
        %v1932 = vadd.f32 %v869, %v1931
        %v1933 = vpop.f32.mrb[0].mxu0
        %v1934 = vadd.f32 %v873, %v1933
        %v1935 = vpop.f32.mrb[0].mxu0
        %v1936 = vadd.f32 %v869, %v1935
        %v1937 = vpop.f32.mrb[0].mxu0
        %v1938 = vadd.f32 %v873, %v1937
        %1939 = vmatprep.mubr.bf16.mxu0 %v606
        %1940 = vmatmul.mubr.bf16.gmra.mrb[0].mxu0 %v605
        %v1941 = vpop.f32.mrb[0].mxu0
        %v1942 = vadd.f32 %v869, %v1941
        %v1943 = vpop.f32.mrb[0].mxu0
        %v1944 = vadd.f32 %v873, %v1943
        %v1945 = vpop.f32.mrb[0].mxu0
        %v1946 = vadd.f32 %v869, %v1945
        %v1947 = vpop.f32.mrb[0].mxu0
        %v1948 = vadd.f32 %v873, %v1947
        %1949 = vmatprep.mubr.bf16.mxu0 %v613
        %1950 = vmatmul.mubr.bf16.gmra.mrb[0].mxu0 %v612
        %v1951 = vpop.f32.mrb[0].mxu0
        %v1952 = vadd.f32 %v869, %v1951
        %v1953 = vpop.f32.mrb[0].mxu0
        %v1954 = vadd.f32 %v873, %v1953
        %v1955 = vpop.f32.mrb[0].mxu0
        %v1956 = vadd.f32 %v869, %v1955
        %v1957 = vpop.f32.mrb[0].mxu0
        %v1958 = vadd.f32 %v873, %v1957
        %1959 = vmatprep.mubr.bf16.mxu0 %v620
        %1960 = vmatmul.mubr.bf16.gmra.mrb[0].mxu0 %v619
        %v1961 = vpop.f32.mrb[0].mxu0
        %v1962 = vadd.f32 %v869, %v1961
        %v1963 = vpop.f32.mrb[0].mxu0
        %v1964 = vadd.f32 %v873, %v1963
        %v1965 = vpop.f32.mrb[0].mxu0
        %v1966 = vadd.f32 %v869, %v1965
        %v1967 = vpop.f32.mrb[0].mxu0
        %v1968 = vadd.f32 %v873, %v1967
        %1969 = vmatprep.mubr.bf16.mxu0 %v627
        %1970 = vmatmul.mubr.bf16.gmra.mrb[0].mxu0 %v626
        %v1971 = vpop.f32.mrb[0].mxu0
        %v1972 = vadd.f32 %v869, %v1971
        %v1973 = vpop.f32.mrb[0].mxu0
        %v1974 = vadd.f32 %v873, %v1973
        %v1975 = vpop.f32.mrb[0].mxu0
        %v1976 = vadd.f32 %v869, %v1975
        %v1977 = vpop.f32.mrb[0].mxu0
        %v1978 = vadd.f32 %v873, %v1977
        %1979 = vmatprep.mubr.bf16.mxu0 %v634
        %1980 = vmatmul.mubr.bf16.gmra.mrb[0].mxu0 %v633
        %v1981 = vpop.f32.mrb[0].mxu0
        %v1982 = vadd.f32 %v869, %v1981
        %v1983 = vpop.f32.mrb[0].mxu0
        %v1984 = vadd.f32 %v873, %v1983
        %v1985 = vpop.f32.mrb[0].mxu0
        %v1986 = vadd.f32 %v869, %v1985
        %v1987 = vpop.f32.mrb[0].mxu0
        %v1988 = vadd.f32 %v873, %v1987
        %1989 = vmatprep.mubr.bf16.mxu0 %v641
        %1990 = vmatmul.mubr.bf16.gmra.mrb[0].mxu0 %v640
        %v1991 = vpop.f32.mrb[0].mxu0
        %v1992 = vadd.f32 %v869, %v1991
        %v1993 = vpop.f32.mrb[0].mxu0
        %v1994 = vadd.f32 %v873, %v1993
        %v1995 = vpop.f32.mrb[0].mxu0
        %v1996 = vadd.f32 %v869, %v1995
        %v1997 = vpop.f32.mrb[0].mxu0
        %v1998 = vadd.f32 %v873, %v1997
        %1999 = vmatprep.mubr.bf16.mxu0 %v648
        %2000 = vmatmul.mubr.bf16.gmra.mrb[0].mxu0 %v647
        %v2001 = vpop.f32.mrb[0].mxu0
        %v2002 = vadd.f32 %v869, %v2001
        %v2003 = vpop.f32.mrb[0].mxu0
        %v2004 = vadd.f32 %v873, %v2003
        %v2005 = vpop.f32.mrb[0].mxu0
        %v2006 = vadd.f32 %v869, %v2005
        %v2007 = vpop.f32.mrb[0].mxu0
        %v2008 = vadd.f32 %v873, %v2007
        %2009 = vmatprep.mubr.bf16.mxu0 %v655
        %2010 = vmatmul.mubr.bf16.gmra.mrb[0].mxu0 %v654
        %v2011 = vpop.f32.mrb[0].mxu0
        %v2012 = vadd.f32 %v869, %v2011
        %v2013 = vpop.f32.mrb[0].mxu0
        %v2014 = vadd.f32 %v873, %v2013
        %v2015 = vpop.f32.mrb[0].mxu0
        %v2016 = vadd.f32 %v869, %v2015
        %v2017 = vpop.f32.mrb[0].mxu0
        %v2018 = vadd.f32 %v873, %v2017
        %2019 = vmatprep.mubr.bf16.mxu0 %v662
        %2020 = vmatmul.mubr.bf16.gmra.mrb[0].mxu0 %v661
        %v2021 = vpop.f32.mrb[0].mxu0
        %v2022 = vadd.f32 %v869, %v2021
        %v2023 = vpop.f32.mrb[0].mxu0
        %v2024 = vadd.f32 %v873, %v2023
        %v2025 = vpop.f32.mrb[0].mxu0
        %v2026 = vpop.f32.mrb[0].mxu0
        %2027 = vdwg.mxu0
        %2028 = vmatprep.subr.bf16.mxu0 %v1539
        %2029 = vmatpush1.bf16.msra.mxu0 %v1538
        %2030 = vmatprep.subr.bf16.mxu0 %v1543
        %2031 = vmatpush1.bf16.msra.mxu0 %v1542
        %2032 = vmatprep.subr.bf16.mxu0 %v1547
        %2033 = vmatpush1.bf16.msra.mxu0 %v1546
        %2034 = vmatprep.subr.bf16.mxu0 %v1551
        %2035 = vmatpush1.bf16.msra.mxu0 %v1550
        %2036 = vmatprep.subr.bf16.mxu0 %v1555
        %2037 = vmatpush1.bf16.msra.mxu0 %v1554
        %2038 = vmatprep.subr.bf16.mxu0 %v1559
        %2039 = vmatpush1.bf16.msra.mxu0 %v1558
        %2040 = vmatprep.subr.bf16.mxu0 %v1563
        %2041 = vmatpush1.bf16.msra.mxu0 %v1562
        %2042 = vmatprep.subr.bf16.mxu0 %v1567
        %2043 = vmatpush1.bf16.msra.mxu0 %v1566
        %2044 = vmatprep.subr.bf16.mxu0 %v1571
        %2045 = vmatpush1.bf16.msra.mxu0 %v1570
        %2046 = vmatprep.subr.bf16.mxu0 %v1575
        %2047 = vmatpush1.bf16.msra.mxu0 %v1574
        %2048 = vmatprep.subr.bf16.mxu0 %v1579
        %2049 = vmatpush1.bf16.msra.mxu0 %v1578
        %2050 = vmatprep.subr.bf16.mxu0 %v1583
        %2051 = vmatpush1.bf16.msra.mxu0 %v1582
        %2052 = vmatprep.subr.bf16.mxu0 %v1587
        %2053 = vmatpush1.bf16.msra.mxu0 %v1586
        %2054 = vmatprep.subr.bf16.mxu0 %v1591
        %2055 = vmatpush1.bf16.msra.mxu0 %v1590
        %2056 = vmatprep.subr.bf16.mxu0 %v1595
        %2057 = vmatpush1.bf16.msra.mxu0 %v1594
        %2058 = vmatprep.subr.bf16.mxu0 %v1599
        %2059 = vmatpush1.bf16.msra.mxu0 %v1598
        %2060 = vmatprep.mubr.bf16.mxu0 %v601
        %2061 = vmatmul.mubr.bf16.gmra.mrb[0].mxu0 %v600
        %v2062 = vpop.f32.mrb[0].mxu0
        %v2063 = vadd.f32 %v1932, %v2062
        %v2064 = vpop.f32.mrb[0].mxu0
        %v2065 = vadd.f32 %v1934, %v2064
        %v2066 = vpop.f32.mrb[0].mxu0
        %v2067 = vadd.f32 %v1936, %v2066
        %v2068 = vpop.f32.mrb[0].mxu0
        %v2069 = vadd.f32 %v1938, %v2068
        %2070 = vmatprep.mubr.bf16.mxu0 %v608
        %2071 = vmatmul.mubr.bf16.gmra.mrb[0].mxu0 %v607
        %v2072 = vpop.f32.mrb[0].mxu0
        %v2073 = vadd.f32 %v1942, %v2072
        %v2074 = vpop.f32.mrb[0].mxu0
        %v2075 = vadd.f32 %v1944, %v2074
        %v2076 = vpop.f32.mrb[0].mxu0
        %v2077 = vadd.f32 %v1946, %v2076
        %v2078 = vpop.f32.mrb[0].mxu0
        %v2079 = vadd.f32 %v1948, %v2078
        %2080 = vmatprep.mubr.bf16.mxu0 %v615
        %2081 = vmatmul.mubr.bf16.gmra.mrb[0].mxu0 %v614
        %v2082 = vpop.f32.mrb[0].mxu0
        %v2083 = vadd.f32 %v1952, %v2082
        %v2084 = vpop.f32.mrb[0].mxu0
        %v2085 = vadd.f32 %v1954, %v2084
        %v2086 = vpop.f32.mrb[0].mxu0
        %v2087 = vadd.f32 %v1956, %v2086
        %v2088 = vpop.f32.mrb[0].mxu0
        %v2089 = vadd.f32 %v1958, %v2088
        %2090 = vmatprep.mubr.bf16.mxu0 %v622
        %2091 = vmatmul.mubr.bf16.gmra.mrb[0].mxu0 %v621
        %v2092 = vpop.f32.mrb[0].mxu0
        %v2093 = vadd.f32 %v1962, %v2092
        %v2094 = vpop.f32.mrb[0].mxu0
        %v2095 = vadd.f32 %v1964, %v2094
        %v2096 = vpop.f32.mrb[0].mxu0
        %v2097 = vadd.f32 %v1966, %v2096
        %v2098 = vpop.f32.mrb[0].mxu0
        %v2099 = vadd.f32 %v1968, %v2098
        %2100 = vmatprep.mubr.bf16.mxu0 %v629
        %2101 = vmatmul.mubr.bf16.gmra.mrb[0].mxu0 %v628
        %v2102 = vpop.f32.mrb[0].mxu0
        %v2103 = vadd.f32 %v1972, %v2102
        %v2104 = vpop.f32.mrb[0].mxu0
        %v2105 = vadd.f32 %v1974, %v2104
        %v2106 = vpop.f32.mrb[0].mxu0
        %v2107 = vadd.f32 %v1976, %v2106
        %v2108 = vpop.f32.mrb[0].mxu0
        %v2109 = vadd.f32 %v1978, %v2108
        %2110 = vmatprep.mubr.bf16.mxu0 %v636
        %2111 = vmatmul.mubr.bf16.gmra.mrb[0].mxu0 %v635
        %v2112 = vpop.f32.mrb[0].mxu0
        %v2113 = vadd.f32 %v1982, %v2112
        %v2114 = vpop.f32.mrb[0].mxu0
        %v2115 = vadd.f32 %v1984, %v2114
        %v2116 = vpop.f32.mrb[0].mxu0
        %v2117 = vadd.f32 %v1986, %v2116
        %v2118 = vpop.f32.mrb[0].mxu0
        %v2119 = vadd.f32 %v1988, %v2118
        %2120 = vmatprep.mubr.bf16.mxu0 %v643
        %2121 = vmatmul.mubr.bf16.gmra.mrb[0].mxu0 %v642
        %v2122 = vpop.f32.mrb[0].mxu0
        %v2123 = vadd.f32 %v1992, %v2122
        %v2124 = vpop.f32.mrb[0].mxu0
        %v2125 = vadd.f32 %v1994, %v2124
        %v2126 = vpop.f32.mrb[0].mxu0
        %v2127 = vadd.f32 %v1996, %v2126
        %v2128 = vpop.f32.mrb[0].mxu0
        %v2129 = vadd.f32 %v1998, %v2128
        %2130 = vmatprep.mubr.bf16.mxu0 %v650
        %2131 = vmatmul.mubr.bf16.gmra.mrb[0].mxu0 %v649
        %v2132 = vpop.f32.mrb[0].mxu0
        %v2133 = vadd.f32 %v2002, %v2132
        %v2134 = vpop.f32.mrb[0].mxu0
        %v2135 = vadd.f32 %v2004, %v2134
        %v2136 = vpop.f32.mrb[0].mxu0
        %v2137 = vadd.f32 %v2006, %v2136
        %v2138 = vpop.f32.mrb[0].mxu0
        %v2139 = vadd.f32 %v2008, %v2138
        %2140 = vmatprep.mubr.bf16.mxu0 %v657
        %2141 = vmatmul.mubr.bf16.gmra.mrb[0].mxu0 %v656
        %v2142 = vpop.f32.mrb[0].mxu0
        %v2143 = vadd.f32 %v2012, %v2142
        %v2144 = vpop.f32.mrb[0].mxu0
        %v2145 = vadd.f32 %v2014, %v2144
        %v2146 = vpop.f32.mrb[0].mxu0
        %v2147 = vadd.f32 %v2016, %v2146
        %v2148 = vpop.f32.mrb[0].mxu0
        %v2149 = vadd.f32 %v2018, %v2148
        %2150 = vmatprep.mubr.bf16.mxu0 %v664
        %2151 = vmatmul.mubr.bf16.gmra.mrb[0].mxu0 %v663
        %v2152 = vpop.f32.mrb[0].mxu0
        %v2153 = vadd.f32 %v2022, %v2152
        %v2154 = vpop.f32.mrb[0].mxu0
        %v2155 = vadd.f32 %v2024, %v2154
        %v2156 = vpop.f32.mrb[0].mxu0
        %v2157 = vpop.f32.mrb[0].mxu0
        %2158 = vdwg.mxu0
        %2159 = vmatprep.subr.bf16.mxu0 %v1603
        %2160 = vmatpush1.bf16.msra.mxu0 %v1602
        %2161 = vmatprep.subr.bf16.mxu0 %v1607
        %2162 = vmatpush1.bf16.msra.mxu0 %v1606
        %2163 = vmatprep.subr.bf16.mxu0 %v1611
        %2164 = vmatpush1.bf16.msra.mxu0 %v1610
        %2165 = vmatprep.subr.bf16.mxu0 %v1615
        %2166 = vmatpush1.bf16.msra.mxu0 %v1614
        %2167 = vmatprep.subr.bf16.mxu0 %v1619
        %2168 = vmatpush1.bf16.msra.mxu0 %v1618
        %2169 = vmatprep.subr.bf16.mxu0 %v1623
        %2170 = vmatpush1.bf16.msra.mxu0 %v1622
        %2171 = vmatprep.subr.bf16.mxu0 %v1627
        %2172 = vmatpush1.bf16.msra.mxu0 %v1626
        %2173 = vmatprep.subr.bf16.mxu0 %v1631
        %2174 = vmatpush1.bf16.msra.mxu0 %v1630
        %2175 = vmatprep.subr.bf16.mxu0 %v1635
        %2176 = vmatpush1.bf16.msra.mxu0 %v1634
        %2177 = vmatprep.subr.bf16.mxu0 %v1639
        %2178 = vmatpush1.bf16.msra.mxu0 %v1638
        %2179 = vmatprep.subr.bf16.mxu0 %v1643
        %2180 = vmatpush1.bf16.msra.mxu0 %v1642
        %2181 = vmatprep.subr.bf16.mxu0 %v1647
        %2182 = vmatpush1.bf16.msra.mxu0 %v1646
        %2183 = vmatprep.subr.bf16.mxu0 %v1651
        %2184 = vmatpush1.bf16.msra.mxu0 %v1650
        %2185 = vmatprep.subr.bf16.mxu0 %v1655
        %2186 = vmatpush1.bf16.msra.mxu0 %v1654
        %2187 = vmatprep.subr.bf16.mxu0 %v1659
        %2188 = vmatpush1.bf16.msra.mxu0 %v1658
        %2189 = vmatprep.subr.bf16.mxu0 %v1663
        %2190 = vmatpush1.bf16.msra.mxu0 %v1662
        %2191 = vmatprep.mubr.bf16.mxu0 %v603
        %2192 = vmatmul.mubr.bf16.gmra.mrb[0].mxu0 %v602
        %v2193 = vpop.f32.mrb[0].mxu0
        %v2194 = vadd.f32 %v2063, %v2193
        %v2195 = vpop.f32.mrb[0].mxu0
        %v2196 = vadd.f32 %v2065, %v2195
        %v2197 = vpop.f32.mrb[0].mxu0
        %v2198 = vadd.f32 %v2067, %v2197
        %v2199 = vpop.f32.mrb[0].mxu0
        %v2200 = vadd.f32 %v2069, %v2199
        %2201 = vmatprep.mubr.bf16.mxu0 %v610
        %2202 = vmatmul.mubr.bf16.gmra.mrb[0].mxu0 %v609
        %v2203 = vpop.f32.mrb[0].mxu0
        %v2204 = vadd.f32 %v2073, %v2203
        %v2205 = vpop.f32.mrb[0].mxu0
        %v2206 = vadd.f32 %v2075, %v2205
        %v2207 = vpop.f32.mrb[0].mxu0
        %v2208 = vadd.f32 %v2077, %v2207
        %v2209 = vpop.f32.mrb[0].mxu0
        %v2210 = vadd.f32 %v2079, %v2209
        %2211 = vmatprep.mubr.bf16.mxu0 %v617
        %2212 = vmatmul.mubr.bf16.gmra.mrb[0].mxu0 %v616
        %v2213 = vpop.f32.mrb[0].mxu0
        %v2214 = vadd.f32 %v2083, %v2213
        %v2215 = vpop.f32.mrb[0].mxu0
        %v2216 = vadd.f32 %v2085, %v2215
        %v2217 = vpop.f32.mrb[0].mxu0
        %v2218 = vadd.f32 %v2087, %v2217
        %v2219 = vpop.f32.mrb[0].mxu0
        %v2220 = vadd.f32 %v2089, %v2219
        %2221 = vmatprep.mubr.bf16.mxu0 %v624
        %2222 = vmatmul.mubr.bf16.gmra.mrb[0].mxu0 %v623
        %v2223 = vpop.f32.mrb[0].mxu0
        %v2224 = vadd.f32 %v2093, %v2223
        %v2225 = vpop.f32.mrb[0].mxu0
        %v2226 = vadd.f32 %v2095, %v2225
        %v2227 = vpop.f32.mrb[0].mxu0
        %v2228 = vadd.f32 %v2097, %v2227
        %v2229 = vpop.f32.mrb[0].mxu0
        %v2230 = vadd.f32 %v2099, %v2229
        %2231 = vmatprep.mubr.bf16.mxu0 %v631
        %2232 = vmatmul.mubr.bf16.gmra.mrb[0].mxu0 %v630
        %v2233 = vpop.f32.mrb[0].mxu0
        %v2234 = vadd.f32 %v2103, %v2233
        %v2235 = vpop.f32.mrb[0].mxu0
        %v2236 = vadd.f32 %v2105, %v2235
        %v2237 = vpop.f32.mrb[0].mxu0
        %v2238 = vadd.f32 %v2107, %v2237
        %v2239 = vpop.f32.mrb[0].mxu0
        %v2240 = vadd.f32 %v2109, %v2239
        %2241 = vmatprep.mubr.bf16.mxu0 %v638
        %2242 = vmatmul.mubr.bf16.gmra.mrb[0].mxu0 %v637
        %v2243 = vpop.f32.mrb[0].mxu0
        %v2244 = vadd.f32 %v2113, %v2243
        %v2245 = vpop.f32.mrb[0].mxu0
        %v2246 = vadd.f32 %v2115, %v2245
        %v2247 = vpop.f32.mrb[0].mxu0
        %v2248 = vadd.f32 %v2117, %v2247
        %v2249 = vpop.f32.mrb[0].mxu0
        %v2250 = vadd.f32 %v2119, %v2249
        %2251 = vmatprep.mubr.bf16.mxu0 %v645
        %2252 = vmatmul.mubr.bf16.gmra.mrb[0].mxu0 %v644
        %v2253 = vpop.f32.mrb[0].mxu0
        %v2254 = vadd.f32 %v2123, %v2253
        %v2255 = vpop.f32.mrb[0].mxu0
        %v2256 = vadd.f32 %v2125, %v2255
        %v2257 = vpop.f32.mrb[0].mxu0
        %v2258 = vadd.f32 %v2127, %v2257
        %v2259 = vpop.f32.mrb[0].mxu0
        %v2260 = vadd.f32 %v2129, %v2259
        %2261 = vmatprep.mubr.bf16.mxu0 %v652
        %2262 = vmatmul.mubr.bf16.gmra.mrb[0].mxu0 %v651
        %v2263 = vpop.f32.mrb[0].mxu0
        %v2264 = vadd.f32 %v2133, %v2263
        %v2265 = vpop.f32.mrb[0].mxu0
        %v2266 = vadd.f32 %v2135, %v2265
        %v2267 = vpop.f32.mrb[0].mxu0
        %v2268 = vadd.f32 %v2137, %v2267
        %v2269 = vpop.f32.mrb[0].mxu0
        %v2270 = vadd.f32 %v2139, %v2269
        %2271 = vmatprep.mubr.bf16.mxu0 %v659
        %2272 = vmatmul.mubr.bf16.gmra.mrb[0].mxu0 %v658
        %v2273 = vpop.f32.mrb[0].mxu0
        %v2274 = vadd.f32 %v2143, %v2273
        %v2275 = vpop.f32.mrb[0].mxu0
        %v2276 = vadd.f32 %v2145, %v2275
        %v2277 = vpop.f32.mrb[0].mxu0
        %v2278 = vadd.f32 %v2147, %v2277
        %v2279 = vpop.f32.mrb[0].mxu0
        %v2280 = vadd.f32 %v2149, %v2279
        %2281 = vmatprep.mubr.bf16.mxu0 %v666
        %2282 = vmatmul.mubr.bf16.gmra.mrb[0].mxu0 %v665
        %v2283 = vpop.f32.mrb[0].mxu0
        %v2284 = vadd.f32 %v2153, %v2283
        %v2285 = vpop.f32.mrb[0].mxu0
        %v2286 = vadd.f32 %v2155, %v2285
        %v2287 = vpop.f32.mrb[0].mxu0
        %v2288 = vpop.f32.mrb[0].mxu0
        %2289 = vdwg.mxu0
        %2290 = vmatprep.subr.bf16.mxu0 %v1667
        %2291 = vmatpush1.bf16.msra.mxu0 %v1666
        %2292 = vmatprep.subr.bf16.mxu0 0
        %2293 = vmatpush1.bf16.msra.mxu0 0
        %2294 = vmatprep.subr.bf16.mxu0 0
        %2295 = vmatpush1.bf16.msra.mxu0 0
        %2296 = vmatprep.subr.bf16.mxu0 0
        %2297 = vmatpush1.bf16.msra.mxu0 0
        %2298 = vmatprep.subr.bf16.mxu0 0
        %2299 = vmatpush1.bf16.msra.mxu0 0
        %2300 = vmatprep.subr.bf16.mxu0 0
        %2301 = vmatpush1.bf16.msra.mxu0 0
        %2302 = vmatprep.subr.bf16.mxu0 0
        %2303 = vmatpush1.bf16.msra.mxu0 0
        %2304 = vmatprep.subr.bf16.mxu0 0
        %2305 = vmatpush1.bf16.msra.mxu0 0
        %2306 = vmatprep.subr.bf16.mxu0 0
        %2307 = vmatpush1.bf16.msra.mxu0 0
        %2308 = vmatprep.subr.bf16.mxu0 0
        %2309 = vmatpush1.bf16.msra.mxu0 0
        %2310 = vmatprep.subr.bf16.mxu0 0
        %2311 = vmatpush1.bf16.msra.mxu0 0
        %2312 = vmatprep.subr.bf16.mxu0 0
        %2313 = vmatpush1.bf16.msra.mxu0 0
        %2314 = vmatprep.subr.bf16.mxu0 0
        %2315 = vmatpush1.bf16.msra.mxu0 0
        %2316 = vmatprep.subr.bf16.mxu0 0
        %2317 = vmatpush1.bf16.msra.mxu0 0
        %2318 = vmatprep.subr.bf16.mxu0 0
        %2319 = vmatpush1.bf16.msra.mxu0 0
        %2320 = vmatprep.subr.bf16.mxu0 0
        %2321 = vmatpush1.bf16.msra.mxu0 0
        %2322 = vmatprep.mubr.bf16.mxu0 0
        %2323 = vmatmul.mubr.bf16.gmra.mrb[0].mxu0 %v1868
        %v2324 = vpop.f32.mrb[0].mxu0
        %v2325 = vadd.f32 %v2194, %v2324
        %v2326 = vpop.f32.mrb[0].mxu0
        %v2327 = vadd.f32 %v2196, %v2326
        %v2328 = vpop.f32.mrb[0].mxu0
        %v2329 = vadd.f32 %v2198, %v2328
        %v2330 = vpop.f32.mrb[0].mxu0
        %v2331 = vadd.f32 %v2200, %v2330
        %2332 = vmatprep.mubr.bf16.mxu0 0
        %2333 = vmatmul.mubr.bf16.gmra.mrb[0].mxu0 %v1871
        %v2334 = vpop.f32.mrb[0].mxu0
        %v2335 = vadd.f32 %v2204, %v2334
        %v2336 = vpop.f32.mrb[0].mxu0
        %v2337 = vadd.f32 %v2206, %v2336
        %v2338 = vpop.f32.mrb[0].mxu0
        %v2339 = vadd.f32 %v2208, %v2338
        %v2340 = vpop.f32.mrb[0].mxu0
        %v2341 = vadd.f32 %v2210, %v2340
        %2342 = vmatprep.mubr.bf16.mxu0 0
        %2343 = vmatmul.mubr.bf16.gmra.mrb[0].mxu0 %v1874
        %v2344 = vpop.f32.mrb[0].mxu0
        %v2345 = vadd.f32 %v2214, %v2344
        %v2346 = vpop.f32.mrb[0].mxu0
        %v2347 = vadd.f32 %v2216, %v2346
        %v2348 = vpop.f32.mrb[0].mxu0
        %v2349 = vadd.f32 %v2218, %v2348
        %v2350 = vpop.f32.mrb[0].mxu0
        %v2351 = vadd.f32 %v2220, %v2350
        %2352 = vmatprep.mubr.bf16.mxu0 0
        %2353 = vmatmul.mubr.bf16.gmra.mrb[0].mxu0 %v1877
        %v2354 = vpop.f32.mrb[0].mxu0
        %v2355 = vadd.f32 %v2224, %v2354
        %v2356 = vpop.f32.mrb[0].mxu0
        %v2357 = vadd.f32 %v2226, %v2356
        %v2358 = vpop.f32.mrb[0].mxu0
        %v2359 = vadd.f32 %v2228, %v2358
        %v2360 = vpop.f32.mrb[0].mxu0
        %v2361 = vadd.f32 %v2230, %v2360
        %2362 = vmatprep.mubr.bf16.mxu0 0
        %2363 = vmatmul.mubr.bf16.gmra.mrb[0].mxu0 %v1880
        %v2364 = vpop.f32.mrb[0].mxu0
        %v2365 = vadd.f32 %v2234, %v2364
        %v2366 = vpop.f32.mrb[0].mxu0
        %v2367 = vadd.f32 %v2236, %v2366
        %v2368 = vpop.f32.mrb[0].mxu0
        %v2369 = vadd.f32 %v2238, %v2368
        %v2370 = vpop.f32.mrb[0].mxu0
        %v2371 = vadd.f32 %v2240, %v2370
        %2372 = vmatprep.mubr.bf16.mxu0 0
        %2373 = vmatmul.mubr.bf16.gmra.mrb[0].mxu0 %v1883
        %v2374 = vpop.f32.mrb[0].mxu0
        %v2375 = vadd.f32 %v2244, %v2374
        %v2376 = vpop.f32.mrb[0].mxu0
        %v2377 = vadd.f32 %v2246, %v2376
        %v2378 = vpop.f32.mrb[0].mxu0
        %v2379 = vadd.f32 %v2248, %v2378
        %v2380 = vpop.f32.mrb[0].mxu0
        %v2381 = vadd.f32 %v2250, %v2380
        %2382 = vmatprep.mubr.bf16.mxu0 0
        %2383 = vmatmul.mubr.bf16.gmra.mrb[0].mxu0 %v1886
        %v2384 = vpop.f32.mrb[0].mxu0
        %v2385 = vadd.f32 %v2254, %v2384
        %v2386 = vpop.f32.mrb[0].mxu0
        %v2387 = vadd.f32 %v2256, %v2386
        %v2388 = vpop.f32.mrb[0].mxu0
        %v2389 = vadd.f32 %v2258, %v2388
        %v2390 = vpop.f32.mrb[0].mxu0
        %v2391 = vadd.f32 %v2260, %v2390
        %2392 = vmatprep.mubr.bf16.mxu0 0
        %2393 = vmatmul.mubr.bf16.gmra.mrb[0].mxu0 %v1889
        %v2394 = vpop.f32.mrb[0].mxu0
        %v2395 = vadd.f32 %v2264, %v2394
        %v2396 = vpop.f32.mrb[0].mxu0
        %v2397 = vadd.f32 %v2266, %v2396
        %v2398 = vpop.f32.mrb[0].mxu0
        %v2399 = vadd.f32 %v2268, %v2398
        %v2400 = vpop.f32.mrb[0].mxu0
        %v2401 = vadd.f32 %v2270, %v2400
        %2402 = vmatprep.mubr.bf16.mxu0 0
        %2403 = vmatmul.mubr.bf16.gmra.mrb[0].mxu0 %v1892
        %v2404 = vpop.f32.mrb[0].mxu0
        %v2405 = vadd.f32 %v2274, %v2404
        %v2406 = vpop.f32.mrb[0].mxu0
        %v2407 = vadd.f32 %v2276, %v2406
        %v2408 = vpop.f32.mrb[0].mxu0
        %v2409 = vadd.f32 %v2278, %v2408
        %v2410 = vpop.f32.mrb[0].mxu0
        %v2411 = vadd.f32 %v2280, %v2410
        %2412 = vmatprep.mubr.bf16.mxu0 0
        %2413 = vmatmul.mubr.bf16.gmra.mrb[0].mxu0 %v1895
        %v2414 = vpop.f32.mrb[0].mxu0
        %v2415 = vadd.f32 %v2284, %v2414
        %v2416 = vpop.f32.mrb[0].mxu0
        %v2417 = vadd.f32 %v2286, %v2416
        %v2418 = vpop.f32.mrb[0].mxu0
        %v2419 = vpop.f32.mrb[0].mxu0
        %2420 = vdwg.mxu0
        %2421 = vmatprep.subr.bf16.mxu0 %v1477
        %2422 = vmatpush1.bf16.msra.mxu0 %v1476
        %2423 = vmatprep.subr.bf16.mxu0 %v1481
        %2424 = vmatpush1.bf16.msra.mxu0 %v1480
        %2425 = vmatprep.subr.bf16.mxu0 %v1485
        %2426 = vmatpush1.bf16.msra.mxu0 %v1484
        %2427 = vmatprep.subr.bf16.mxu0 %v1489
        %2428 = vmatpush1.bf16.msra.mxu0 %v1488
        %2429 = vmatprep.subr.bf16.mxu0 %v1493
        %2430 = vmatpush1.bf16.msra.mxu0 %v1492
        %2431 = vmatprep.subr.bf16.mxu0 %v1497
        %2432 = vmatpush1.bf16.msra.mxu0 %v1496
        %2433 = vmatprep.subr.bf16.mxu0 %v1501
        %2434 = vmatpush1.bf16.msra.mxu0 %v1500
        %2435 = vmatprep.subr.bf16.mxu0 %v1505
        %2436 = vmatpush1.bf16.msra.mxu0 %v1504
        %2437 = vmatprep.subr.bf16.mxu0 %v1509
        %2438 = vmatpush1.bf16.msra.mxu0 %v1508
        %2439 = vmatprep.subr.bf16.mxu0 %v1513
        %2440 = vmatpush1.bf16.msra.mxu0 %v1512
        %2441 = vmatprep.subr.bf16.mxu0 %v1517
        %2442 = vmatpush1.bf16.msra.mxu0 %v1516
        %2443 = vmatprep.subr.bf16.mxu0 %v1521
        %2444 = vmatpush1.bf16.msra.mxu0 %v1520
        %2445 = vmatprep.subr.bf16.mxu0 %v1525
        %2446 = vmatpush1.bf16.msra.mxu0 %v1524
        %2447 = vmatprep.subr.bf16.mxu0 %v1529
        %2448 = vmatpush1.bf16.msra.mxu0 %v1528
        %2449 = vmatprep.subr.bf16.mxu0 %v1533
        %2450 = vmatpush1.bf16.msra.mxu0 %v1532
        %2451 = vmatprep.subr.bf16.mxu0 %v1537
        %2452 = vmatpush1.bf16.msra.mxu0 %v1536
        %2453 = vmatprep.mubr.bf16.mxu0 %v599
        %2454 = vmatmul.mubr.bf16.gmra.mrb[0].mxu0 %v598
        %v2455 = vpop.f32.mrb[0].mxu0
        %v2456 = vadd.f32 %v877, %v2455
        %v2457 = vpop.f32.mrb[0].mxu0
        %v2458 = vadd.f32 %v881, %v2457
        %v2459 = vpop.f32.mrb[0].mxu0
        %v2460 = vadd.f32 %v877, %v2459
        %v2461 = vpop.f32.mrb[0].mxu0
        %v2462 = vadd.f32 %v881, %v2461
        %2463 = vmatprep.mubr.bf16.mxu0 %v606
        %2464 = vmatmul.mubr.bf16.gmra.mrb[0].mxu0 %v605
        %v2465 = vpop.f32.mrb[0].mxu0
        %v2466 = vadd.f32 %v877, %v2465
        %v2467 = vpop.f32.mrb[0].mxu0
        %v2468 = vadd.f32 %v881, %v2467
        %v2469 = vpop.f32.mrb[0].mxu0
        %v2470 = vadd.f32 %v877, %v2469
        %v2471 = vpop.f32.mrb[0].mxu0
        %v2472 = vadd.f32 %v881, %v2471
        %2473 = vmatprep.mubr.bf16.mxu0 %v613
        %2474 = vmatmul.mubr.bf16.gmra.mrb[0].mxu0 %v612
        %v2475 = vpop.f32.mrb[0].mxu0
        %v2476 = vadd.f32 %v877, %v2475
        %v2477 = vpop.f32.mrb[0].mxu0
        %v2478 = vadd.f32 %v881, %v2477
        %v2479 = vpop.f32.mrb[0].mxu0
        %v2480 = vadd.f32 %v877, %v2479
        %v2481 = vpop.f32.mrb[0].mxu0
        %v2482 = vadd.f32 %v881, %v2481
        %2483 = vmatprep.mubr.bf16.mxu0 %v620
        %2484 = vmatmul.mubr.bf16.gmra.mrb[0].mxu0 %v619
        %v2485 = vpop.f32.mrb[0].mxu0
        %v2486 = vadd.f32 %v877, %v2485
        %v2487 = vpop.f32.mrb[0].mxu0
        %v2488 = vadd.f32 %v881, %v2487
        %v2489 = vpop.f32.mrb[0].mxu0
        %v2490 = vadd.f32 %v877, %v2489
        %v2491 = vpop.f32.mrb[0].mxu0
        %v2492 = vadd.f32 %v881, %v2491
        %2493 = vmatprep.mubr.bf16.mxu0 %v627
        %2494 = vmatmul.mubr.bf16.gmra.mrb[0].mxu0 %v626
        %v2495 = vpop.f32.mrb[0].mxu0
        %v2496 = vadd.f32 %v877, %v2495
        %v2497 = vpop.f32.mrb[0].mxu0
        %v2498 = vadd.f32 %v881, %v2497
        %v2499 = vpop.f32.mrb[0].mxu0
        %v2500 = vadd.f32 %v877, %v2499
        %v2501 = vpop.f32.mrb[0].mxu0
        %v2502 = vadd.f32 %v881, %v2501
        %2503 = vmatprep.mubr.bf16.mxu0 %v634
        %2504 = vmatmul.mubr.bf16.gmra.mrb[0].mxu0 %v633
        %v2505 = vpop.f32.mrb[0].mxu0
        %v2506 = vadd.f32 %v877, %v2505
        %v2507 = vpop.f32.mrb[0].mxu0
        %v2508 = vadd.f32 %v881, %v2507
        %v2509 = vpop.f32.mrb[0].mxu0
        %v2510 = vadd.f32 %v877, %v2509
        %v2511 = vpop.f32.mrb[0].mxu0
        %v2512 = vadd.f32 %v881, %v2511
        %2513 = vmatprep.mubr.bf16.mxu0 %v641
        %2514 = vmatmul.mubr.bf16.gmra.mrb[0].mxu0 %v640
        %v2515 = vpop.f32.mrb[0].mxu0
        %v2516 = vadd.f32 %v877, %v2515
        %v2517 = vpop.f32.mrb[0].mxu0
        %v2518 = vadd.f32 %v881, %v2517
        %v2519 = vpop.f32.mrb[0].mxu0
        %v2520 = vadd.f32 %v877, %v2519
        %v2521 = vpop.f32.mrb[0].mxu0
        %v2522 = vadd.f32 %v881, %v2521
        %2523 = vmatprep.mubr.bf16.mxu0 %v648
        %2524 = vmatmul.mubr.bf16.gmra.mrb[0].mxu0 %v647
        %v2525 = vpop.f32.mrb[0].mxu0
        %v2526 = vadd.f32 %v877, %v2525
        %v2527 = vpop.f32.mrb[0].mxu0
        %v2528 = vadd.f32 %v881, %v2527
        %v2529 = vpop.f32.mrb[0].mxu0
        %v2530 = vadd.f32 %v877, %v2529
        %v2531 = vpop.f32.mrb[0].mxu0
        %v2532 = vadd.f32 %v881, %v2531
        %2533 = vmatprep.mubr.bf16.mxu0 %v655
        %2534 = vmatmul.mubr.bf16.gmra.mrb[0].mxu0 %v654
        %v2535 = vpop.f32.mrb[0].mxu0
        %v2536 = vadd.f32 %v877, %v2535
        %v2537 = vpop.f32.mrb[0].mxu0
        %v2538 = vadd.f32 %v881, %v2537
        %v2539 = vpop.f32.mrb[0].mxu0
        %v2540 = vadd.f32 %v877, %v2539
        %v2541 = vpop.f32.mrb[0].mxu0
        %v2542 = vadd.f32 %v881, %v2541
        %2543 = vmatprep.mubr.bf16.mxu0 %v662
        %2544 = vmatmul.mubr.bf16.gmra.mrb[0].mxu0 %v661
        %v2545 = vpop.f32.mrb[0].mxu0
        %v2546 = vadd.f32 %v877, %v2545
        %v2547 = vpop.f32.mrb[0].mxu0
        %v2548 = vadd.f32 %v881, %v2547
        %v2549 = vpop.f32.mrb[0].mxu0
        %v2550 = vpop.f32.mrb[0].mxu0
        %2551 = vdwg.mxu0
        %2552 = vmatprep.subr.bf16.mxu0 %v1541
        %2553 = vmatpush1.bf16.msra.mxu0 %v1540
        %2554 = vmatprep.subr.bf16.mxu0 %v1545
        %2555 = vmatpush1.bf16.msra.mxu0 %v1544
        %2556 = vmatprep.subr.bf16.mxu0 %v1549
        %2557 = vmatpush1.bf16.msra.mxu0 %v1548
        %2558 = vmatprep.subr.bf16.mxu0 %v1553
        %2559 = vmatpush1.bf16.msra.mxu0 %v1552
        %2560 = vmatprep.subr.bf16.mxu0 %v1557
        %2561 = vmatpush1.bf16.msra.mxu0 %v1556
        %2562 = vmatprep.subr.bf16.mxu0 %v1561
        %2563 = vmatpush1.bf16.msra.mxu0 %v1560
        %2564 = vmatprep.subr.bf16.mxu0 %v1565
        %2565 = vmatpush1.bf16.msra.mxu0 %v1564
        %2566 = vmatprep.subr.bf16.mxu0 %v1569
        %2567 = vmatpush1.bf16.msra.mxu0 %v1568
        %2568 = vmatprep.subr.bf16.mxu0 %v1573
        %2569 = vmatpush1.bf16.msra.mxu0 %v1572
        %2570 = vmatprep.subr.bf16.mxu0 %v1577
        %2571 = vmatpush1.bf16.msra.mxu0 %v1576
        %2572 = vmatprep.subr.bf16.mxu0 %v1581
        %2573 = vmatpush1.bf16.msra.mxu0 %v1580
        %2574 = vmatprep.subr.bf16.mxu0 %v1585
        %2575 = vmatpush1.bf16.msra.mxu0 %v1584
        %2576 = vmatprep.subr.bf16.mxu0 %v1589
        %2577 = vmatpush1.bf16.msra.mxu0 %v1588
        %2578 = vmatprep.subr.bf16.mxu0 %v1593
        %2579 = vmatpush1.bf16.msra.mxu0 %v1592
        %2580 = vmatprep.subr.bf16.mxu0 %v1597
        %2581 = vmatpush1.bf16.msra.mxu0 %v1596
        %2582 = vmatprep.subr.bf16.mxu0 %v1601
        %2583 = vmatpush1.bf16.msra.mxu0 %v1600
        %2584 = vmatprep.mubr.bf16.mxu0 %v601
        %2585 = vmatmul.mubr.bf16.gmra.mrb[0].mxu0 %v600
        %v2586 = vpop.f32.mrb[0].mxu0
        %v2587 = vadd.f32 %v2456, %v2586
        %v2588 = vpop.f32.mrb[0].mxu0
        %v2589 = vadd.f32 %v2458, %v2588
        %v2590 = vpop.f32.mrb[0].mxu0
        %v2591 = vadd.f32 %v2460, %v2590
        %v2592 = vpop.f32.mrb[0].mxu0
        %v2593 = vadd.f32 %v2462, %v2592
        %2594 = vmatprep.mubr.bf16.mxu0 %v608
        %2595 = vmatmul.mubr.bf16.gmra.mrb[0].mxu0 %v607
        %v2596 = vpop.f32.mrb[0].mxu0
        %v2597 = vadd.f32 %v2466, %v2596
        %v2598 = vpop.f32.mrb[0].mxu0
        %v2599 = vadd.f32 %v2468, %v2598
        %v2600 = vpop.f32.mrb[0].mxu0
        %v2601 = vadd.f32 %v2470, %v2600
        %v2602 = vpop.f32.mrb[0].mxu0
        %v2603 = vadd.f32 %v2472, %v2602
        %2604 = vmatprep.mubr.bf16.mxu0 %v615
        %2605 = vmatmul.mubr.bf16.gmra.mrb[0].mxu0 %v614
        %v2606 = vpop.f32.mrb[0].mxu0
        %v2607 = vadd.f32 %v2476, %v2606
        %v2608 = vpop.f32.mrb[0].mxu0
        %v2609 = vadd.f32 %v2478, %v2608
        %v2610 = vpop.f32.mrb[0].mxu0
        %v2611 = vadd.f32 %v2480, %v2610
        %v2612 = vpop.f32.mrb[0].mxu0
        %v2613 = vadd.f32 %v2482, %v2612
        %2614 = vmatprep.mubr.bf16.mxu0 %v622
        %2615 = vmatmul.mubr.bf16.gmra.mrb[0].mxu0 %v621
        %v2616 = vpop.f32.mrb[0].mxu0
        %v2617 = vadd.f32 %v2486, %v2616
        %v2618 = vpop.f32.mrb[0].mxu0
        %v2619 = vadd.f32 %v2488, %v2618
        %v2620 = vpop.f32.mrb[0].mxu0
        %v2621 = vadd.f32 %v2490, %v2620
        %v2622 = vpop.f32.mrb[0].mxu0
        %v2623 = vadd.f32 %v2492, %v2622
        %2624 = vmatprep.mubr.bf16.mxu0 %v629
        %2625 = vmatmul.mubr.bf16.gmra.mrb[0].mxu0 %v628
        %v2626 = vpop.f32.mrb[0].mxu0
        %v2627 = vadd.f32 %v2496, %v2626
        %v2628 = vpop.f32.mrb[0].mxu0
        %v2629 = vadd.f32 %v2498, %v2628
        %v2630 = vpop.f32.mrb[0].mxu0
        %v2631 = vadd.f32 %v2500, %v2630
        %v2632 = vpop.f32.mrb[0].mxu0
        %v2633 = vadd.f32 %v2502, %v2632
        %2634 = vmatprep.mubr.bf16.mxu0 %v636
        %2635 = vmatmul.mubr.bf16.gmra.mrb[0].mxu0 %v635
        %v2636 = vpop.f32.mrb[0].mxu0
        %v2637 = vadd.f32 %v2506, %v2636
        %v2638 = vpop.f32.mrb[0].mxu0
        %v2639 = vadd.f32 %v2508, %v2638
        %v2640 = vpop.f32.mrb[0].mxu0
        %v2641 = vadd.f32 %v2510, %v2640
        %v2642 = vpop.f32.mrb[0].mxu0
        %v2643 = vadd.f32 %v2512, %v2642
        %2644 = vmatprep.mubr.bf16.mxu0 %v643
        %2645 = vmatmul.mubr.bf16.gmra.mrb[0].mxu0 %v642
        %v2646 = vpop.f32.mrb[0].mxu0
        %v2647 = vadd.f32 %v2516, %v2646
        %v2648 = vpop.f32.mrb[0].mxu0
        %v2649 = vadd.f32 %v2518, %v2648
        %v2650 = vpop.f32.mrb[0].mxu0
        %v2651 = vadd.f32 %v2520, %v2650
        %v2652 = vpop.f32.mrb[0].mxu0
        %v2653 = vadd.f32 %v2522, %v2652
        %2654 = vmatprep.mubr.bf16.mxu0 %v650
        %2655 = vmatmul.mubr.bf16.gmra.mrb[0].mxu0 %v649
        %v2656 = vpop.f32.mrb[0].mxu0
        %v2657 = vadd.f32 %v2526, %v2656
        %v2658 = vpop.f32.mrb[0].mxu0
        %v2659 = vadd.f32 %v2528, %v2658
        %v2660 = vpop.f32.mrb[0].mxu0
        %v2661 = vadd.f32 %v2530, %v2660
        %v2662 = vpop.f32.mrb[0].mxu0
        %v2663 = vadd.f32 %v2532, %v2662
        %2664 = vmatprep.mubr.bf16.mxu0 %v657
        %2665 = vmatmul.mubr.bf16.gmra.mrb[0].mxu0 %v656
        %v2666 = vpop.f32.mrb[0].mxu0
        %v2667 = vadd.f32 %v2536, %v2666
        %v2668 = vpop.f32.mrb[0].mxu0
        %v2669 = vadd.f32 %v2538, %v2668
        %v2670 = vpop.f32.mrb[0].mxu0
        %v2671 = vadd.f32 %v2540, %v2670
        %v2672 = vpop.f32.mrb[0].mxu0
        %v2673 = vadd.f32 %v2542, %v2672
        %2674 = vmatprep.mubr.bf16.mxu0 %v664
        %2675 = vmatmul.mubr.bf16.gmra.mrb[0].mxu0 %v663
        %v2676 = vpop.f32.mrb[0].mxu0
        %v2677 = vadd.f32 %v2546, %v2676
        %v2678 = vpop.f32.mrb[0].mxu0
        %v2679 = vadd.f32 %v2548, %v2678
        %v2680 = vpop.f32.mrb[0].mxu0
        %v2681 = vpop.f32.mrb[0].mxu0
        %2682 = vdwg.mxu0
        %2683 = vmatprep.subr.bf16.mxu0 %v1605
        %2684 = vmatpush1.bf16.msra.mxu0 %v1604
        %2685 = vmatprep.subr.bf16.mxu0 %v1609
        %2686 = vmatpush1.bf16.msra.mxu0 %v1608
        %2687 = vmatprep.subr.bf16.mxu0 %v1613
        %2688 = vmatpush1.bf16.msra.mxu0 %v1612
        %2689 = vmatprep.subr.bf16.mxu0 %v1617
        %2690 = vmatpush1.bf16.msra.mxu0 %v1616
        %2691 = vmatprep.subr.bf16.mxu0 %v1621
        %2692 = vmatpush1.bf16.msra.mxu0 %v1620
        %2693 = vmatprep.subr.bf16.mxu0 %v1625
        %2694 = vmatpush1.bf16.msra.mxu0 %v1624
        %2695 = vmatprep.subr.bf16.mxu0 %v1629
        %2696 = vmatpush1.bf16.msra.mxu0 %v1628
        %2697 = vmatprep.subr.bf16.mxu0 %v1633
        %2698 = vmatpush1.bf16.msra.mxu0 %v1632
        %2699 = vmatprep.subr.bf16.mxu0 %v1637
        %2700 = vmatpush1.bf16.msra.mxu0 %v1636
        %2701 = vmatprep.subr.bf16.mxu0 %v1641
        %2702 = vmatpush1.bf16.msra.mxu0 %v1640
        %2703 = vmatprep.subr.bf16.mxu0 %v1645
        %2704 = vmatpush1.bf16.msra.mxu0 %v1644
        %2705 = vmatprep.subr.bf16.mxu0 %v1649
        %2706 = vmatpush1.bf16.msra.mxu0 %v1648
        %2707 = vmatprep.subr.bf16.mxu0 %v1653
        %2708 = vmatpush1.bf16.msra.mxu0 %v1652
        %2709 = vmatprep.subr.bf16.mxu0 %v1657
        %2710 = vmatpush1.bf16.msra.mxu0 %v1656
        %2711 = vmatprep.subr.bf16.mxu0 %v1661
        %2712 = vmatpush1.bf16.msra.mxu0 %v1660
        %2713 = vmatprep.subr.bf16.mxu0 %v1665
        %2714 = vmatpush1.bf16.msra.mxu0 %v1664
        %2715 = vmatprep.mubr.bf16.mxu0 %v603
        %2716 = vmatmul.mubr.bf16.gmra.mrb[0].mxu0 %v602
        %v2717 = vpop.f32.mrb[0].mxu0
        %v2718 = vadd.f32 %v2587, %v2717
        %v2719 = vpop.f32.mrb[0].mxu0
        %v2720 = vadd.f32 %v2589, %v2719
        %v2721 = vpop.f32.mrb[0].mxu0
        %v2722 = vadd.f32 %v2591, %v2721
        %v2723 = vpop.f32.mrb[0].mxu0
        %v2724 = vadd.f32 %v2593, %v2723
        %2725 = vmatprep.mubr.bf16.mxu0 %v610
        %2726 = vmatmul.mubr.bf16.gmra.mrb[0].mxu0 %v609
        %v2727 = vpop.f32.mrb[0].mxu0
        %v2728 = vadd.f32 %v2597, %v2727
        %v2729 = vpop.f32.mrb[0].mxu0
        %v2730 = vadd.f32 %v2599, %v2729
        %v2731 = vpop.f32.mrb[0].mxu0
        %v2732 = vadd.f32 %v2601, %v2731
        %v2733 = vpop.f32.mrb[0].mxu0
        %v2734 = vadd.f32 %v2603, %v2733
        %2735 = vmatprep.mubr.bf16.mxu0 %v617
        %2736 = vmatmul.mubr.bf16.gmra.mrb[0].mxu0 %v616
        %v2737 = vpop.f32.mrb[0].mxu0
        %v2738 = vadd.f32 %v2607, %v2737
        %v2739 = vpop.f32.mrb[0].mxu0
        %v2740 = vadd.f32 %v2609, %v2739
        %v2741 = vpop.f32.mrb[0].mxu0
        %v2742 = vadd.f32 %v2611, %v2741
        %v2743 = vpop.f32.mrb[0].mxu0
        %v2744 = vadd.f32 %v2613, %v2743
        %2745 = vmatprep.mubr.bf16.mxu0 %v624
        %2746 = vmatmul.mubr.bf16.gmra.mrb[0].mxu0 %v623
        %v2747 = vpop.f32.mrb[0].mxu0
        %v2748 = vadd.f32 %v2617, %v2747
        %v2749 = vpop.f32.mrb[0].mxu0
        %v2750 = vadd.f32 %v2619, %v2749
        %v2751 = vpop.f32.mrb[0].mxu0
        %v2752 = vadd.f32 %v2621, %v2751
        %v2753 = vpop.f32.mrb[0].mxu0
        %v2754 = vadd.f32 %v2623, %v2753
        %2755 = vmatprep.mubr.bf16.mxu0 %v631
        %2756 = vmatmul.mubr.bf16.gmra.mrb[0].mxu0 %v630
        %v2757 = vpop.f32.mrb[0].mxu0
        %v2758 = vadd.f32 %v2627, %v2757
        %v2759 = vpop.f32.mrb[0].mxu0
        %v2760 = vadd.f32 %v2629, %v2759
        %v2761 = vpop.f32.mrb[0].mxu0
        %v2762 = vadd.f32 %v2631, %v2761
        %v2763 = vpop.f32.mrb[0].mxu0
        %v2764 = vadd.f32 %v2633, %v2763
        %2765 = vmatprep.mubr.bf16.mxu0 %v638
        %2766 = vmatmul.mubr.bf16.gmra.mrb[0].mxu0 %v637
        %v2767 = vpop.f32.mrb[0].mxu0
        %v2768 = vadd.f32 %v2637, %v2767
        %v2769 = vpop.f32.mrb[0].mxu0
        %v2770 = vadd.f32 %v2639, %v2769
        %v2771 = vpop.f32.mrb[0].mxu0
        %v2772 = vadd.f32 %v2641, %v2771
        %v2773 = vpop.f32.mrb[0].mxu0
        %v2774 = vadd.f32 %v2643, %v2773
        %2775 = vmatprep.mubr.bf16.mxu0 %v645
        %2776 = vmatmul.mubr.bf16.gmra.mrb[0].mxu0 %v644
        %v2777 = vpop.f32.mrb[0].mxu0
        %v2778 = vadd.f32 %v2647, %v2777
        %v2779 = vpop.f32.mrb[0].mxu0
        %v2780 = vadd.f32 %v2649, %v2779
        %v2781 = vpop.f32.mrb[0].mxu0
        %v2782 = vadd.f32 %v2651, %v2781
        %v2783 = vpop.f32.mrb[0].mxu0
        %v2784 = vadd.f32 %v2653, %v2783
        %2785 = vmatprep.mubr.bf16.mxu0 %v652
        %2786 = vmatmul.mubr.bf16.gmra.mrb[0].mxu0 %v651
        %v2787 = vpop.f32.mrb[0].mxu0
        %v2788 = vadd.f32 %v2657, %v2787
        %v2789 = vpop.f32.mrb[0].mxu0
        %v2790 = vadd.f32 %v2659, %v2789
        %v2791 = vpop.f32.mrb[0].mxu0
        %v2792 = vadd.f32 %v2661, %v2791
        %v2793 = vpop.f32.mrb[0].mxu0
        %v2794 = vadd.f32 %v2663, %v2793
        %2795 = vmatprep.mubr.bf16.mxu0 %v659
        %2796 = vmatmul.mubr.bf16.gmra.mrb[0].mxu0 %v658
        %v2797 = vpop.f32.mrb[0].mxu0
        %v2798 = vadd.f32 %v2667, %v2797
        %v2799 = vpop.f32.mrb[0].mxu0
        %v2800 = vadd.f32 %v2669, %v2799
        %v2801 = vpop.f32.mrb[0].mxu0
        %v2802 = vadd.f32 %v2671, %v2801
        %v2803 = vpop.f32.mrb[0].mxu0
        %v2804 = vadd.f32 %v2673, %v2803
        %2805 = vmatprep.mubr.bf16.mxu0 %v666
        %2806 = vmatmul.mubr.bf16.gmra.mrb[0].mxu0 %v665
        %v2807 = vpop.f32.mrb[0].mxu0
        %v2808 = vadd.f32 %v2677, %v2807
        %v2809 = vpop.f32.mrb[0].mxu0
        %v2810 = vadd.f32 %v2679, %v2809
        %v2811 = vpop.f32.mrb[0].mxu0
        %v2812 = vpop.f32.mrb[0].mxu0
        %2813 = vdwg.mxu0
        %2814 = vmatprep.subr.bf16.mxu0 %v1669
        %2815 = vmatpush1.bf16.msra.mxu0 %v1668
        %2816 = vmatprep.subr.bf16.mxu0 0
        %2817 = vmatpush1.bf16.msra.mxu0 0
        %2818 = vmatprep.subr.bf16.mxu0 0
        %2819 = vmatpush1.bf16.msra.mxu0 0
        %2820 = vmatprep.subr.bf16.mxu0 0
        %2821 = vmatpush1.bf16.msra.mxu0 0
        %2822 = vmatprep.subr.bf16.mxu0 0
        %2823 = vmatpush1.bf16.msra.mxu0 0
        %2824 = vmatprep.subr.bf16.mxu0 0
        %2825 = vmatpush1.bf16.msra.mxu0 0
        %2826 = vmatprep.subr.bf16.mxu0 0
        %2827 = vmatpush1.bf16.msra.mxu0 0
        %2828 = vmatprep.subr.bf16.mxu0 0
        %2829 = vmatpush1.bf16.msra.mxu0 0
        %2830 = vmatprep.subr.bf16.mxu0 0
        %2831 = vmatpush1.bf16.msra.mxu0 0
        %2832 = vmatprep.subr.bf16.mxu0 0
        %2833 = vmatpush1.bf16.msra.mxu0 0
        %2834 = vmatprep.subr.bf16.mxu0 0
        %2835 = vmatpush1.bf16.msra.mxu0 0
        %2836 = vmatprep.subr.bf16.mxu0 0
        %2837 = vmatpush1.bf16.msra.mxu0 0
        %2838 = vmatprep.subr.bf16.mxu0 0
        %2839 = vmatpush1.bf16.msra.mxu0 0
        %2840 = vmatprep.subr.bf16.mxu0 0
        %2841 = vmatpush1.bf16.msra.mxu0 0
        %2842 = vmatprep.subr.bf16.mxu0 0
        %2843 = vmatpush1.bf16.msra.mxu0 0
        %2844 = vmatprep.subr.bf16.mxu0 0
        %2845 = vmatpush1.bf16.msra.mxu0 0
        %2846 = vmatprep.mubr.bf16.mxu0 0
        %2847 = vmatmul.mubr.bf16.gmra.mrb[0].mxu0 %v1868
        %v2848 = vpop.f32.mrb[0].mxu0
        %v2849 = vadd.f32 %v2718, %v2848
        %v2850 = vpop.f32.mrb[0].mxu0
        %v2851 = vadd.f32 %v2720, %v2850
        %v2852 = vpop.f32.mrb[0].mxu0
        %v2853 = vadd.f32 %v2722, %v2852
        %v2854 = vpop.f32.mrb[0].mxu0
        %v2855 = vadd.f32 %v2724, %v2854
        %2856 = vmatprep.mubr.bf16.mxu0 0
        %2857 = vmatmul.mubr.bf16.gmra.mrb[0].mxu0 %v1871
        %v2858 = vpop.f32.mrb[0].mxu0
        %v2859 = vadd.f32 %v2728, %v2858
        %v2860 = vpop.f32.mrb[0].mxu0
        %v2861 = vadd.f32 %v2730, %v2860
        %v2862 = vpop.f32.mrb[0].mxu0
        %v2863 = vadd.f32 %v2732, %v2862
        %v2864 = vpop.f32.mrb[0].mxu0
        %v2865 = vadd.f32 %v2734, %v2864
        %2866 = vmatprep.mubr.bf16.mxu0 0
        %2867 = vmatmul.mubr.bf16.gmra.mrb[0].mxu0 %v1874
        %v2868 = vpop.f32.mrb[0].mxu0
        %v2869 = vadd.f32 %v2738, %v2868
        %v2870 = vpop.f32.mrb[0].mxu0
        %v2871 = vadd.f32 %v2740, %v2870
        %v2872 = vpop.f32.mrb[0].mxu0
        %v2873 = vadd.f32 %v2742, %v2872
        %v2874 = vpop.f32.mrb[0].mxu0
        %v2875 = vadd.f32 %v2744, %v2874
        %2876 = vmatprep.mubr.bf16.mxu0 0
        %2877 = vmatmul.mubr.bf16.gmra.mrb[0].mxu0 %v1877
        %v2878 = vpop.f32.mrb[0].mxu0
        %v2879 = vadd.f32 %v2748, %v2878
        %v2880 = vpop.f32.mrb[0].mxu0
        %v2881 = vadd.f32 %v2750, %v2880
        %v2882 = vpop.f32.mrb[0].mxu0
        %v2883 = vadd.f32 %v2752, %v2882
        %v2884 = vpop.f32.mrb[0].mxu0
        %v2885 = vadd.f32 %v2754, %v2884
        %2886 = vmatprep.mubr.bf16.mxu0 0
        %2887 = vmatmul.mubr.bf16.gmra.mrb[0].mxu0 %v1880
        %v2888 = vpop.f32.mrb[0].mxu0
        %v2889 = vadd.f32 %v2758, %v2888
        %v2890 = vpop.f32.mrb[0].mxu0
        %v2891 = vadd.f32 %v2760, %v2890
        %v2892 = vpop.f32.mrb[0].mxu0
        %v2893 = vadd.f32 %v2762, %v2892
        %v2894 = vpop.f32.mrb[0].mxu0
        %v2895 = vadd.f32 %v2764, %v2894
        %2896 = vmatprep.mubr.bf16.mxu0 0
        %2897 = vmatmul.mubr.bf16.gmra.mrb[0].mxu0 %v1883
        %v2898 = vpop.f32.mrb[0].mxu0
        %v2899 = vadd.f32 %v2768, %v2898
        %v2900 = vpop.f32.mrb[0].mxu0
        %v2901 = vadd.f32 %v2770, %v2900
        %v2902 = vpop.f32.mrb[0].mxu0
        %v2903 = vadd.f32 %v2772, %v2902
        %v2904 = vpop.f32.mrb[0].mxu0
        %v2905 = vadd.f32 %v2774, %v2904
        %2906 = vmatprep.mubr.bf16.mxu0 0
        %2907 = vmatmul.mubr.bf16.gmra.mrb[0].mxu0 %v1886
        %v2908 = vpop.f32.mrb[0].mxu0
        %v2909 = vadd.f32 %v2778, %v2908
        %v2910 = vpop.f32.mrb[0].mxu0
        %v2911 = vadd.f32 %v2780, %v2910
        %v2912 = vpop.f32.mrb[0].mxu0
        %v2913 = vadd.f32 %v2782, %v2912
        %v2914 = vpop.f32.mrb[0].mxu0
        %v2915 = vadd.f32 %v2784, %v2914
        %2916 = vmatprep.mubr.bf16.mxu0 0
        %2917 = vmatmul.mubr.bf16.gmra.mrb[0].mxu0 %v1889
        %v2918 = vpop.f32.mrb[0].mxu0
        %v2919 = vadd.f32 %v2788, %v2918
        %v2920 = vpop.f32.mrb[0].mxu0
        %v2921 = vadd.f32 %v2790, %v2920
        %v2922 = vpop.f32.mrb[0].mxu0
        %v2923 = vadd.f32 %v2792, %v2922
        %v2924 = vpop.f32.mrb[0].mxu0
        %v2925 = vadd.f32 %v2794, %v2924
        %2926 = vmatprep.mubr.bf16.mxu0 0
        %2927 = vmatmul.mubr.bf16.gmra.mrb[0].mxu0 %v1892
        %v2928 = vpop.f32.mrb[0].mxu0
        %v2929 = vadd.f32 %v2798, %v2928
        %v2930 = vpop.f32.mrb[0].mxu0
        %v2931 = vadd.f32 %v2800, %v2930
        %v2932 = vpop.f32.mrb[0].mxu0
        %v2933 = vadd.f32 %v2802, %v2932
        %v2934 = vpop.f32.mrb[0].mxu0
        %v2935 = vadd.f32 %v2804, %v2934
        %2936 = vmatprep.mubr.bf16.mxu0 0
        %2937 = vmatmul.mubr.bf16.gmra.mrb[0].mxu0 %v1895
        %v2938 = vpop.f32.mrb[0].mxu0
        %v2939 = vadd.f32 %v2808, %v2938
        %v2940 = vpop.f32.mrb[0].mxu0
        %v2941 = vadd.f32 %v2810, %v2940
        %v2942 = vpop.f32.mrb[0].mxu0
        %v2943 = vpop.f32.mrb[0].mxu0
        %2944 = vdwg.mxu0
        %v2945 = vpack.c.bf16 %v2329, %v2325
        %v2946 = vpack.c.bf16 %v2331, %v2327
        %v2947 = vpack.c.bf16 %v2853, %v2849
        %v2948 = vpack.c.bf16 %v2855, %v2851
        %v2949 = vpack.c.bf16 %v2339, %v2335
        %v2950 = vpack.c.bf16 %v2341, %v2337
        %v2951 = vpack.c.bf16 %v2863, %v2859
        %v2952 = vpack.c.bf16 %v2865, %v2861
        %v2953 = vpack.c.bf16 %v2349, %v2345
        %v2954 = vpack.c.bf16 %v2351, %v2347
        %v2955 = vpack.c.bf16 %v2873, %v2869
        %v2956 = vpack.c.bf16 %v2875, %v2871
        %v2957 = vpack.c.bf16 %v2359, %v2355
        %v2958 = vpack.c.bf16 %v2361, %v2357
        %v2959 = vpack.c.bf16 %v2883, %v2879
        %v2960 = vpack.c.bf16 %v2885, %v2881
        %v2961 = vpack.c.bf16 %v2369, %v2365
        %v2962 = vpack.c.bf16 %v2371, %v2367
        %v2963 = vpack.c.bf16 %v2893, %v2889
        %v2964 = vpack.c.bf16 %v2895, %v2891
        %v2965 = vpack.c.bf16 %v2379, %v2375
        %v2966 = vpack.c.bf16 %v2381, %v2377
        %v2967 = vpack.c.bf16 %v2903, %v2899
        %v2968 = vpack.c.bf16 %v2905, %v2901
        %v2969 = vpack.c.bf16 %v2389, %v2385
        %v2970 = vpack.c.bf16 %v2391, %v2387
        %v2971 = vpack.c.bf16 %v2913, %v2909
        %v2972 = vpack.c.bf16 %v2915, %v2911
        %v2973 = vpack.c.bf16 %v2399, %v2395
        %v2974 = vpack.c.bf16 %v2401, %v2397
        %v2975 = vpack.c.bf16 %v2923, %v2919
        %v2976 = vpack.c.bf16 %v2925, %v2921
        %v2977 = vpack.c.bf16 %v2409, %v2405
        %v2978 = vpack.c.bf16 %v2411, %v2407
        %v2979 = vpack.c.bf16 %v2933, %v2929
        %v2980 = vpack.c.bf16 %v2935, %v2931
        %v2981 = vpack.c.bf16 %v2415, %v2415
        %v2982 = vpack.c.bf16 %v2417, %v2417
        %v2983 = vpack.c.bf16 %v2939, %v2939
        %v2984 = vpack.c.bf16 %v2941, %v2941
        %v2985 = vld [vmem:[#allocation7] sm:$0xff]
        %v2986 = vld [vmem:[#allocation7 + $0x8] sm:$0xff]
        %v2987 = vld [vmem:[#allocation7 + $0x10] sm:$0xff]
        %v2988 = vld [vmem:[#allocation7 + $0x18] sm:$0xff]
        %v2989 = vld [vmem:[#allocation7 + $0x20] sm:$0xff]
        %v2990 = vld [vmem:[#allocation7 + $0x28] sm:$0xff]
        %v2991 = vld [vmem:[#allocation7 + $0x30] sm:$0xff]
        %v2992 = vld [vmem:[#allocation7 + $0x38] sm:$0xff]
        %v2993 = vld [vmem:[#allocation7 + $0x40] sm:$0xff]
        %v2994 = vld [vmem:[#allocation7 + $0x48] sm:$0xff]
        %v2995 = vld [vmem:[#allocation7 + $0x50] sm:$0xff]
        %v2996 = vld [vmem:[#allocation7 + $0x58] sm:$0xff]
        %v2997 = vld [vmem:[#allocation7 + $0x60] sm:$0xff]
        %v2998 = vld [vmem:[#allocation7 + $0x68] sm:$0xff]
        %v2999 = vld [vmem:[#allocation7 + $0x70] sm:$0xff]
        %v3000 = vld [vmem:[#allocation7 + $0x78] sm:$0xff]
        %v3001 = vld [vmem:[#allocation7 + $0x80] sm:$0xff]
        %v3002 = vld [vmem:[#allocation7 + $0x88] sm:$0xff]
        %v3003 = vld [vmem:[#allocation7 + $0x90] sm:$0xff]
        %v3004 = vld [vmem:[#allocation7 + $0x98] sm:$0xff]
        %v3005 = vld [vmem:[#allocation7 + $0xa0] sm:$0xff]
        %v3006 = vld [vmem:[#allocation7 + $0xa8] sm:$0xff]
        %v3007 = vld [vmem:[#allocation7 + $0xb0] sm:$0xff]
        %v3008 = vld [vmem:[#allocation7 + $0xb8] sm:$0xff]
        %v3009 = vld [vmem:[#allocation7 + $0xc0] sm:$0xff]
        %v3010 = vld [vmem:[#allocation7 + $0xc8] sm:$0xff]
        %v3011 = vld [vmem:[#allocation7 + $0xd0] sm:$0xff]
        %v3012 = vld [vmem:[#allocation7 + $0xd8] sm:$0xff]
        %v3013 = vld [vmem:[#allocation7 + $0xe0] sm:$0xff]
        %v3014 = vld [vmem:[#allocation7 + $0xe8] sm:$0xff]
        %v3015 = vld [vmem:[#allocation7 + $0xf0] sm:$0xff]
        %v3016 = vld [vmem:[#allocation7 + $0xf8] sm:$0xff]
        %v3017 = vld [vmem:[#allocation7 + $0x100] sm:$0xff]
        %v3018 = vld [vmem:[#allocation7 + $0x108] sm:$0xff]
        %v3019 = vld [vmem:[#allocation7 + $0x110] sm:$0xff]
        %v3020 = vld [vmem:[#allocation7 + $0x118] sm:$0xff]
        %v3021 = vld [vmem:[#allocation7 + $0x120] sm:$0xff]
        %v3022 = vld [vmem:[#allocation7 + $0x128] sm:$0xff]
        %v3023 = vld [vmem:[#allocation7 + $0x130] sm:$0xff]
        %v3024 = vld [vmem:[#allocation7 + $0x138] sm:$0xff]
        %v3025 = vld [vmem:[#allocation7 + $0x140] sm:$0xff]
        %v3026 = vld [vmem:[#allocation7 + $0x148] sm:$0xff]
        %v3027 = vld [vmem:[#allocation7 + $0x150] sm:$0xff]
        %v3028 = vld [vmem:[#allocation7 + $0x158] sm:$0xff]
        %v3029 = vld [vmem:[#allocation7 + $0x160] sm:$0xff]
        %v3030 = vld [vmem:[#allocation7 + $0x168] sm:$0xff]
        %v3031 = vld [vmem:[#allocation7 + $0x170] sm:$0xff]
        %v3032 = vld [vmem:[#allocation7 + $0x178] sm:$0xff]
        %v3033 = vld [vmem:[#allocation7 + $0x180] sm:$0xff]
        %v3034 = vld [vmem:[#allocation7 + $0x188] sm:$0xff]
        %v3035 = vld [vmem:[#allocation7 + $0x190] sm:$0xff]
        %v3036 = vld [vmem:[#allocation7 + $0x198] sm:$0xff]
        %v3037 = vld [vmem:[#allocation7 + $0x1a0] sm:$0xff]
        %v3038 = vld [vmem:[#allocation7 + $0x1a8] sm:$0xff]
        %v3039 = vld [vmem:[#allocation7 + $0x1b0] sm:$0xff]
        %v3040 = vld [vmem:[#allocation7 + $0x1b8] sm:$0xff]
        %v3041 = vld [vmem:[#allocation7 + $0x1c0] sm:$0xff]
        %v3042 = vld [vmem:[#allocation7 + $0x1c8] sm:$0xff]
        %v3043 = vld [vmem:[#allocation7 + $0x1d0] sm:$0xff]
        %v3044 = vld [vmem:[#allocation7 + $0x1d8] sm:$0xff]
        %v3045 = vld [vmem:[#allocation7 + $0x1e0] sm:$0xff]
        %v3046 = vld [vmem:[#allocation7 + $0x1e8] sm:$0xff]
        %v3047 = vld [vmem:[#allocation7 + $0x1f0] sm:$0xff]
        %v3048 = vld [vmem:[#allocation7 + $0x1f8] sm:$0xff]
        %v3049 = vld [vmem:[#allocation9] sm:$0x3]
        %v3051 = vlaneseq
        %v3052 = vshrl.u32 %v3051, 7
        %v3053 = vsub.s32 0, %v3052
        %v3054 = vrot.slane %v3049, %v3053
        %v3055 = vlaneseq
        %v3056 = vshrl.u32 %v3055, 7
        %v3057 = vsub.s32 1, %v3056
        %v3058 = vrot.slane %v3049, %v3057
        %v3125 = vunpack.c.l.b16 %v2985
        %v3126 = vunpack.c.h.b16 %v2985
        %v3127 = vunpack.c.l.b16 %v2986
        %v3128 = vunpack.c.h.b16 %v2986
        %v3129 = vunpack.c.l.b16 %v2987
        %v3130 = vunpack.c.h.b16 %v2987
        %v3131 = vunpack.c.l.b16 %v2988
        %v3132 = vunpack.c.h.b16 %v2988
        %v3133 = vunpack.c.l.b16 %v2989
        %v3134 = vunpack.c.h.b16 %v2989
        %v3135 = vunpack.c.l.b16 %v2990
        %v3136 = vunpack.c.h.b16 %v2990
        %v3137 = vunpack.c.l.b16 %v2991
        %v3138 = vunpack.c.h.b16 %v2991
        %v3139 = vunpack.c.l.b16 %v2992
        %v3140 = vunpack.c.h.b16 %v2992
        %v3141 = vunpack.c.l.b16 %v2993
        %v3142 = vunpack.c.h.b16 %v2993
        %v3143 = vunpack.c.l.b16 %v2994
        %v3144 = vunpack.c.h.b16 %v2994
        %v3145 = vunpack.c.l.b16 %v2995
        %v3146 = vunpack.c.h.b16 %v2995
        %v3147 = vunpack.c.l.b16 %v2996
        %v3148 = vunpack.c.h.b16 %v2996
        %v3149 = vunpack.c.l.b16 %v2997
        %v3150 = vunpack.c.h.b16 %v2997
        %v3151 = vunpack.c.l.b16 %v2998
        %v3152 = vunpack.c.h.b16 %v2998
        %v3153 = vunpack.c.l.b16 %v2999
        %v3154 = vunpack.c.h.b16 %v2999
        %v3155 = vunpack.c.l.b16 %v3000
        %v3156 = vunpack.c.h.b16 %v3000
        %v3157 = vunpack.c.l.b16 %v3001
        %v3158 = vunpack.c.h.b16 %v3001
        %v3159 = vunpack.c.l.b16 %v3002
        %v3160 = vunpack.c.h.b16 %v3002
        %v3161 = vunpack.c.l.b16 %v3003
        %v3162 = vunpack.c.h.b16 %v3003
        %v3163 = vunpack.c.l.b16 %v3004
        %v3164 = vunpack.c.h.b16 %v3004
        %v3165 = vunpack.c.l.b16 %v3005
        %v3166 = vunpack.c.h.b16 %v3005
        %v3167 = vunpack.c.l.b16 %v3006
        %v3168 = vunpack.c.h.b16 %v3006
        %v3169 = vunpack.c.l.b16 %v3007
        %v3170 = vunpack.c.h.b16 %v3007
        %v3171 = vunpack.c.l.b16 %v3008
        %v3172 = vunpack.c.h.b16 %v3008
        %v3173 = vunpack.c.l.b16 %v3009
        %v3174 = vunpack.c.h.b16 %v3009
        %v3175 = vunpack.c.l.b16 %v3010
        %v3176 = vunpack.c.h.b16 %v3010
        %v3177 = vunpack.c.l.b16 %v3011
        %v3178 = vunpack.c.h.b16 %v3011
        %v3179 = vunpack.c.l.b16 %v3012
        %v3180 = vunpack.c.h.b16 %v3012
        %v3181 = vunpack.c.l.b16 %v3013
        %v3182 = vunpack.c.h.b16 %v3013
        %v3183 = vunpack.c.l.b16 %v3014
        %v3184 = vunpack.c.h.b16 %v3014
        %v3185 = vunpack.c.l.b16 %v3015
        %v3186 = vunpack.c.h.b16 %v3015
        %v3187 = vunpack.c.l.b16 %v3016
        %v3188 = vunpack.c.h.b16 %v3016
        %v3189 = vunpack.c.l.b16 %v3017
        %v3190 = vunpack.c.h.b16 %v3017
        %v3191 = vunpack.c.l.b16 %v3018
        %v3192 = vunpack.c.h.b16 %v3018
        %v3193 = vunpack.c.l.b16 %v3019
        %v3194 = vunpack.c.h.b16 %v3019
        %v3195 = vunpack.c.l.b16 %v3020
        %v3196 = vunpack.c.h.b16 %v3020
        %v3197 = vunpack.c.l.b16 %v3021
        %v3198 = vunpack.c.h.b16 %v3021
        %v3199 = vunpack.c.l.b16 %v3022
        %v3200 = vunpack.c.h.b16 %v3022
        %v3201 = vunpack.c.l.b16 %v3023
        %v3202 = vunpack.c.h.b16 %v3023
        %v3203 = vunpack.c.l.b16 %v3024
        %v3204 = vunpack.c.h.b16 %v3024
        %v3205 = vunpack.c.l.b16 %v3025
        %v3206 = vunpack.c.h.b16 %v3025
        %v3207 = vunpack.c.l.b16 %v3026
        %v3208 = vunpack.c.h.b16 %v3026
        %v3209 = vunpack.c.l.b16 %v3027
        %v3210 = vunpack.c.h.b16 %v3027
        %v3211 = vunpack.c.l.b16 %v3028
        %v3212 = vunpack.c.h.b16 %v3028
        %v3213 = vunpack.c.l.b16 %v3029
        %v3214 = vunpack.c.h.b16 %v3029
        %v3215 = vunpack.c.l.b16 %v3030
        %v3216 = vunpack.c.h.b16 %v3030
        %v3217 = vunpack.c.l.b16 %v3031
        %v3218 = vunpack.c.h.b16 %v3031
        %v3219 = vunpack.c.l.b16 %v3032
        %v3220 = vunpack.c.h.b16 %v3032
        %v3221 = vunpack.c.l.b16 %v3033
        %v3222 = vunpack.c.h.b16 %v3033
        %v3223 = vunpack.c.l.b16 %v3034
        %v3224 = vunpack.c.h.b16 %v3034
        %v3225 = vunpack.c.l.b16 %v3035
        %v3226 = vunpack.c.h.b16 %v3035
        %v3227 = vunpack.c.l.b16 %v3036
        %v3228 = vunpack.c.h.b16 %v3036
        %v3229 = vunpack.c.l.b16 %v3037
        %v3230 = vunpack.c.h.b16 %v3037
        %v3231 = vunpack.c.l.b16 %v3038
        %v3232 = vunpack.c.h.b16 %v3038
        %v3233 = vunpack.c.l.b16 %v3039
        %v3234 = vunpack.c.h.b16 %v3039
        %v3235 = vunpack.c.l.b16 %v3040
        %v3236 = vunpack.c.h.b16 %v3040
        %v3237 = vunpack.c.l.b16 %v3041
        %v3238 = vunpack.c.h.b16 %v3041
        %v3239 = vunpack.c.l.b16 %v3042
        %v3240 = vunpack.c.h.b16 %v3042
        %v3241 = vunpack.c.l.b16 %v3043
        %v3242 = vunpack.c.h.b16 %v3043
        %v3243 = vunpack.c.l.b16 %v3044
        %v3244 = vunpack.c.h.b16 %v3044
        %v3245 = vunpack.c.l.b16 %v3045
        %v3246 = vunpack.c.h.b16 %v3045
        %v3247 = vunpack.c.l.b16 %v3046
        %v3248 = vunpack.c.h.b16 %v3046
        %v3249 = vunpack.c.l.b16 %v3047
        %v3250 = vunpack.c.h.b16 %v3047
        %v3251 = vunpack.c.l.b16 %v3048
        %v3252 = vunpack.c.h.b16 %v3048
        %v3253 = vpack.c.b16 %v3127, %v3125
        %v3254 = vpack.c.b16 %v3128, %v3126
        %v3255 = vpack.c.b16 %v3131, %v3129
        %v3256 = vpack.c.b16 %v3132, %v3130
        %v3257 = vpack.c.b16 %v3135, %v3133
        %v3258 = vpack.c.b16 %v3136, %v3134
        %v3259 = vpack.c.b16 %v3139, %v3137
        %v3260 = vpack.c.b16 %v3140, %v3138
        %v3261 = vpack.c.b16 %v3143, %v3141
        %v3262 = vpack.c.b16 %v3144, %v3142
        %v3263 = vpack.c.b16 %v3147, %v3145
        %v3264 = vpack.c.b16 %v3148, %v3146
        %v3265 = vpack.c.b16 %v3151, %v3149
        %v3266 = vpack.c.b16 %v3152, %v3150
        %v3267 = vpack.c.b16 %v3155, %v3153
        %v3268 = vpack.c.b16 %v3156, %v3154
        %v3269 = vpack.c.b16 %v3159, %v3157
        %v3270 = vpack.c.b16 %v3160, %v3158
        %v3271 = vpack.c.b16 %v3163, %v3161
        %v3272 = vpack.c.b16 %v3164, %v3162
        %v3273 = vpack.c.b16 %v3167, %v3165
        %v3274 = vpack.c.b16 %v3168, %v3166
        %v3275 = vpack.c.b16 %v3171, %v3169
        %v3276 = vpack.c.b16 %v3172, %v3170
        %v3277 = vpack.c.b16 %v3175, %v3173
        %v3278 = vpack.c.b16 %v3176, %v3174
        %v3279 = vpack.c.b16 %v3179, %v3177
        %v3280 = vpack.c.b16 %v3180, %v3178
        %v3281 = vpack.c.b16 %v3183, %v3181
        %v3282 = vpack.c.b16 %v3184, %v3182
        %v3283 = vpack.c.b16 %v3187, %v3185
        %v3284 = vpack.c.b16 %v3188, %v3186
        %v3285 = vpack.c.b16 %v3191, %v3189
        %v3286 = vpack.c.b16 %v3192, %v3190
        %v3287 = vpack.c.b16 %v3195, %v3193
        %v3288 = vpack.c.b16 %v3196, %v3194
        %v3289 = vpack.c.b16 %v3199, %v3197
        %v3290 = vpack.c.b16 %v3200, %v3198
        %v3291 = vpack.c.b16 %v3203, %v3201
        %v3292 = vpack.c.b16 %v3204, %v3202
        %v3293 = vpack.c.b16 %v3207, %v3205
        %v3294 = vpack.c.b16 %v3208, %v3206
        %v3295 = vpack.c.b16 %v3211, %v3209
        %v3296 = vpack.c.b16 %v3212, %v3210
        %v3297 = vpack.c.b16 %v3215, %v3213
        %v3298 = vpack.c.b16 %v3216, %v3214
        %v3299 = vpack.c.b16 %v3219, %v3217
        %v3300 = vpack.c.b16 %v3220, %v3218
        %v3301 = vpack.c.b16 %v3223, %v3221
        %v3302 = vpack.c.b16 %v3224, %v3222
        %v3303 = vpack.c.b16 %v3227, %v3225
        %v3304 = vpack.c.b16 %v3228, %v3226
        %v3305 = vpack.c.b16 %v3231, %v3229
        %v3306 = vpack.c.b16 %v3232, %v3230
        %v3307 = vpack.c.b16 %v3235, %v3233
        %v3308 = vpack.c.b16 %v3236, %v3234
        %v3309 = vpack.c.b16 %v3239, %v3237
        %v3310 = vpack.c.b16 %v3240, %v3238
        %v3311 = vpack.c.b16 %v3243, %v3241
        %v3312 = vpack.c.b16 %v3244, %v3242
        %v3313 = vpack.c.b16 %v3247, %v3245
        %v3314 = vpack.c.b16 %v3248, %v3246
        %v3315 = vpack.c.b16 %v3251, %v3249
        %v3316 = vpack.c.b16 %v3252, %v3250
        %3381 = vmatprep.subr.bf16.mxu0 %v3254
        %3382 = vmatpush1.bf16.msra.mxu0 %v3253
        %3383 = vmatprep.subr.bf16.mxu0 %v3256
        %3384 = vmatpush1.bf16.msra.mxu0 %v3255
        %3385 = vmatprep.subr.bf16.mxu0 %v3258
        %3386 = vmatpush1.bf16.msra.mxu0 %v3257
        %3387 = vmatprep.subr.bf16.mxu0 %v3260
        %3388 = vmatpush1.bf16.msra.mxu0 %v3259
        %3389 = vmatprep.subr.bf16.mxu0 %v3262
        %3390 = vmatpush1.bf16.msra.mxu0 %v3261
        %3391 = vmatprep.subr.bf16.mxu0 %v3264
        %3392 = vmatpush1.bf16.msra.mxu0 %v3263
        %3393 = vmatprep.subr.bf16.mxu0 %v3266
        %3394 = vmatpush1.bf16.msra.mxu0 %v3265
        %3395 = vmatprep.subr.bf16.mxu0 %v3268
        %3396 = vmatpush1.bf16.msra.mxu0 %v3267
        %3397 = vmatprep.subr.bf16.mxu0 %v3270
        %3398 = vmatpush1.bf16.msra.mxu0 %v3269
        %3399 = vmatprep.subr.bf16.mxu0 %v3272
        %3400 = vmatpush1.bf16.msra.mxu0 %v3271
        %3401 = vmatprep.subr.bf16.mxu0 %v3274
        %3402 = vmatpush1.bf16.msra.mxu0 %v3273
        %3403 = vmatprep.subr.bf16.mxu0 %v3276
        %3404 = vmatpush1.bf16.msra.mxu0 %v3275
        %3405 = vmatprep.subr.bf16.mxu0 %v3278
        %3406 = vmatpush1.bf16.msra.mxu0 %v3277
        %3407 = vmatprep.subr.bf16.mxu0 %v3280
        %3408 = vmatpush1.bf16.msra.mxu0 %v3279
        %3409 = vmatprep.subr.bf16.mxu0 %v3282
        %3410 = vmatpush1.bf16.msra.mxu0 %v3281
        %3411 = vmatprep.subr.bf16.mxu0 %v3284
        %3412 = vmatpush1.bf16.msra.mxu0 %v3283
        %3413 = vmatprep.mubr.bf16.mxu0 %v2946
        %3414 = vmatmul.mubr.bf16.gmra.mrb[0].mxu0 %v2945
        %v3415 = vpop.f32.mrb[0].mxu0
        %v3416 = vadd.f32 %v3054, %v3415
        %v3417 = vpop.f32.mrb[0].mxu0
        %v3418 = vadd.f32 %v3058, %v3417
        %v3419 = vpop.f32.mrb[0].mxu0
        %v3420 = vadd.f32 %v3054, %v3419
        %v3421 = vpop.f32.mrb[0].mxu0
        %v3422 = vadd.f32 %v3058, %v3421
        %3423 = vmatprep.mubr.bf16.mxu0 %v2950
        %3424 = vmatmul.mubr.bf16.gmra.mrb[0].mxu0 %v2949
        %v3425 = vpop.f32.mrb[0].mxu0
        %v3426 = vadd.f32 %v3054, %v3425
        %v3427 = vpop.f32.mrb[0].mxu0
        %v3428 = vadd.f32 %v3058, %v3427
        %v3429 = vpop.f32.mrb[0].mxu0
        %v3430 = vadd.f32 %v3054, %v3429
        %v3431 = vpop.f32.mrb[0].mxu0
        %v3432 = vadd.f32 %v3058, %v3431
        %3433 = vmatprep.mubr.bf16.mxu0 %v2954
        %3434 = vmatmul.mubr.bf16.gmra.mrb[0].mxu0 %v2953
        %v3435 = vpop.f32.mrb[0].mxu0
        %v3436 = vadd.f32 %v3054, %v3435
        %v3437 = vpop.f32.mrb[0].mxu0
        %v3438 = vadd.f32 %v3058, %v3437
        %v3439 = vpop.f32.mrb[0].mxu0
        %v3440 = vadd.f32 %v3054, %v3439
        %v3441 = vpop.f32.mrb[0].mxu0
        %v3442 = vadd.f32 %v3058, %v3441
        %3443 = vmatprep.mubr.bf16.mxu0 %v2958
        %3444 = vmatmul.mubr.bf16.gmra.mrb[0].mxu0 %v2957
        %v3445 = vpop.f32.mrb[0].mxu0
        %v3446 = vadd.f32 %v3054, %v3445
        %v3447 = vpop.f32.mrb[0].mxu0
        %v3448 = vadd.f32 %v3058, %v3447
        %v3449 = vpop.f32.mrb[0].mxu0
        %v3450 = vadd.f32 %v3054, %v3449
        %v3451 = vpop.f32.mrb[0].mxu0
        %v3452 = vadd.f32 %v3058, %v3451
        %3453 = vmatprep.mubr.bf16.mxu0 %v2962
        %3454 = vmatmul.mubr.bf16.gmra.mrb[0].mxu0 %v2961
        %v3455 = vpop.f32.mrb[0].mxu0
        %v3456 = vadd.f32 %v3054, %v3455
        %v3457 = vpop.f32.mrb[0].mxu0
        %v3458 = vadd.f32 %v3058, %v3457
        %v3459 = vpop.f32.mrb[0].mxu0
        %v3460 = vadd.f32 %v3054, %v3459
        %v3461 = vpop.f32.mrb[0].mxu0
        %v3462 = vadd.f32 %v3058, %v3461
        %3463 = vmatprep.mubr.bf16.mxu0 %v2966
        %3464 = vmatmul.mubr.bf16.gmra.mrb[0].mxu0 %v2965
        %v3465 = vpop.f32.mrb[0].mxu0
        %v3466 = vadd.f32 %v3054, %v3465
        %v3467 = vpop.f32.mrb[0].mxu0
        %v3468 = vadd.f32 %v3058, %v3467
        %v3469 = vpop.f32.mrb[0].mxu0
        %v3470 = vadd.f32 %v3054, %v3469
        %v3471 = vpop.f32.mrb[0].mxu0
        %v3472 = vadd.f32 %v3058, %v3471
        %3473 = vmatprep.mubr.bf16.mxu0 %v2970
        %3474 = vmatmul.mubr.bf16.gmra.mrb[0].mxu0 %v2969
        %v3475 = vpop.f32.mrb[0].mxu0
        %v3476 = vadd.f32 %v3054, %v3475
        %v3477 = vpop.f32.mrb[0].mxu0
        %v3478 = vadd.f32 %v3058, %v3477
        %v3479 = vpop.f32.mrb[0].mxu0
        %v3480 = vadd.f32 %v3054, %v3479
        %v3481 = vpop.f32.mrb[0].mxu0
        %v3482 = vadd.f32 %v3058, %v3481
        %3483 = vmatprep.mubr.bf16.mxu0 %v2974
        %3484 = vmatmul.mubr.bf16.gmra.mrb[0].mxu0 %v2973
        %v3485 = vpop.f32.mrb[0].mxu0
        %v3486 = vadd.f32 %v3054, %v3485
        %v3487 = vpop.f32.mrb[0].mxu0
        %v3488 = vadd.f32 %v3058, %v3487
        %v3489 = vpop.f32.mrb[0].mxu0
        %v3490 = vadd.f32 %v3054, %v3489
        %v3491 = vpop.f32.mrb[0].mxu0
        %v3492 = vadd.f32 %v3058, %v3491
        %3493 = vmatprep.mubr.bf16.mxu0 %v2978
        %3494 = vmatmul.mubr.bf16.gmra.mrb[0].mxu0 %v2977
        %v3495 = vpop.f32.mrb[0].mxu0
        %v3496 = vadd.f32 %v3054, %v3495
        %v3497 = vpop.f32.mrb[0].mxu0
        %v3498 = vadd.f32 %v3058, %v3497
        %v3499 = vpop.f32.mrb[0].mxu0
        %v3500 = vadd.f32 %v3054, %v3499
        %v3501 = vpop.f32.mrb[0].mxu0
        %v3502 = vadd.f32 %v3058, %v3501
        %3503 = vmatprep.mubr.bf16.mxu0 %v2982
        %3504 = vmatmul.mubr.bf16.gmra.mrb[0].mxu0 %v2981
        %v3505 = vpop.f32.mrb[0].mxu0
        %v3506 = vadd.f32 %v3054, %v3505
        %v3507 = vpop.f32.mrb[0].mxu0
        %v3508 = vadd.f32 %v3058, %v3507
        %v3509 = vpop.f32.mrb[0].mxu0
        %v3510 = vpop.f32.mrb[0].mxu0
        %3511 = vdwg.mxu0
        %3512 = vmatprep.subr.bf16.mxu0 %v3286
        %3513 = vmatpush1.bf16.msra.mxu0 %v3285
        %3514 = vmatprep.subr.bf16.mxu0 %v3288
        %3515 = vmatpush1.bf16.msra.mxu0 %v3287
        %3516 = vmatprep.subr.bf16.mxu0 %v3290
        %3517 = vmatpush1.bf16.msra.mxu0 %v3289
        %3518 = vmatprep.subr.bf16.mxu0 %v3292
        %3519 = vmatpush1.bf16.msra.mxu0 %v3291
        %3520 = vmatprep.subr.bf16.mxu0 %v3294
        %3521 = vmatpush1.bf16.msra.mxu0 %v3293
        %3522 = vmatprep.subr.bf16.mxu0 %v3296
        %3523 = vmatpush1.bf16.msra.mxu0 %v3295
        %3524 = vmatprep.subr.bf16.mxu0 %v3298
        %3525 = vmatpush1.bf16.msra.mxu0 %v3297
        %3526 = vmatprep.subr.bf16.mxu0 %v3300
        %3527 = vmatpush1.bf16.msra.mxu0 %v3299
        %3528 = vmatprep.subr.bf16.mxu0 %v3302
        %3529 = vmatpush1.bf16.msra.mxu0 %v3301
        %3530 = vmatprep.subr.bf16.mxu0 %v3304
        %3531 = vmatpush1.bf16.msra.mxu0 %v3303
        %3532 = vmatprep.subr.bf16.mxu0 %v3306
        %3533 = vmatpush1.bf16.msra.mxu0 %v3305
        %3534 = vmatprep.subr.bf16.mxu0 %v3308
        %3535 = vmatpush1.bf16.msra.mxu0 %v3307
        %3536 = vmatprep.subr.bf16.mxu0 %v3310
        %3537 = vmatpush1.bf16.msra.mxu0 %v3309
        %3538 = vmatprep.subr.bf16.mxu0 %v3312
        %3539 = vmatpush1.bf16.msra.mxu0 %v3311
        %3540 = vmatprep.subr.bf16.mxu0 %v3314
        %3541 = vmatpush1.bf16.msra.mxu0 %v3313
        %3542 = vmatprep.subr.bf16.mxu0 %v3316
        %3543 = vmatpush1.bf16.msra.mxu0 %v3315
        %3544 = vmatprep.mubr.bf16.mxu0 %v2948
        %3545 = vmatmul.mubr.bf16.gmra.mrb[0].mxu0 %v2947
        %v3546 = vpop.f32.mrb[0].mxu0
        %v3547 = vadd.f32 %v3416, %v3546
        %v3548 = vpop.f32.mrb[0].mxu0
        %v3549 = vadd.f32 %v3418, %v3548
        %v3550 = vpop.f32.mrb[0].mxu0
        %v3551 = vadd.f32 %v3420, %v3550
        %v3552 = vpop.f32.mrb[0].mxu0
        %v3553 = vadd.f32 %v3422, %v3552
        %3554 = vmatprep.mubr.bf16.mxu0 %v2952
        %3555 = vmatmul.mubr.bf16.gmra.mrb[0].mxu0 %v2951
        %v3556 = vpop.f32.mrb[0].mxu0
        %v3557 = vadd.f32 %v3426, %v3556
        %v3558 = vpop.f32.mrb[0].mxu0
        %v3559 = vadd.f32 %v3428, %v3558
        %v3560 = vpop.f32.mrb[0].mxu0
        %v3561 = vadd.f32 %v3430, %v3560
        %v3562 = vpop.f32.mrb[0].mxu0
        %v3563 = vadd.f32 %v3432, %v3562
        %3564 = vmatprep.mubr.bf16.mxu0 %v2956
        %3565 = vmatmul.mubr.bf16.gmra.mrb[0].mxu0 %v2955
        %v3566 = vpop.f32.mrb[0].mxu0
        %v3567 = vadd.f32 %v3436, %v3566
        %v3568 = vpop.f32.mrb[0].mxu0
        %v3569 = vadd.f32 %v3438, %v3568
        %v3570 = vpop.f32.mrb[0].mxu0
        %v3571 = vadd.f32 %v3440, %v3570
        %v3572 = vpop.f32.mrb[0].mxu0
        %v3573 = vadd.f32 %v3442, %v3572
        %3574 = vmatprep.mubr.bf16.mxu0 %v2960
        %3575 = vmatmul.mubr.bf16.gmra.mrb[0].mxu0 %v2959
        %v3576 = vpop.f32.mrb[0].mxu0
        %v3577 = vadd.f32 %v3446, %v3576
        %v3578 = vpop.f32.mrb[0].mxu0
        %v3579 = vadd.f32 %v3448, %v3578
        %v3580 = vpop.f32.mrb[0].mxu0
        %v3581 = vadd.f32 %v3450, %v3580
        %v3582 = vpop.f32.mrb[0].mxu0
        %v3583 = vadd.f32 %v3452, %v3582
        %3584 = vmatprep.mubr.bf16.mxu0 %v2964
        %3585 = vmatmul.mubr.bf16.gmra.mrb[0].mxu0 %v2963
        %v3586 = vpop.f32.mrb[0].mxu0
        %v3587 = vadd.f32 %v3456, %v3586
        %v3588 = vpop.f32.mrb[0].mxu0
        %v3589 = vadd.f32 %v3458, %v3588
        %v3590 = vpop.f32.mrb[0].mxu0
        %v3591 = vadd.f32 %v3460, %v3590
        %v3592 = vpop.f32.mrb[0].mxu0
        %v3593 = vadd.f32 %v3462, %v3592
        %3594 = vmatprep.mubr.bf16.mxu0 %v2968
        %3595 = vmatmul.mubr.bf16.gmra.mrb[0].mxu0 %v2967
        %v3596 = vpop.f32.mrb[0].mxu0
        %v3597 = vadd.f32 %v3466, %v3596
        %v3598 = vpop.f32.mrb[0].mxu0
        %v3599 = vadd.f32 %v3468, %v3598
        %v3600 = vpop.f32.mrb[0].mxu0
        %v3601 = vadd.f32 %v3470, %v3600
        %v3602 = vpop.f32.mrb[0].mxu0
        %v3603 = vadd.f32 %v3472, %v3602
        %3604 = vmatprep.mubr.bf16.mxu0 %v2972
        %3605 = vmatmul.mubr.bf16.gmra.mrb[0].mxu0 %v2971
        %v3606 = vpop.f32.mrb[0].mxu0
        %v3607 = vadd.f32 %v3476, %v3606
        %v3608 = vpop.f32.mrb[0].mxu0
        %v3609 = vadd.f32 %v3478, %v3608
        %v3610 = vpop.f32.mrb[0].mxu0
        %v3611 = vadd.f32 %v3480, %v3610
        %v3612 = vpop.f32.mrb[0].mxu0
        %v3613 = vadd.f32 %v3482, %v3612
        %3614 = vmatprep.mubr.bf16.mxu0 %v2976
        %3615 = vmatmul.mubr.bf16.gmra.mrb[0].mxu0 %v2975
        %v3616 = vpop.f32.mrb[0].mxu0
        %v3617 = vadd.f32 %v3486, %v3616
        %v3618 = vpop.f32.mrb[0].mxu0
        %v3619 = vadd.f32 %v3488, %v3618
        %v3620 = vpop.f32.mrb[0].mxu0
        %v3621 = vadd.f32 %v3490, %v3620
        %v3622 = vpop.f32.mrb[0].mxu0
        %v3623 = vadd.f32 %v3492, %v3622
        %3624 = vmatprep.mubr.bf16.mxu0 %v2980
        %3625 = vmatmul.mubr.bf16.gmra.mrb[0].mxu0 %v2979
        %v3626 = vpop.f32.mrb[0].mxu0
        %v3627 = vadd.f32 %v3496, %v3626
        %v3628 = vpop.f32.mrb[0].mxu0
        %v3629 = vadd.f32 %v3498, %v3628
        %v3630 = vpop.f32.mrb[0].mxu0
        %v3631 = vadd.f32 %v3500, %v3630
        %v3632 = vpop.f32.mrb[0].mxu0
        %v3633 = vadd.f32 %v3502, %v3632
        %3634 = vmatprep.mubr.bf16.mxu0 %v2984
        %3635 = vmatmul.mubr.bf16.gmra.mrb[0].mxu0 %v2983
        %v3636 = vpop.f32.mrb[0].mxu0
        %v3637 = vadd.f32 %v3506, %v3636
        %v3638 = vpop.f32.mrb[0].mxu0
        %v3639 = vadd.f32 %v3508, %v3638
        %v3640 = vpop.f32.mrb[0].mxu0
        %v3641 = vpop.f32.mrb[0].mxu0
        %3642 = vdwg.mxu0
        %v3643 = vpack.c.bf16 %v3551, %v3547
        %v3644 = vpack.c.bf16 %v3553, %v3549
        %v3645 = vpack.c.bf16 %v3561, %v3557
        %v3646 = vpack.c.bf16 %v3563, %v3559
        %v3647 = vpack.c.bf16 %v3571, %v3567
        %v3648 = vpack.c.bf16 %v3573, %v3569
        %v3649 = vpack.c.bf16 %v3581, %v3577
        %v3650 = vpack.c.bf16 %v3583, %v3579
        %v3651 = vpack.c.bf16 %v3591, %v3587
        %v3652 = vpack.c.bf16 %v3593, %v3589
        %v3653 = vpack.c.bf16 %v3601, %v3597
        %v3654 = vpack.c.bf16 %v3603, %v3599
        %v3655 = vpack.c.bf16 %v3611, %v3607
        %v3656 = vpack.c.bf16 %v3613, %v3609
        %v3657 = vpack.c.bf16 %v3621, %v3617
        %v3658 = vpack.c.bf16 %v3623, %v3619
        %v3659 = vpack.c.bf16 %v3631, %v3627
        %v3660 = vpack.c.bf16 %v3633, %v3629
        %v3661 = vpack.c.bf16 %v3637, %v3637
        %v3662 = vpack.c.bf16 %v3639, %v3639
        %v3663 = vld [vmem:[#allocation10] sm:$0xf]
        %v3664 = vld [vmem:[#allocation10 + $0x4] sm:$0xf]
        %v3665 = vld [vmem:[#allocation10 + $0x8] sm:$0xf]
        %v3666 = vld [vmem:[#allocation10 + $0xc] sm:$0xf]
        %v3667 = vld [vmem:[#allocation10 + $0x10] sm:$0xf]
        %v3668 = vld [vmem:[#allocation10 + $0x14] sm:$0xf]
        %v3669 = vld [vmem:[#allocation10 + $0x18] sm:$0xf]
        %v3670 = vld [vmem:[#allocation10 + $0x1c] sm:$0xf]
        %v3671 = vld [vmem:[#allocation10 + $0x20] sm:$0xf]
        %v3672 = vld [vmem:[#allocation10 + $0x24] sm:$0xf]
        %v3673 = vld [vmem:[#allocation10 + $0x28] sm:$0xf]
        %v3674 = vld [vmem:[#allocation10 + $0x2c] sm:$0xf]
        %v3675 = vld [vmem:[#allocation10 + $0x30] sm:$0xf]
        %v3676 = vld [vmem:[#allocation10 + $0x34] sm:$0xf]
        %v3677 = vld [vmem:[#allocation10 + $0x38] sm:$0xf]
        %v3678 = vld [vmem:[#allocation10 + $0x3c] sm:$0xf]
        %v3679 = vld [vmem:[#allocation10 + $0x40] sm:$0xf]
        %v3680 = vld [vmem:[#allocation10 + $0x44] sm:$0xf]
        %v3681 = vld [vmem:[#allocation10 + $0x48] sm:$0xf]
        %v3682 = vld [vmem:[#allocation10 + $0x4c] sm:$0xf]
        %v3683 = vld [vmem:[#allocation10 + $0x50] sm:$0xf]
        %v3684 = vld [vmem:[#allocation10 + $0x54] sm:$0xf]
        %v3685 = vld [vmem:[#allocation10 + $0x58] sm:$0xf]
        %v3686 = vld [vmem:[#allocation10 + $0x5c] sm:$0xf]
        %v3687 = vld [vmem:[#allocation10 + $0x60] sm:$0xf]
        %v3688 = vld [vmem:[#allocation10 + $0x64] sm:$0xf]
        %v3689 = vld [vmem:[#allocation10 + $0x68] sm:$0xf]
        %v3690 = vld [vmem:[#allocation10 + $0x6c] sm:$0xf]
        %v3691 = vld [vmem:[#allocation10 + $0x70] sm:$0xf]
        %v3692 = vld [vmem:[#allocation10 + $0x74] sm:$0xf]
        %v3693 = vld [vmem:[#allocation10 + $0x78] sm:$0xf]
        %v3694 = vld [vmem:[#allocation10 + $0x7c] sm:$0xf]
        %v3695 = vld [vmem:[#allocation12] sm:$0x1]
        %v3697 = vlaneseq
        %v3698 = vshrl.u32 %v3697, 7
        %v3699 = vsub.s32 0, %v3698
        %v3700 = vrot.slane %v3695, %v3699
        %v3734 = vunpack.c.l.b16 %v3663
        %v3735 = vunpack.c.l.b16 %v3664
        %v3736 = vunpack.c.l.b16 %v3665
        %v3737 = vunpack.c.l.b16 %v3666
        %v3738 = vunpack.c.l.b16 %v3667
        %v3739 = vunpack.c.l.b16 %v3668
        %v3740 = vunpack.c.l.b16 %v3669
        %v3741 = vunpack.c.l.b16 %v3670
        %v3742 = vunpack.c.l.b16 %v3671
        %v3743 = vunpack.c.l.b16 %v3672
        %v3744 = vunpack.c.l.b16 %v3673
        %v3745 = vunpack.c.l.b16 %v3674
        %v3746 = vunpack.c.l.b16 %v3675
        %v3747 = vunpack.c.l.b16 %v3676
        %v3748 = vunpack.c.l.b16 %v3677
        %v3749 = vunpack.c.l.b16 %v3678
        %v3750 = vunpack.c.l.b16 %v3679
        %v3751 = vunpack.c.l.b16 %v3680
        %v3752 = vunpack.c.l.b16 %v3681
        %v3753 = vunpack.c.l.b16 %v3682
        %v3754 = vunpack.c.l.b16 %v3683
        %v3755 = vunpack.c.l.b16 %v3684
        %v3756 = vunpack.c.l.b16 %v3685
        %v3757 = vunpack.c.l.b16 %v3686
        %v3758 = vunpack.c.l.b16 %v3687
        %v3759 = vunpack.c.l.b16 %v3688
        %v3760 = vunpack.c.l.b16 %v3689
        %v3761 = vunpack.c.l.b16 %v3690
        %v3762 = vunpack.c.l.b16 %v3691
        %v3763 = vunpack.c.l.b16 %v3692
        %v3764 = vunpack.c.l.b16 %v3693
        %v3765 = vunpack.c.l.b16 %v3694
        %v3766 = vpack.c.b16 %v3735, %v3734
        %v3767 = vpack.c.b16 %v3737, %v3736
        %v3768 = vpack.c.b16 %v3739, %v3738
        %v3769 = vpack.c.b16 %v3741, %v3740
        %v3770 = vpack.c.b16 %v3743, %v3742
        %v3771 = vpack.c.b16 %v3745, %v3744
        %v3772 = vpack.c.b16 %v3747, %v3746
        %v3773 = vpack.c.b16 %v3749, %v3748
        %v3774 = vpack.c.b16 %v3751, %v3750
        %v3775 = vpack.c.b16 %v3753, %v3752
        %v3776 = vpack.c.b16 %v3755, %v3754
        %v3777 = vpack.c.b16 %v3757, %v3756
        %v3778 = vpack.c.b16 %v3759, %v3758
        %v3779 = vpack.c.b16 %v3761, %v3760
        %v3780 = vpack.c.b16 %v3763, %v3762
        %v3781 = vpack.c.b16 %v3765, %v3764
        %3798 = vmatprep.subr.bf16.mxu0 0
        %3799 = vmatpush1.bf16.msra.mxu0 %v3766
        %3800 = vmatprep.subr.bf16.mxu0 0
        %3801 = vmatpush1.bf16.msra.mxu0 %v3767
        %3802 = vmatprep.subr.bf16.mxu0 0
        %3803 = vmatpush1.bf16.msra.mxu0 %v3768
        %3804 = vmatprep.subr.bf16.mxu0 0
        %3805 = vmatpush1.bf16.msra.mxu0 %v3769
        %3806 = vmatprep.subr.bf16.mxu0 0
        %3807 = vmatpush1.bf16.msra.mxu0 %v3770
        %3808 = vmatprep.subr.bf16.mxu0 0
        %3809 = vmatpush1.bf16.msra.mxu0 %v3771
        %3810 = vmatprep.subr.bf16.mxu0 0
        %3811 = vmatpush1.bf16.msra.mxu0 %v3772
        %3812 = vmatprep.subr.bf16.mxu0 0
        %3813 = vmatpush1.bf16.msra.mxu0 %v3773
        %3814 = vmatprep.subr.bf16.mxu0 0
        %3815 = vmatpush1.bf16.msra.mxu0 %v3774
        %3816 = vmatprep.subr.bf16.mxu0 0
        %3817 = vmatpush1.bf16.msra.mxu0 %v3775
        %3818 = vmatprep.subr.bf16.mxu0 0
        %3819 = vmatpush1.bf16.msra.mxu0 %v3776
        %3820 = vmatprep.subr.bf16.mxu0 0
        %3821 = vmatpush1.bf16.msra.mxu0 %v3777
        %3822 = vmatprep.subr.bf16.mxu0 0
        %3823 = vmatpush1.bf16.msra.mxu0 %v3778
        %3824 = vmatprep.subr.bf16.mxu0 0
        %3825 = vmatpush1.bf16.msra.mxu0 %v3779
        %3826 = vmatprep.subr.bf16.mxu0 0
        %3827 = vmatpush1.bf16.msra.mxu0 %v3780
        %3828 = vmatprep.subr.bf16.mxu0 0
        %3829 = vmatpush1.bf16.msra.mxu0 %v3781
        %3830 = vmatprep.mubr.bf16.mxu0 %v3644
        %3831 = vmatmul.mubr.bf16.gmra.mrb[0].mxu0 %v3643
        %v3832 = vpop.f32.mrb[0].mxu0
        %v3833 = vadd.f32 %v3700, %v3832
        %v3834 = vpop.f32.mrb[0].mxu0
        %v3835 = vpop.f32.mrb[0].mxu0
        %v3836 = vadd.f32 %v3700, %v3835
        %v3837 = vpop.f32.mrb[0].mxu0
        %3838 = vmatprep.mubr.bf16.mxu0 %v3646
        %3839 = vmatmul.mubr.bf16.gmra.mrb[0].mxu0 %v3645
        %v3840 = vpop.f32.mrb[0].mxu0
        %v3841 = vadd.f32 %v3700, %v3840
        %v3842 = vpop.f32.mrb[0].mxu0
        %v3843 = vpop.f32.mrb[0].mxu0
        %v3844 = vadd.f32 %v3700, %v3843
        %v3845 = vpop.f32.mrb[0].mxu0
        %3846 = vmatprep.mubr.bf16.mxu0 %v3648
        %3847 = vmatmul.mubr.bf16.gmra.mrb[0].mxu0 %v3647
        %v3848 = vpop.f32.mrb[0].mxu0
        %v3849 = vadd.f32 %v3700, %v3848
        %v3850 = vpop.f32.mrb[0].mxu0
        %v3851 = vpop.f32.mrb[0].mxu0
        %v3852 = vadd.f32 %v3700, %v3851
        %v3853 = vpop.f32.mrb[0].mxu0
        %3854 = vmatprep.mubr.bf16.mxu0 %v3650
        %3855 = vmatmul.mubr.bf16.gmra.mrb[0].mxu0 %v3649
        %v3856 = vpop.f32.mrb[0].mxu0
        %v3857 = vadd.f32 %v3700, %v3856
        %v3858 = vpop.f32.mrb[0].mxu0
        %v3859 = vpop.f32.mrb[0].mxu0
        %v3860 = vadd.f32 %v3700, %v3859
        %v3861 = vpop.f32.mrb[0].mxu0
        %3862 = vmatprep.mubr.bf16.mxu0 %v3652
        %3863 = vmatmul.mubr.bf16.gmra.mrb[0].mxu0 %v3651
        %v3864 = vpop.f32.mrb[0].mxu0
        %v3865 = vadd.f32 %v3700, %v3864
        %v3866 = vpop.f32.mrb[0].mxu0
        %v3867 = vpop.f32.mrb[0].mxu0
        %v3868 = vadd.f32 %v3700, %v3867
        %v3869 = vpop.f32.mrb[0].mxu0
        %3870 = vmatprep.mubr.bf16.mxu0 %v3654
        %3871 = vmatmul.mubr.bf16.gmra.mrb[0].mxu0 %v3653
        %v3872 = vpop.f32.mrb[0].mxu0
        %v3873 = vadd.f32 %v3700, %v3872
        %v3874 = vpop.f32.mrb[0].mxu0
        %v3875 = vpop.f32.mrb[0].mxu0
        %v3876 = vadd.f32 %v3700, %v3875
        %v3877 = vpop.f32.mrb[0].mxu0
        %3878 = vmatprep.mubr.bf16.mxu0 %v3656
        %3879 = vmatmul.mubr.bf16.gmra.mrb[0].mxu0 %v3655
        %v3880 = vpop.f32.mrb[0].mxu0
        %v3881 = vadd.f32 %v3700, %v3880
        %v3882 = vpop.f32.mrb[0].mxu0
        %v3883 = vpop.f32.mrb[0].mxu0
        %v3884 = vadd.f32 %v3700, %v3883
        %v3885 = vpop.f32.mrb[0].mxu0
        %3886 = vmatprep.mubr.bf16.mxu0 %v3658
        %3887 = vmatmul.mubr.bf16.gmra.mrb[0].mxu0 %v3657
        %v3888 = vpop.f32.mrb[0].mxu0
        %v3889 = vadd.f32 %v3700, %v3888
        %v3890 = vpop.f32.mrb[0].mxu0
        %v3891 = vpop.f32.mrb[0].mxu0
        %v3892 = vadd.f32 %v3700, %v3891
        %v3893 = vpop.f32.mrb[0].mxu0
        %3894 = vmatprep.mubr.bf16.mxu0 %v3660
        %3895 = vmatmul.mubr.bf16.gmra.mrb[0].mxu0 %v3659
        %v3896 = vpop.f32.mrb[0].mxu0
        %v3897 = vadd.f32 %v3700, %v3896
        %v3898 = vpop.f32.mrb[0].mxu0
        %v3899 = vpop.f32.mrb[0].mxu0
        %v3900 = vadd.f32 %v3700, %v3899
        %v3901 = vpop.f32.mrb[0].mxu0
        %3902 = vmatprep.mubr.bf16.mxu0 %v3662
        %3903 = vmatmul.mubr.bf16.gmra.mrb[0].mxu0 %v3661
        %v3904 = vpop.f32.mrb[0].mxu0
        %v3905 = vadd.f32 %v3700, %v3904
        %v3906 = vpop.f32.mrb[0].mxu0
        %v3907 = vpop.f32.mrb[0].mxu0
        %v3908 = vpop.f32.mrb[0].mxu0
        %3909 = vdwg.mxu0
        %v3910 = vmax.f32 %v3833, 0.0
        %v3911 = vmax.f32 %v3836, 0.0
        %v3912 = vmax.f32 %v3841, 0.0
        %v3913 = vmax.f32 %v3844, 0.0
        %v3914 = vmax.f32 %v3849, 0.0
        %v3915 = vmax.f32 %v3852, 0.0
        %v3916 = vmax.f32 %v3857, 0.0
        %v3917 = vmax.f32 %v3860, 0.0
        %v3918 = vmax.f32 %v3865, 0.0
        %v3919 = vmax.f32 %v3868, 0.0
        %v3920 = vmax.f32 %v3873, 0.0
        %v3921 = vmax.f32 %v3876, 0.0
        %v3922 = vmax.f32 %v3881, 0.0
        %v3923 = vmax.f32 %v3884, 0.0
        %v3924 = vmax.f32 %v3889, 0.0
        %v3925 = vmax.f32 %v3892, 0.0
        %v3926 = vmax.f32 %v3897, 0.0
        %v3927 = vmax.f32 %v3900, 0.0
        %v3928 = vmax.f32 %v3905, 0.0
        %v3929 = vpack.c.bf16 %v3911, %v3910
        %v3930 = vpack.c.bf16 %v3913, %v3912
        %v3931 = vpack.c.bf16 %v3915, %v3914
        %v3932 = vpack.c.bf16 %v3917, %v3916
        %v3933 = vpack.c.bf16 %v3919, %v3918
        %v3934 = vpack.c.bf16 %v3921, %v3920
        %v3935 = vpack.c.bf16 %v3923, %v3922
        %v3936 = vpack.c.bf16 %v3925, %v3924
        %v3937 = vpack.c.bf16 %v3927, %v3926
        %v3938 = vpack.c.bf16 %v3928, %v3928
        %v3939 = vld [vmem:[#allocation13] sm:$0xf]
        %v3940 = vld [vmem:[#allocation13 + $0x4] sm:$0xf]
        %v3941 = vld [vmem:[#allocation13 + $0x8] sm:$0xf]
        %v3942 = vld [vmem:[#allocation13 + $0xc] sm:$0xf]
        %v3943 = vld [vmem:[#allocation13 + $0x10] sm:$0xf]
        %v3944 = vld [vmem:[#allocation13 + $0x14] sm:$0xf]
        %v3945 = vld [vmem:[#allocation13 + $0x18] sm:$0xf]
        %v3946 = vld [vmem:[#allocation13 + $0x1c] sm:$0xf]
        %v3947 = vld [vmem:[#allocation13 + $0x20] sm:$0xf]
        %v3948 = vld [vmem:[#allocation13 + $0x24] sm:$0xf]
        %v3949 = vld [vmem:[#allocation13 + $0x28] sm:$0xf]
        %v3950 = vld [vmem:[#allocation13 + $0x2c] sm:$0xf]
        %v3951 = vld [vmem:[#allocation13 + $0x30] sm:$0xf]
        %v3952 = vld [vmem:[#allocation13 + $0x34] sm:$0xf]
        %v3953 = vld [vmem:[#allocation13 + $0x38] sm:$0xf]
        %v3954 = vld [vmem:[#allocation13 + $0x3c] sm:$0xf]
        %v3955 = vld [vmem:[#allocation15] sm:$0x1]
        %v3957 = vlaneseq
        %v3958 = vshrl.u32 %v3957, 7
        %v3959 = vsub.s32 0, %v3958
        %v3960 = vrot.slane %v3955, %v3959
        %v3978 = vunpack.c.l.b16 %v3939
        %v3979 = vunpack.c.l.b16 %v3940
        %v3980 = vunpack.c.l.b16 %v3941
        %v3981 = vunpack.c.l.b16 %v3942
        %v3982 = vunpack.c.l.b16 %v3943
        %v3983 = vunpack.c.l.b16 %v3944
        %v3984 = vunpack.c.l.b16 %v3945
        %v3985 = vunpack.c.l.b16 %v3946
        %v3986 = vunpack.c.l.b16 %v3947
        %v3987 = vunpack.c.l.b16 %v3948
        %v3988 = vunpack.c.l.b16 %v3949
        %v3989 = vunpack.c.l.b16 %v3950
        %v3990 = vunpack.c.l.b16 %v3951
        %v3991 = vunpack.c.l.b16 %v3952
        %v3992 = vunpack.c.l.b16 %v3953
        %v3993 = vunpack.c.l.b16 %v3954
        %v3994 = vpack.c.b16 %v3979, %v3978
        %v3995 = vpack.c.b16 %v3981, %v3980
        %v3996 = vpack.c.b16 %v3983, %v3982
        %v3997 = vpack.c.b16 %v3985, %v3984
        %v3998 = vpack.c.b16 %v3987, %v3986
        %v3999 = vpack.c.b16 %v3989, %v3988
        %v4000 = vpack.c.b16 %v3991, %v3990
        %v4001 = vpack.c.b16 %v3993, %v3992
        %4010 = vmatprep.subr.bf16.mxu0 0
        %4011 = vmatpush1.bf16.msra.mxu0 %v3994
        %4012 = vmatprep.subr.bf16.mxu0 0
        %4013 = vmatpush1.bf16.msra.mxu0 %v3995
        %4014 = vmatprep.subr.bf16.mxu0 0
        %4015 = vmatpush1.bf16.msra.mxu0 %v3996
        %4016 = vmatprep.subr.bf16.mxu0 0
        %4017 = vmatpush1.bf16.msra.mxu0 %v3997
        %4018 = vmatprep.subr.bf16.mxu0 0
        %4019 = vmatpush1.bf16.msra.mxu0 %v3998
        %4020 = vmatprep.subr.bf16.mxu0 0
        %4021 = vmatpush1.bf16.msra.mxu0 %v3999
        %4022 = vmatprep.subr.bf16.mxu0 0
        %4023 = vmatpush1.bf16.msra.mxu0 %v4000
        %4024 = vmatprep.subr.bf16.mxu0 0
        %4025 = vmatpush1.bf16.msra.mxu0 %v4001
        %4026 = vmatprep.subr.bf16.mxu0 0
        %4027 = vmatpush1.bf16.msra.mxu0 0
        %4028 = vmatprep.subr.bf16.mxu0 0
        %4029 = vmatpush1.bf16.msra.mxu0 0
        %4030 = vmatprep.subr.bf16.mxu0 0
        %4031 = vmatpush1.bf16.msra.mxu0 0
        %4032 = vmatprep.subr.bf16.mxu0 0
        %4033 = vmatpush1.bf16.msra.mxu0 0
        %4034 = vmatprep.subr.bf16.mxu0 0
        %4035 = vmatpush1.bf16.msra.mxu0 0
        %4036 = vmatprep.subr.bf16.mxu0 0
        %4037 = vmatpush1.bf16.msra.mxu0 0
        %4038 = vmatprep.subr.bf16.mxu0 0
        %4039 = vmatpush1.bf16.msra.mxu0 0
        %4040 = vmatprep.subr.bf16.mxu0 0
        %4041 = vmatpush1.bf16.msra.mxu0 0
        %4042 = vmatprep.mubr.bf16.mxu0 0
        %4043 = vmatmul.mubr.bf16.gmra.mrb[0].mxu0 %v3929
        %v4044 = vpop.f32.mrb[0].mxu0
        %v4045 = vadd.f32 %v3960, %v4044
        %v4046 = vpop.f32.mrb[0].mxu0
        %v4047 = vpop.f32.mrb[0].mxu0
        %v4048 = vadd.f32 %v3960, %v4047
        %v4049 = vpop.f32.mrb[0].mxu0
        %4050 = vmatprep.mubr.bf16.mxu0 0
        %4051 = vmatmul.mubr.bf16.gmra.mrb[0].mxu0 %v3930
        %v4052 = vpop.f32.mrb[0].mxu0
        %v4053 = vadd.f32 %v3960, %v4052
        %v4054 = vpop.f32.mrb[0].mxu0
        %v4055 = vpop.f32.mrb[0].mxu0
        %v4056 = vadd.f32 %v3960, %v4055
        %v4057 = vpop.f32.mrb[0].mxu0
        %4058 = vmatprep.mubr.bf16.mxu0 0
        %4059 = vmatmul.mubr.bf16.gmra.mrb[0].mxu0 %v3931
        %v4060 = vpop.f32.mrb[0].mxu0
        %v4061 = vadd.f32 %v3960, %v4060
        %v4062 = vpop.f32.mrb[0].mxu0
        %v4063 = vpop.f32.mrb[0].mxu0
        %v4064 = vadd.f32 %v3960, %v4063
        %v4065 = vpop.f32.mrb[0].mxu0
        %4066 = vmatprep.mubr.bf16.mxu0 0
        %4067 = vmatmul.mubr.bf16.gmra.mrb[0].mxu0 %v3932
        %v4068 = vpop.f32.mrb[0].mxu0
        %v4069 = vadd.f32 %v3960, %v4068
        %v4070 = vpop.f32.mrb[0].mxu0
        %v4071 = vpop.f32.mrb[0].mxu0
        %v4072 = vadd.f32 %v3960, %v4071
        %v4073 = vpop.f32.mrb[0].mxu0
        %4074 = vmatprep.mubr.bf16.mxu0 0
        %4075 = vmatmul.mubr.bf16.gmra.mrb[0].mxu0 %v3933
        %v4076 = vpop.f32.mrb[0].mxu0
        %v4077 = vadd.f32 %v3960, %v4076
        %v4078 = vpop.f32.mrb[0].mxu0
        %v4079 = vpop.f32.mrb[0].mxu0
        %v4080 = vadd.f32 %v3960, %v4079
        %v4081 = vpop.f32.mrb[0].mxu0
        %4082 = vmatprep.mubr.bf16.mxu0 0
        %4083 = vmatmul.mubr.bf16.gmra.mrb[0].mxu0 %v3934
        %v4084 = vpop.f32.mrb[0].mxu0
        %v4085 = vadd.f32 %v3960, %v4084
        %v4086 = vpop.f32.mrb[0].mxu0
        %v4087 = vpop.f32.mrb[0].mxu0
        %v4088 = vadd.f32 %v3960, %v4087
        %v4089 = vpop.f32.mrb[0].mxu0
        %4090 = vmatprep.mubr.bf16.mxu0 0
        %4091 = vmatmul.mubr.bf16.gmra.mrb[0].mxu0 %v3935
        %v4092 = vpop.f32.mrb[0].mxu0
        %v4093 = vadd.f32 %v3960, %v4092
        %v4094 = vpop.f32.mrb[0].mxu0
        %v4095 = vpop.f32.mrb[0].mxu0
        %v4096 = vadd.f32 %v3960, %v4095
        %v4097 = vpop.f32.mrb[0].mxu0
        %4098 = vmatprep.mubr.bf16.mxu0 0
        %4099 = vmatmul.mubr.bf16.gmra.mrb[0].mxu0 %v3936
        %v4100 = vpop.f32.mrb[0].mxu0
        %v4101 = vadd.f32 %v3960, %v4100
        %v4102 = vpop.f32.mrb[0].mxu0
        %v4103 = vpop.f32.mrb[0].mxu0
        %v4104 = vadd.f32 %v3960, %v4103
        %v4105 = vpop.f32.mrb[0].mxu0
        %4106 = vmatprep.mubr.bf16.mxu0 0
        %4107 = vmatmul.mubr.bf16.gmra.mrb[0].mxu0 %v3937
        %v4108 = vpop.f32.mrb[0].mxu0
        %v4109 = vadd.f32 %v3960, %v4108
        %v4110 = vpop.f32.mrb[0].mxu0
        %v4111 = vpop.f32.mrb[0].mxu0
        %v4112 = vadd.f32 %v3960, %v4111
        %v4113 = vpop.f32.mrb[0].mxu0
        %4114 = vmatprep.mubr.bf16.mxu0 0
        %4115 = vmatmul.mubr.bf16.gmra.mrb[0].mxu0 %v3938
        %v4116 = vpop.f32.mrb[0].mxu0
        %v4117 = vadd.f32 %v3960, %v4116
        %v4118 = vpop.f32.mrb[0].mxu0
        %v4119 = vpop.f32.mrb[0].mxu0
        %v4120 = vpop.f32.mrb[0].mxu0
        %4121 = vdwg.mxu0
        %4122 = vst [vmem:[%s462] sm:$0xff] %v4045
        %4123 = vst [vmem:[%s462 + $0x8] sm:$0xff] %v4048
        %4124 = vst [vmem:[%s462 + $0x10] sm:$0xff] %v4053
        %4125 = vst [vmem:[%s462 + $0x18] sm:$0xff] %v4056
        %4126 = vst [vmem:[%s462 + $0x20] sm:$0xff] %v4061
        %4127 = vst [vmem:[%s462 + $0x28] sm:$0xff] %v4064
        %4128 = vst [vmem:[%s462 + $0x30] sm:$0xff] %v4069
        %4129 = vst [vmem:[%s462 + $0x38] sm:$0xff] %v4072
        %4130 = vst [vmem:[%s462 + $0x40] sm:$0xff] %v4077
        %4131 = vst [vmem:[%s462 + $0x48] sm:$0xff] %v4080
        %4132 = vst [vmem:[%s462 + $0x50] sm:$0xff] %v4085
        %4133 = vst [vmem:[%s462 + $0x58] sm:$0xff] %v4088
        %4134 = vst [vmem:[%s462 + $0x60] sm:$0xff] %v4093
        %4135 = vst [vmem:[%s462 + $0x68] sm:$0xff] %v4096
        %4136 = vst [vmem:[%s462 + $0x70] sm:$0xff] %v4101
        %4137 = vst [vmem:[%s462 + $0x78] sm:$0xff] %v4104
        %4138 = vst [vmem:[%s462 + $0x80] sm:$0xff] %v4109
        %4139 = vst [vmem:[%s462 + $0x88] sm:$0xff] %v4112
        %4140 = vst [vmem:[%s462 + $0x90] sm:$0xff] %v4117
        %s4141 = smul.u32 19, %s27
        %p4142 = scmp.lt.s32.totalorder %s4141, 37
        %s4143 = scalar_select %p4142, %s4141, 37
        %s4144 = smul.addr %s4143, 8
        %s4145 = scalar_lea.vmem %s9, %s4144
        // Predicated region
        $region93: #{mlp_forward.1} parent=55 // pred_check
          %p4146 = pneg %p239
        $region94: #{mlp_forward.1} parent=55 // pred_check_branch
          %4148 = sbr.rel (%p4146) target = $region96
        $region95: #{mlp_forward.1} parent=55 // pred_region
          %s4149 = smul.u32 19, %s27
        $region96: #{mlp_forward.1} parent=55 // pred_fallthru
          _
      $region56: #{mlp_forward.1} parent=5 // pred_fallthru
        _
      %p4150 = scmp.le.s32.totalorder 2, %s22
      // Predicated region
      $region97: #{mlp_forward.1} parent=5 // pred_check
        %p4151 = pneg %p4150
      $region98: #{mlp_forward.1} parent=5 // pred_check_branch
        %4153 = sbr.rel (%p4151) target = $region100
      $region99: #{mlp_forward.1} parent=5 // pred_region
        %s4154 = ssub.s32 %s22, 2
        // Predicated region
        $region101: #{mlp_forward.1} parent=99 // pred_check
          %p4155 = pneg %p245
        $region102: #{mlp_forward.1} parent=99 // pred_check_branch
          %4157 = sbr.rel (%p4155) target = $region104
        $region103: #{mlp_forward.1} parent=99 // pred_region
          %s4158 = smul.u32 19, %s28
          %p4159 = scmp.lt.s32.totalorder %s4158, 37
          %s4160 = scalar_select %p4159, %s4158, 37
          %s4161 = smul.addr %s4160, 8
          %s4162 = scalar_lea.vmem %s9, %s4161
        $region104: #{mlp_forward.1} parent=99 // pred_fallthru
          _
      $region100: #{mlp_forward.1} parent=5 // pred_fallthru
        _
    $region6: #{mlp_forward.1} parent=1 // loop_footer
      %s26 = sadd.s32 1, %s22
    $region7: #{mlp_forward.1} parent=1 // loop_footer_branch
      %21 = sbr.rel target = $region3
    $region8: #{mlp_forward.1} parent=1 // loop_exit
      _
    %4163 = vsyncpa [#allocation3], 1
    %s4164 = scalar_lea.sflag [#allocation3], 1
    %4165 = vsyncpa %s4164, 1
    %4166 = vsyncpa [#allocation5], 1
    %4167 = vsyncpa [#allocation8], 1
    %4168 = vsyncpa [#allocation11], 1
    %4169 = vsyncpa [#allocation14], 1

</llo_original>
